<compile_context>
chip_gen: v5e
topology: v5e:2x2
jax: 0.10.0
libtpu: 0.0.40
codegen_flags: <defaults>
</compile_context>

<pallas_src>
import functools

import jax
import jax.numpy as jnp
from jax.experimental import pallas as pl
from jax.experimental.pallas import tpu as pltpu

LN_EPS = 1e-5
BN_EPS = 1e-5


def _layernorm(x, gamma, beta):
    mu = jnp.mean(x, axis=-1, keepdims=True)
    var = jnp.mean((x - mu) ** 2, axis=-1, keepdims=True)
    return (x - mu) * jax.lax.rsqrt(var + LN_EPS) * gamma + beta


def _swish(x):
    return x * jax.nn.sigmoid(x)


# ---------------------------------------------------------------------------
# Sub-module math (shared by the Pallas kernel and the pure-JAX reference;
# `pallas=True` switches on the Pallas-only primitives).
# ---------------------------------------------------------------------------
def _ffn(x, g, b, w1, b1, w2, b2):
    """LayerNorm -> Linear -> Swish -> Linear (Dropout = identity)."""
    xn = _layernorm(x, g, b).astype(w1.dtype)                  # bf16 matmul input
    h = jnp.dot(xn, w1, preferred_element_type=jnp.float32) + b1
    h = _swish(h).astype(w2.dtype)
    return jnp.dot(h, w2, preferred_element_type=jnp.float32) + b2


def _mhsa(x, g, b, wq, bq, wk, bk, wv, bv, wo_h, bo, *, num_heads, pallas):
    Tt, D = x.shape
    hd = D // num_heads
    cdt = wq.dtype                                             # bf16
    xn = _layernorm(x, g, b).astype(cdt)

    # Full-width projections (MXU-efficient), f32 accumulation.
    q = jnp.dot(xn, wq, preferred_element_type=jnp.float32) + bq
    k = jnp.dot(xn, wk, preferred_element_type=jnp.float32) + bk
    v = jnp.dot(xn, wv, preferred_element_type=jnp.float32) + bv

    def heads(t):  # (T, D) -> (H, T, hd): static lane slices stacked on a new major dim
        return jnp.stack([t[:, h * hd:(h + 1) * hd] for h in range(num_heads)], axis=0)

    qh = heads(q).astype(cdt)
    kh = heads(k).astype(cdt)
    vh = heads(v).astype(cdt)

    # Batched-head QK^T: (H, T, hd) x (H, T, hd) -> (H, T, T)
    s = jax.lax.dot_general(qh, kh, (((2,), (2,)), ((0,), (0,))),
                            preferred_element_type=jnp.float32)
    s = s * (1.0 / float(hd) ** 0.5)
    s = s - jnp.max(s, axis=-1, keepdims=True)
    e = jnp.exp(s)
    denom = jnp.sum(e, axis=-1, keepdims=True)
    if pallas:
        attn = e * pl.reciprocal(denom, approx=True)           # EUP slot
    else:
        attn = e / denom

    # (H, T, T) x (H, T, hd) -> (H, T, hd)
    ctx = jax.lax.dot_general(attn.astype(cdt), vh, (((2,), (1,)), ((0,), (0,))),
                              preferred_element_type=jnp.float32)
    # Output projection without concatenating heads: wo pre-split to (H, hd, D);
    # (H, T, hd) x (H, hd, D) -> (H, T, D), then sum over heads.
    yh = jax.lax.dot_general(ctx.astype(cdt), wo_h, (((2,), (1,)), ((0,), (0,))),
                             preferred_element_type=jnp.float32)
    return jnp.sum(yh, axis=0) + bo


def _conv_module(x, g, b, wp1, bp1, wd, bd, bn_s, bn_o, wp2, bp2, *,
                 kernel_size, dim_expand, pallas):
    Tt = x.shape[0]
    E = dim_expand
    K = kernel_size
    pad = (K - 1) // 2
    cdt = wp1.dtype

    xn = _layernorm(x, g, b).astype(cdt)
    # PointwiseConv1d(D -> 2E) == channel matmul
    h = jnp.dot(xn, wp1, preferred_element_type=jnp.float32) + bp1      # (T, 2E)
    glu = h[:, :E] * jax.nn.sigmoid(h[:, E:2 * E])                      # GLU over channels

    # DepthwiseConv1d along time, SAME padding, stride 1:
    #   out[t, c] = sum_j wd[j, c] * glu[t + j - pad, c]
    # K static taps realized as rolls along the time (sublane) axis + edge masks.
    tt = jax.lax.broadcasted_iota(jnp.int32, (Tt, E), 0)
    dc = jnp.zeros((Tt, E), jnp.float32)
    for j in range(K):
        s = j - pad
        if s == 0:
            tap = glu
        else:
            shift = (-s) % Tt
            tap = pltpu.roll(glu, shift, 0) if pallas else jnp.roll(glu, shift, axis=0)
            valid = jnp.logical_and(tt + s >= 0, tt + s < Tt)
            tap = jnp.where(valid, tap, 0.0)
        dc = dc + tap * wd[j:j + 1, :]
    dc = dc + bd

    # BatchNorm1d (inference) folded to scale/shift, then Swish
    y = _swish(dc * bn_s + bn_o).astype(cdt)
    # PointwiseConv1d(E -> E)
    return jnp.dot(y, wp2, preferred_element_type=jnp.float32) + bp2


def _block_math(x, params, *, num_heads, kernel_size, dim_expand, ff_factor, pallas):
    (f1_g, f1_b, f1_w1, f1_b1, f1_w2, f1_b2,
     a_g, a_b, wq, bq, wk, bk, wv, bv, wo_h, bo,
     c_g, c_b, wp1, bp1, wd, bd, bn_s, bn_o, wp2, bp2,
     f2_g, f2_b, f2_w1, f2_b1, f2_w2, f2_b2) = params

    x = x + ff_factor * _ffn(x, f1_g, f1_b, f1_w1, f1_b1, f1_w2, f1_b2)
    x = x + _mhsa(x, a_g, a_b, wq, bq, wk, bk, wv, bv, wo_h, bo,
                  num_heads=num_heads, pallas=pallas)
    x = x + _conv_module(x, c_g, c_b, wp1, bp1, wd, bd, bn_s, bn_o, wp2, bp2,
                         kernel_size=kernel_size, dim_expand=dim_expand, pallas=pallas)
    x = x + ff_factor * _ffn(x, f2_g, f2_b, f2_w1, f2_b1, f2_w2, f2_b2)
    return x


# ---------------------------------------------------------------------------
# Fused Pallas kernel: one grid step == one batch element, whole block in VMEM.
# ---------------------------------------------------------------------------
def conformer_kernel(
        x_ref,
        f1_g_ref, f1_b_ref, f1_w1_ref, f1_b1_ref, f1_w2_ref, f1_b2_ref,
        a_g_ref, a_b_ref, wq_ref, bq_ref, wk_ref, bk_ref, wv_ref, bv_ref,
        wo_ref, bo_ref,
        c_g_ref, c_b_ref, wp1_ref, bp1_ref, wd_ref, bd_ref, bns_ref, bno_ref,
        wp2_ref, bp2_ref,
        f2_g_ref, f2_b_ref, f2_w1_ref, f2_b1_ref, f2_w2_ref, f2_b2_ref,
        o_ref, *, num_heads, kernel_size, dim_expand, ff_factor):
    params = tuple(r[...] for r in (
        f1_g_ref, f1_b_ref, f1_w1_ref, f1_b1_ref, f1_w2_ref, f1_b2_ref,
        a_g_ref, a_b_ref, wq_ref, bq_ref, wk_ref, bk_ref, wv_ref, bv_ref,
        wo_ref, bo_ref,
        c_g_ref, c_b_ref, wp1_ref, bp1_ref, wd_ref, bd_ref, bns_ref, bno_ref,
        wp2_ref, bp2_ref,
        f2_g_ref, f2_b_ref, f2_w1_ref, f2_b1_ref, f2_w2_ref, f2_b2_ref))
    x = x_ref[0].astype(jnp.float32)                         # (T, D)
    y = _block_math(x, params, num_heads=num_heads, kernel_size=kernel_size,
                    dim_expand=dim_expand, ff_factor=ff_factor, pallas=True)
    o_ref[0] = y.astype(o_ref.dtype)


def conformer_block(x, flat_params, *, num_heads, kernel_size, dim_expand,
                    ff_residual_factor=0.5):
    B, Tt, D = x.shape
    assert D == dim_expand, "conv_res projection branch not implemented"
    assert D % num_heads == 0

    kernel = functools.partial(conformer_kernel, num_heads=num_heads,
                               kernel_size=kernel_size, dim_expand=dim_expand,
                               ff_factor=ff_residual_factor)
    io_spec = pl.BlockSpec((1, Tt, D), lambda b: (b, 0, 0))
    w_specs = [pl.BlockSpec(p.shape, lambda b, _nd=p.ndim: (0,) * _nd)
               for p in flat_params]

    return pl.pallas_call(
        kernel,
        out_shape=jax.ShapeDtypeStruct((B, Tt, dim_expand), x.dtype),
        grid=(B,),
        in_specs=[io_spec] + w_specs,
        out_specs=io_spec,
        compiler_params=pltpu.CompilerParams(
            dimension_semantics=("parallel",),
            vmem_limit_bytes=64 * 1024 * 1024),
    )(x, *flat_params)


def conformer_ref(x, flat_params, *, num_heads, kernel_size, dim_expand, ff_factor):
    """Pure-JAX reference with identical math (for correctness check)."""
    fn = lambda x2d: _block_math(
        x2d, tuple(flat_params), num_heads=num_heads, kernel_size=kernel_size,
        dim_expand=dim_expand, ff_factor=ff_factor, pallas=False)
    return jax.vmap(fn)(x.astype(jnp.float32)).astype(x.dtype)


# ---------------------------------------------------------------------------
# Deterministic parameter init (matmul weights stored in bf16) + run
# ---------------------------------------------------------------------------
def init_params(key, D, E, ff_exp, num_heads, K):
    keys = iter(jax.random.split(key, 64))
    WDT = jnp.bfloat16                      # dtype for matmul weights

    def rnd(shape, scale, dtype=jnp.float32):
        return (scale * jax.random.normal(next(keys), shape)).astype(dtype)

    def ln(dim):
        g = (1.0 + 0.1 * jax.random.normal(next(keys), (1, dim))).astype(jnp.float32)
        b = rnd((1, dim), 0.1)
        return g, b

    def ffn(dim):
        g, b = ln(dim)
        w1 = rnd((dim, ff_exp * dim), dim ** -0.5, WDT)
        b1 = rnd((1, ff_exp * dim), 0.02)
        w2 = rnd((ff_exp * dim, dim), (ff_exp * dim) ** -0.5, WDT)
        b2 = rnd((1, dim), 0.02)
        return [g, b, w1, b1, w2, b2]

    hd = D // num_heads
    a_g, a_b = ln(D)
    proj = lambda: (rnd((D, D), D ** -0.5, WDT), rnd((1, D), 0.02))
    wq, bq = proj(); wk, bk = proj(); wv, bv = proj(); wo, bo = proj()
    wo_h = wo.reshape(num_heads, hd, D)     # pre-split heads for batched out-proj
    mhsa = [a_g, a_b, wq, bq, wk, bk, wv, bv, wo_h, bo]

    c_g, c_b = ln(D)
    wp1 = rnd((D, 2 * E), D ** -0.5, WDT)
    bp1 = rnd((1, 2 * E), 0.02)
    wd = rnd((K, E), 0.2)                   # depthwise taps stay f32 (VPU path)
    bd = rnd((1, E), 0.02)
    bn_gamma = (1.0 + 0.1 * jax.random.normal(next(keys), (1, E))).astype(jnp.float32)
    bn_beta = rnd((1, E), 0.1)
    bn_scale = bn_gamma / jnp.sqrt(1.0 + BN_EPS)   # fresh running stats: mean=0, var=1
    bn_shift = bn_beta
    wp2 = rnd((E, E), E ** -0.5, WDT)
    bp2 = rnd((1, E), 0.02)
    conv = [c_g, c_b, wp1, bp1, wd, bd, bn_scale, bn_shift, wp2, bp2]

    return ffn(D) + mhsa + conv + ffn(E)


if __name__ == "__main__":
    B, T = 2, 16
    D = 64          # dim_model
    E = 64          # dim_expand (== dim_model -> no conv_res projection)
    H = 4           # num_heads
    K = 7           # kernel_size (odd -> SAME padding); stride = 1
    FF_EXP = 4

    key = jax.random.PRNGKey(0)
    k_x, k_p = jax.random.split(key)
    x = jax.random.normal(k_x, (B, T, D), dtype=jnp.float32)
    params = init_params(k_p, D, E, FF_EXP, H, K)

    out = conformer_block(x, params, num_heads=H, kernel_size=K, dim_expand=E,
                          ff_residual_factor=0.5)
    out = jax.block_until_ready(out)

    ref = conformer_ref(x, params, num_heads=H, kernel_size=K, dim_expand=E,
                        ff_factor=0.5)

    assert out.shape == (B, T, E), out.shape
    assert bool(jnp.all(jnp.isfinite(out)))
    assert bool(jnp.allclose(out, ref, rtol=2e-2, atol=2e-2)), \
        float(jnp.max(jnp.abs(out - ref)))
    print("KERNEL_OK")
</pallas_src>

<mosaic_0001>
module attributes {stable_mosaic.version = 11 : i64} {
  func.func @conformer_kernel(%arg0: i32, %arg1: memref<1x16x64xf32, #tpu.memory_space<vmem>>, %arg2: memref<1x64xf32, #tpu.memory_space<vmem>>, %arg3: memref<1x64xf32, #tpu.memory_space<vmem>>, %arg4: memref<64x256xbf16, #tpu.memory_space<vmem>>, %arg5: memref<1x256xf32, #tpu.memory_space<vmem>>, %arg6: memref<256x64xbf16, #tpu.memory_space<vmem>>, %arg7: memref<1x64xf32, #tpu.memory_space<vmem>>, %arg8: memref<1x64xf32, #tpu.memory_space<vmem>>, %arg9: memref<1x64xf32, #tpu.memory_space<vmem>>, %arg10: memref<64x64xbf16, #tpu.memory_space<vmem>>, %arg11: memref<1x64xf32, #tpu.memory_space<vmem>>, %arg12: memref<64x64xbf16, #tpu.memory_space<vmem>>, %arg13: memref<1x64xf32, #tpu.memory_space<vmem>>, %arg14: memref<64x64xbf16, #tpu.memory_space<vmem>>, %arg15: memref<1x64xf32, #tpu.memory_space<vmem>>, %arg16: memref<4x16x64xbf16, #tpu.memory_space<vmem>>, %arg17: memref<1x64xf32, #tpu.memory_space<vmem>>, %arg18: memref<1x64xf32, #tpu.memory_space<vmem>>, %arg19: memref<1x64xf32, #tpu.memory_space<vmem>>, %arg20: memref<64x128xbf16, #tpu.memory_space<vmem>>, %arg21: memref<1x128xf32, #tpu.memory_space<vmem>>, %arg22: memref<7x64xf32, #tpu.memory_space<vmem>>, %arg23: memref<1x64xf32, #tpu.memory_space<vmem>>, %arg24: memref<1x64xf32, #tpu.memory_space<vmem>>, %arg25: memref<1x64xf32, #tpu.memory_space<vmem>>, %arg26: memref<64x64xbf16, #tpu.memory_space<vmem>>, %arg27: memref<1x64xf32, #tpu.memory_space<vmem>>, %arg28: memref<1x64xf32, #tpu.memory_space<vmem>>, %arg29: memref<1x64xf32, #tpu.memory_space<vmem>>, %arg30: memref<64x256xbf16, #tpu.memory_space<vmem>>, %arg31: memref<1x256xf32, #tpu.memory_space<vmem>>, %arg32: memref<256x64xbf16, #tpu.memory_space<vmem>>, %arg33: memref<1x64xf32, #tpu.memory_space<vmem>>, %arg34: memref<1x16x64xf32, #tpu.memory_space<vmem>>) attributes {dimension_semantics = [#tpu.dimension_semantics<parallel>], iteration_bounds = array<i64: 2>, scalar_prefetch = 0 : i64, scratch_operands = 0 : i64, tpu.core_type = #tpu.core_type<tc>, window_params = [{transform_indices = @transform_0, window_bounds = array<i64: 1, 16, 64>}, {pipeline_mode = #tpu.pipeline_mode<synchronous>, transform_indices = @transform_1, window_bounds = array<i64: 1, 64>}, {pipeline_mode = #tpu.pipeline_mode<synchronous>, transform_indices = @transform_2, window_bounds = array<i64: 1, 64>}, {pipeline_mode = #tpu.pipeline_mode<synchronous>, transform_indices = @transform_3, window_bounds = array<i64: 64, 256>}, {pipeline_mode = #tpu.pipeline_mode<synchronous>, transform_indices = @transform_4, window_bounds = array<i64: 1, 256>}, {pipeline_mode = #tpu.pipeline_mode<synchronous>, transform_indices = @transform_5, window_bounds = array<i64: 256, 64>}, {pipeline_mode = #tpu.pipeline_mode<synchronous>, transform_indices = @transform_6, window_bounds = array<i64: 1, 64>}, {pipeline_mode = #tpu.pipeline_mode<synchronous>, transform_indices = @transform_7, window_bounds = array<i64: 1, 64>}, {pipeline_mode = #tpu.pipeline_mode<synchronous>, transform_indices = @transform_8, window_bounds = array<i64: 1, 64>}, {pipeline_mode = #tpu.pipeline_mode<synchronous>, transform_indices = @transform_9, window_bounds = array<i64: 64, 64>}, {pipeline_mode = #tpu.pipeline_mode<synchronous>, transform_indices = @transform_10, window_bounds = array<i64: 1, 64>}, {pipeline_mode = #tpu.pipeline_mode<synchronous>, transform_indices = @transform_11, window_bounds = array<i64: 64, 64>}, {pipeline_mode = #tpu.pipeline_mode<synchronous>, transform_indices = @transform_12, window_bounds = array<i64: 1, 64>}, {pipeline_mode = #tpu.pipeline_mode<synchronous>, transform_indices = @transform_13, window_bounds = array<i64: 64, 64>}, {pipeline_mode = #tpu.pipeline_mode<synchronous>, transform_indices = @transform_14, window_bounds = array<i64: 1, 64>}, {pipeline_mode = #tpu.pipeline_mode<synchronous>, transform_indices = @transform_15, window_bounds = array<i64: 4, 16, 64>}, {pipeline_mode = #tpu.pipeline_mode<synchronous>, transform_indices = @transform_16, window_bounds = array<i64: 1, 64>}, {pipeline_mode = #tpu.pipeline_mode<synchronous>, transform_indices = @transform_17, window_bounds = array<i64: 1, 64>}, {pipeline_mode = #tpu.pipeline_mode<synchronous>, transform_indices = @transform_18, window_bounds = array<i64: 1, 64>}, {pipeline_mode = #tpu.pipeline_mode<synchronous>, transform_indices = @transform_19, window_bounds = array<i64: 64, 128>}, {pipeline_mode = #tpu.pipeline_mode<synchronous>, transform_indices = @transform_20, window_bounds = array<i64: 1, 128>}, {pipeline_mode = #tpu.pipeline_mode<synchronous>, transform_indices = @transform_21, window_bounds = array<i64: 7, 64>}, {pipeline_mode = #tpu.pipeline_mode<synchronous>, transform_indices = @transform_22, window_bounds = array<i64: 1, 64>}, {pipeline_mode = #tpu.pipeline_mode<synchronous>, transform_indices = @transform_23, window_bounds = array<i64: 1, 64>}, {pipeline_mode = #tpu.pipeline_mode<synchronous>, transform_indices = @transform_24, window_bounds = array<i64: 1, 64>}, {pipeline_mode = #tpu.pipeline_mode<synchronous>, transform_indices = @transform_25, window_bounds = array<i64: 64, 64>}, {pipeline_mode = #tpu.pipeline_mode<synchronous>, transform_indices = @transform_26, window_bounds = array<i64: 1, 64>}, {pipeline_mode = #tpu.pipeline_mode<synchronous>, transform_indices = @transform_27, window_bounds = array<i64: 1, 64>}, {pipeline_mode = #tpu.pipeline_mode<synchronous>, transform_indices = @transform_28, window_bounds = array<i64: 1, 64>}, {pipeline_mode = #tpu.pipeline_mode<synchronous>, transform_indices = @transform_29, window_bounds = array<i64: 64, 256>}, {pipeline_mode = #tpu.pipeline_mode<synchronous>, transform_indices = @transform_30, window_bounds = array<i64: 1, 256>}, {pipeline_mode = #tpu.pipeline_mode<synchronous>, transform_indices = @transform_31, window_bounds = array<i64: 256, 64>}, {pipeline_mode = #tpu.pipeline_mode<synchronous>, transform_indices = @transform_32, window_bounds = array<i64: 1, 64>}, {transform_indices = @transform_33, window_bounds = array<i64: 1, 16, 64>}]} {
    %c0 = arith.constant 0 : index
    %c0_0 = arith.constant 0 : index
    %0 = vector.load %arg2[%c0, %c0_0] : memref<1x64xf32, #tpu.memory_space<vmem>>, vector<1x64xf32>
    %c0_1 = arith.constant 0 : index
    %c0_2 = arith.constant 0 : index
    %1 = vector.load %arg3[%c0_1, %c0_2] : memref<1x64xf32, #tpu.memory_space<vmem>>, vector<1x64xf32>
    %c0_3 = arith.constant 0 : index
    %c0_4 = arith.constant 0 : index
    %2 = vector.load %arg4[%c0_3, %c0_4] : memref<64x256xbf16, #tpu.memory_space<vmem>>, vector<64x256xbf16>
    %c0_5 = arith.constant 0 : index
    %c0_6 = arith.constant 0 : index
    %3 = vector.load %arg5[%c0_5, %c0_6] : memref<1x256xf32, #tpu.memory_space<vmem>>, vector<1x256xf32>
    %c0_7 = arith.constant 0 : index
    %c0_8 = arith.constant 0 : index
    %4 = vector.load %arg6[%c0_7, %c0_8] : memref<256x64xbf16, #tpu.memory_space<vmem>>, vector<256x64xbf16>
    %c0_9 = arith.constant 0 : index
    %c0_10 = arith.constant 0 : index
    %5 = vector.load %arg7[%c0_9, %c0_10] : memref<1x64xf32, #tpu.memory_space<vmem>>, vector<1x64xf32>
    %c0_11 = arith.constant 0 : index
    %c0_12 = arith.constant 0 : index
    %6 = vector.load %arg8[%c0_11, %c0_12] : memref<1x64xf32, #tpu.memory_space<vmem>>, vector<1x64xf32>
    %c0_13 = arith.constant 0 : index
    %c0_14 = arith.constant 0 : index
    %7 = vector.load %arg9[%c0_13, %c0_14] : memref<1x64xf32, #tpu.memory_space<vmem>>, vector<1x64xf32>
    %c0_15 = arith.constant 0 : index
    %c0_16 = arith.constant 0 : index
    %8 = vector.load %arg10[%c0_15, %c0_16] : memref<64x64xbf16, #tpu.memory_space<vmem>>, vector<64x64xbf16>
    %c0_17 = arith.constant 0 : index
    %c0_18 = arith.constant 0 : index
    %9 = vector.load %arg11[%c0_17, %c0_18] : memref<1x64xf32, #tpu.memory_space<vmem>>, vector<1x64xf32>
    %c0_19 = arith.constant 0 : index
    %c0_20 = arith.constant 0 : index
    %10 = vector.load %arg12[%c0_19, %c0_20] : memref<64x64xbf16, #tpu.memory_space<vmem>>, vector<64x64xbf16>
    %c0_21 = arith.constant 0 : index
    %c0_22 = arith.constant 0 : index
    %11 = vector.load %arg13[%c0_21, %c0_22] : memref<1x64xf32, #tpu.memory_space<vmem>>, vector<1x64xf32>
    %c0_23 = arith.constant 0 : index
    %c0_24 = arith.constant 0 : index
    %12 = vector.load %arg14[%c0_23, %c0_24] : memref<64x64xbf16, #tpu.memory_space<vmem>>, vector<64x64xbf16>
    %c0_25 = arith.constant 0 : index
    %c0_26 = arith.constant 0 : index
    %13 = vector.load %arg15[%c0_25, %c0_26] : memref<1x64xf32, #tpu.memory_space<vmem>>, vector<1x64xf32>
    %c0_27 = arith.constant 0 : index
    %c0_28 = arith.constant 0 : index
    %c0_29 = arith.constant 0 : index
    %14 = vector.load %arg16[%c0_27, %c0_28, %c0_29] : memref<4x16x64xbf16, #tpu.memory_space<vmem>>, vector<4x16x64xbf16>
    %c0_30 = arith.constant 0 : index
    %c0_31 = arith.constant 0 : index
    %15 = vector.load %arg17[%c0_30, %c0_31] : memref<1x64xf32, #tpu.memory_space<vmem>>, vector<1x64xf32>
    %c0_32 = arith.constant 0 : index
    %c0_33 = arith.constant 0 : index
    %16 = vector.load %arg18[%c0_32, %c0_33] : memref<1x64xf32, #tpu.memory_space<vmem>>, vector<1x64xf32>
    %c0_34 = arith.constant 0 : index
    %c0_35 = arith.constant 0 : index
    %17 = vector.load %arg19[%c0_34, %c0_35] : memref<1x64xf32, #tpu.memory_space<vmem>>, vector<1x64xf32>
    %c0_36 = arith.constant 0 : index
    %c0_37 = arith.constant 0 : index
    %18 = vector.load %arg20[%c0_36, %c0_37] : memref<64x128xbf16, #tpu.memory_space<vmem>>, vector<64x128xbf16>
    %c0_38 = arith.constant 0 : index
    %c0_39 = arith.constant 0 : index
    %19 = vector.load %arg21[%c0_38, %c0_39] : memref<1x128xf32, #tpu.memory_space<vmem>>, vector<1x128xf32>
    %c0_40 = arith.constant 0 : index
    %c0_41 = arith.constant 0 : index
    %20 = vector.load %arg22[%c0_40, %c0_41] : memref<7x64xf32, #tpu.memory_space<vmem>>, vector<7x64xf32>
    %c0_42 = arith.constant 0 : index
    %c0_43 = arith.constant 0 : index
    %21 = vector.load %arg23[%c0_42, %c0_43] : memref<1x64xf32, #tpu.memory_space<vmem>>, vector<1x64xf32>
    %c0_44 = arith.constant 0 : index
    %c0_45 = arith.constant 0 : index
    %22 = vector.load %arg24[%c0_44, %c0_45] : memref<1x64xf32, #tpu.memory_space<vmem>>, vector<1x64xf32>
    %c0_46 = arith.constant 0 : index
    %c0_47 = arith.constant 0 : index
    %23 = vector.load %arg25[%c0_46, %c0_47] : memref<1x64xf32, #tpu.memory_space<vmem>>, vector<1x64xf32>
    %c0_48 = arith.constant 0 : index
    %c0_49 = arith.constant 0 : index
    %24 = vector.load %arg26[%c0_48, %c0_49] : memref<64x64xbf16, #tpu.memory_space<vmem>>, vector<64x64xbf16>
    %c0_50 = arith.constant 0 : index
    %c0_51 = arith.constant 0 : index
    %25 = vector.load %arg27[%c0_50, %c0_51] : memref<1x64xf32, #tpu.memory_space<vmem>>, vector<1x64xf32>
    %c0_52 = arith.constant 0 : index
    %c0_53 = arith.constant 0 : index
    %26 = vector.load %arg28[%c0_52, %c0_53] : memref<1x64xf32, #tpu.memory_space<vmem>>, vector<1x64xf32>
    %c0_54 = arith.constant 0 : index
    %c0_55 = arith.constant 0 : index
    %27 = vector.load %arg29[%c0_54, %c0_55] : memref<1x64xf32, #tpu.memory_space<vmem>>, vector<1x64xf32>
    %c0_56 = arith.constant 0 : index
    %c0_57 = arith.constant 0 : index
    %28 = vector.load %arg30[%c0_56, %c0_57] : memref<64x256xbf16, #tpu.memory_space<vmem>>, vector<64x256xbf16>
    %c0_58 = arith.constant 0 : index
    %c0_59 = arith.constant 0 : index
    %29 = vector.load %arg31[%c0_58, %c0_59] : memref<1x256xf32, #tpu.memory_space<vmem>>, vector<1x256xf32>
    %c0_60 = arith.constant 0 : index
    %c0_61 = arith.constant 0 : index
    %30 = vector.load %arg32[%c0_60, %c0_61] : memref<256x64xbf16, #tpu.memory_space<vmem>>, vector<256x64xbf16>
    %c0_62 = arith.constant 0 : index
    %c0_63 = arith.constant 0 : index
    %31 = vector.load %arg33[%c0_62, %c0_63] : memref<1x64xf32, #tpu.memory_space<vmem>>, vector<1x64xf32>
    %c0_64 = arith.constant 0 : index
    %c0_65 = arith.constant 0 : index
    %c0_66 = arith.constant 0 : index
    %32 = vector.load %arg1[%c0_64, %c0_65, %c0_66] : memref<1x16x64xf32, #tpu.memory_space<vmem>>, vector<1x16x64xf32>
    %33 = vector.shape_cast %32 : vector<1x16x64xf32> to vector<16x64xf32>
    %cst = arith.constant dense<0.000000e+00> : vector<16xf32>
    %34 = vector.multi_reduction <add>, %33, %cst [1] : vector<16x64xf32> to vector<16xf32>
    %35 = vector.shape_cast %34 : vector<16xf32> to vector<16x1xf32>
    %cst_67 = arith.constant 6.400000e+01 : f32
    %36 = vector.broadcast %cst_67 : f32 to vector<16x1xf32>
    %37 = arith.divf %35, %36 : vector<16x1xf32>
    %38 = vector.broadcast %37 : vector<16x1xf32> to vector<16x64xf32>
    %39 = arith.subf %33, %38 : vector<16x64xf32>
    %40 = arith.mulf %39, %39 : vector<16x64xf32>
    %cst_68 = arith.constant dense<0.000000e+00> : vector<16xf32>
    %41 = vector.multi_reduction <add>, %40, %cst_68 [1] : vector<16x64xf32> to vector<16xf32>
    %42 = vector.shape_cast %41 : vector<16xf32> to vector<16x1xf32>
    %cst_69 = arith.constant 6.400000e+01 : f32
    %43 = vector.broadcast %cst_69 : f32 to vector<16x1xf32>
    %44 = arith.divf %42, %43 : vector<16x1xf32>
    %45 = vector.broadcast %37 : vector<16x1xf32> to vector<16x64xf32>
    %46 = arith.subf %33, %45 : vector<16x64xf32>
    %cst_70 = arith.constant 9.99999974E-6 : f32
    %47 = vector.broadcast %cst_70 : f32 to vector<16x1xf32>
    %48 = arith.addf %44, %47 : vector<16x1xf32>
    %49 = math.rsqrt %48 : vector<16x1xf32>
    %50 = vector.broadcast %49 : vector<16x1xf32> to vector<16x64xf32>
    %51 = arith.mulf %46, %50 : vector<16x64xf32>
    %52 = vector.broadcast %0 : vector<1x64xf32> to vector<16x64xf32>
    %53 = arith.mulf %51, %52 : vector<16x64xf32>
    %54 = vector.broadcast %1 : vector<1x64xf32> to vector<16x64xf32>
    %55 = arith.addf %53, %54 : vector<16x64xf32>
    %56 = arith.truncf %55 : vector<16x64xf32> to vector<16x64xbf16>
    %cst_71 = arith.constant dense<0.000000e+00> : vector<16x256xf32>
    %57 = tpu.matmul %56, %2, %cst_71 {dimension_numbers = #tpu.dot_dimension_numbers<[1], [0], [0], [1], [0, 0, 1, 1], [], []>} : vector<16x64xbf16>, vector<64x256xbf16>, vector<16x256xf32> -> vector<16x256xf32>
    %58 = vector.broadcast %3 : vector<1x256xf32> to vector<16x256xf32>
    %59 = arith.addf %57, %58 : vector<16x256xf32>
    %60 = arith.negf %59 : vector<16x256xf32>
    %61 = math.exp %60 : vector<16x256xf32>
    %cst_72 = arith.constant 1.000000e+00 : f32
    %62 = vector.broadcast %cst_72 : f32 to vector<16x256xf32>
    %63 = arith.addf %62, %61 : vector<16x256xf32>
    %64 = arith.divf %62, %63 : vector<16x256xf32>
    %65 = arith.mulf %59, %64 : vector<16x256xf32>
    %66 = arith.truncf %65 : vector<16x256xf32> to vector<16x256xbf16>
    %cst_73 = arith.constant dense<0.000000e+00> : vector<16x64xf32>
    %67 = tpu.matmul %66, %4, %cst_73 {dimension_numbers = #tpu.dot_dimension_numbers<[1], [0], [0], [1], [0, 0, 1, 1], [], []>} : vector<16x256xbf16>, vector<256x64xbf16>, vector<16x64xf32> -> vector<16x64xf32>
    %68 = vector.broadcast %5 : vector<1x64xf32> to vector<16x64xf32>
    %69 = arith.addf %67, %68 : vector<16x64xf32>
    %cst_74 = arith.constant 5.000000e-01 : f32
    %70 = vector.broadcast %cst_74 : f32 to vector<16x64xf32>
    %71 = arith.mulf %70, %69 : vector<16x64xf32>
    %72 = arith.addf %33, %71 : vector<16x64xf32>
    %cst_75 = arith.constant dense<0.000000e+00> : vector<16xf32>
    %73 = vector.multi_reduction <add>, %72, %cst_75 [1] : vector<16x64xf32> to vector<16xf32>
    %74 = vector.shape_cast %73 : vector<16xf32> to vector<16x1xf32>
    %cst_76 = arith.constant 6.400000e+01 : f32
    %75 = vector.broadcast %cst_76 : f32 to vector<16x1xf32>
    %76 = arith.divf %74, %75 : vector<16x1xf32>
    %77 = vector.broadcast %76 : vector<16x1xf32> to vector<16x64xf32>
    %78 = arith.subf %72, %77 : vector<16x64xf32>
    %79 = arith.mulf %78, %78 : vector<16x64xf32>
    %cst_77 = arith.constant dense<0.000000e+00> : vector<16xf32>
    %80 = vector.multi_reduction <add>, %79, %cst_77 [1] : vector<16x64xf32> to vector<16xf32>
    %81 = vector.shape_cast %80 : vector<16xf32> to vector<16x1xf32>
    %cst_78 = arith.constant 6.400000e+01 : f32
    %82 = vector.broadcast %cst_78 : f32 to vector<16x1xf32>
    %83 = arith.divf %81, %82 : vector<16x1xf32>
    %84 = vector.broadcast %76 : vector<16x1xf32> to vector<16x64xf32>
    %85 = arith.subf %72, %84 : vector<16x64xf32>
    %cst_79 = arith.constant 9.99999974E-6 : f32
    %86 = vector.broadcast %cst_79 : f32 to vector<16x1xf32>
    %87 = arith.addf %83, %86 : vector<16x1xf32>
    %88 = math.rsqrt %87 : vector<16x1xf32>
    %89 = vector.broadcast %88 : vector<16x1xf32> to vector<16x64xf32>
    %90 = arith.mulf %85, %89 : vector<16x64xf32>
    %91 = vector.broadcast %6 : vector<1x64xf32> to vector<16x64xf32>
    %92 = arith.mulf %90, %91 : vector<16x64xf32>
    %93 = vector.broadcast %7 : vector<1x64xf32> to vector<16x64xf32>
    %94 = arith.addf %92, %93 : vector<16x64xf32>
    %95 = arith.truncf %94 : vector<16x64xf32> to vector<16x64xbf16>
    %cst_80 = arith.constant dense<0.000000e+00> : vector<16x64xf32>
    %96 = tpu.matmul %95, %8, %cst_80 {dimension_numbers = #tpu.dot_dimension_numbers<[1], [0], [0], [1], [0, 0, 1, 1], [], []>} : vector<16x64xbf16>, vector<64x64xbf16>, vector<16x64xf32> -> vector<16x64xf32>
    %97 = vector.broadcast %9 : vector<1x64xf32> to vector<16x64xf32>
    %98 = arith.addf %96, %97 : vector<16x64xf32>
    %cst_81 = arith.constant dense<0.000000e+00> : vector<16x64xf32>
    %99 = tpu.matmul %95, %10, %cst_81 {dimension_numbers = #tpu.dot_dimension_numbers<[1], [0], [0], [1], [0, 0, 1, 1], [], []>} : vector<16x64xbf16>, vector<64x64xbf16>, vector<16x64xf32> -> vector<16x64xf32>
    %100 = vector.broadcast %11 : vector<1x64xf32> to vector<16x64xf32>
    %101 = arith.addf %99, %100 : vector<16x64xf32>
    %cst_82 = arith.constant dense<0.000000e+00> : vector<16x64xf32>
    %102 = tpu.matmul %95, %12, %cst_82 {dimension_numbers = #tpu.dot_dimension_numbers<[1], [0], [0], [1], [0, 0, 1, 1], [], []>} : vector<16x64xbf16>, vector<64x64xbf16>, vector<16x64xf32> -> vector<16x64xf32>
    %103 = vector.broadcast %13 : vector<1x64xf32> to vector<16x64xf32>
    %104 = arith.addf %102, %103 : vector<16x64xf32>
    %105 = vector.extract_strided_slice %98 {offsets = [0, 0], sizes = [16, 16], strides = [1, 1]} : vector<16x64xf32> to vector<16x16xf32>
    %106 = vector.extract_strided_slice %98 {offsets = [0, 16], sizes = [16, 16], strides = [1, 1]} : vector<16x64xf32> to vector<16x16xf32>
    %107 = vector.extract_strided_slice %98 {offsets = [0, 32], sizes = [16, 16], strides = [1, 1]} : vector<16x64xf32> to vector<16x16xf32>
    %108 = vector.extract_strided_slice %98 {offsets = [0, 48], sizes = [16, 16], strides = [1, 1]} : vector<16x64xf32> to vector<16x16xf32>
    %109 = vector.shape_cast %105 : vector<16x16xf32> to vector<1x16x16xf32>
    %110 = vector.shape_cast %106 : vector<16x16xf32> to vector<1x16x16xf32>
    %111 = vector.shape_cast %107 : vector<16x16xf32> to vector<1x16x16xf32>
    %112 = vector.shape_cast %108 : vector<16x16xf32> to vector<1x16x16xf32>
    %113 = tpu.concatenate %109, %110, %111, %112 in 0 : vector<1x16x16xf32>, vector<1x16x16xf32>, vector<1x16x16xf32>, vector<1x16x16xf32> -> vector<4x16x16xf32>
    %114 = arith.truncf %113 : vector<4x16x16xf32> to vector<4x16x16xbf16>
    %115 = vector.extract_strided_slice %101 {offsets = [0, 0], sizes = [16, 16], strides = [1, 1]} : vector<16x64xf32> to vector<16x16xf32>
    %116 = vector.extract_strided_slice %101 {offsets = [0, 16], sizes = [16, 16], strides = [1, 1]} : vector<16x64xf32> to vector<16x16xf32>
    %117 = vector.extract_strided_slice %101 {offsets = [0, 32], sizes = [16, 16], strides = [1, 1]} : vector<16x64xf32> to vector<16x16xf32>
    %118 = vector.extract_strided_slice %101 {offsets = [0, 48], sizes = [16, 16], strides = [1, 1]} : vector<16x64xf32> to vector<16x16xf32>
    %119 = vector.shape_cast %115 : vector<16x16xf32> to vector<1x16x16xf32>
    %120 = vector.shape_cast %116 : vector<16x16xf32> to vector<1x16x16xf32>
    %121 = vector.shape_cast %117 : vector<16x16xf32> to vector<1x16x16xf32>
    %122 = vector.shape_cast %118 : vector<16x16xf32> to vector<1x16x16xf32>
    %123 = tpu.concatenate %119, %120, %121, %122 in 0 : vector<1x16x16xf32>, vector<1x16x16xf32>, vector<1x16x16xf32>, vector<1x16x16xf32> -> vector<4x16x16xf32>
    %124 = arith.truncf %123 : vector<4x16x16xf32> to vector<4x16x16xbf16>
    %125 = vector.extract_strided_slice %104 {offsets = [0, 0], sizes = [16, 16], strides = [1, 1]} : vector<16x64xf32> to vector<16x16xf32>
    %126 = vector.extract_strided_slice %104 {offsets = [0, 16], sizes = [16, 16], strides = [1, 1]} : vector<16x64xf32> to vector<16x16xf32>
    %127 = vector.extract_strided_slice %104 {offsets = [0, 32], sizes = [16, 16], strides = [1, 1]} : vector<16x64xf32> to vector<16x16xf32>
    %128 = vector.extract_strided_slice %104 {offsets = [0, 48], sizes = [16, 16], strides = [1, 1]} : vector<16x64xf32> to vector<16x16xf32>
    %129 = vector.shape_cast %125 : vector<16x16xf32> to vector<1x16x16xf32>
    %130 = vector.shape_cast %126 : vector<16x16xf32> to vector<1x16x16xf32>
    %131 = vector.shape_cast %127 : vector<16x16xf32> to vector<1x16x16xf32>
    %132 = vector.shape_cast %128 : vector<16x16xf32> to vector<1x16x16xf32>
    %133 = tpu.concatenate %129, %130, %131, %132 in 0 : vector<1x16x16xf32>, vector<1x16x16xf32>, vector<1x16x16xf32>, vector<1x16x16xf32> -> vector<4x16x16xf32>
    %134 = arith.truncf %133 : vector<4x16x16xf32> to vector<4x16x16xbf16>
    %cst_83 = arith.constant dense<0.000000e+00> : vector<4x16x16xf32>
    %135 = tpu.matmul %114, %124, %cst_83 {dimension_numbers = #tpu.dot_dimension_numbers<[2], [2], [1], [1], [0, 0, 0, 1, 1, 1], [0], [0]>} : vector<4x16x16xbf16>, vector<4x16x16xbf16>, vector<4x16x16xf32> -> vector<4x16x16xf32>
    %cst_84 = arith.constant 2.500000e-01 : f32
    %136 = vector.broadcast %cst_84 : f32 to vector<4x16x16xf32>
    %137 = arith.mulf %135, %136 : vector<4x16x16xf32>
    %cst_85 = arith.constant dense<0xFF800000> : vector<4x16xf32>
    %138 = vector.multi_reduction <maximumf>, %137, %cst_85 [2] : vector<4x16x16xf32> to vector<4x16xf32>
    %139 = vector.shape_cast %138 : vector<4x16xf32> to vector<4x16x1xf32>
    %140 = vector.broadcast %139 : vector<4x16x1xf32> to vector<4x16x16xf32>
    %141 = arith.subf %137, %140 : vector<4x16x16xf32>
    %142 = math.exp %141 : vector<4x16x16xf32>
    %cst_86 = arith.constant dense<0.000000e+00> : vector<4x16xf32>
    %143 = vector.multi_reduction <add>, %142, %cst_86 [2] : vector<4x16x16xf32> to vector<4x16xf32>
    %144 = vector.shape_cast %143 : vector<4x16xf32> to vector<4x16x1xf32>
    %145 = tpu.reciprocal %144 {approx = true} : vector<4x16x1xf32> -> vector<4x16x1xf32>
    %146 = vector.broadcast %145 : vector<4x16x1xf32> to vector<4x16x16xf32>
    %147 = arith.mulf %142, %146 : vector<4x16x16xf32>
    %148 = arith.truncf %147 : vector<4x16x16xf32> to vector<4x16x16xbf16>
    %cst_87 = arith.constant dense<0.000000e+00> : vector<4x16x16xf32>
    %149 = tpu.matmul %148, %134, %cst_87 {dimension_numbers = #tpu.dot_dimension_numbers<[2], [1], [1], [2], [0, 0, 0, 1, 1, 2], [0], [0]>} : vector<4x16x16xbf16>, vector<4x16x16xbf16>, vector<4x16x16xf32> -> vector<4x16x16xf32>
    %150 = arith.truncf %149 : vector<4x16x16xf32> to vector<4x16x16xbf16>
    %cst_88 = arith.constant dense<0.000000e+00> : vector<4x16x64xf32>
    %151 = tpu.matmul %150, %14, %cst_88 {dimension_numbers = #tpu.dot_dimension_numbers<[2], [1], [1], [2], [0, 0, 0, 1, 1, 2], [0], [0]>} : vector<4x16x16xbf16>, vector<4x16x64xbf16>, vector<4x16x64xf32> -> vector<4x16x64xf32>
    %cst_89 = arith.constant dense<0.000000e+00> : vector<16x64xf32>
    %152 = vector.multi_reduction <add>, %151, %cst_89 [0] : vector<4x16x64xf32> to vector<16x64xf32>
    %153 = vector.broadcast %15 : vector<1x64xf32> to vector<16x64xf32>
    %154 = arith.addf %152, %153 : vector<16x64xf32>
    %155 = arith.addf %72, %154 : vector<16x64xf32>
    %cst_90 = arith.constant dense<0.000000e+00> : vector<16xf32>
    %156 = vector.multi_reduction <add>, %155, %cst_90 [1] : vector<16x64xf32> to vector<16xf32>
    %157 = vector.shape_cast %156 : vector<16xf32> to vector<16x1xf32>
    %cst_91 = arith.constant 6.400000e+01 : f32
    %158 = vector.broadcast %cst_91 : f32 to vector<16x1xf32>
    %159 = arith.divf %157, %158 : vector<16x1xf32>
    %160 = vector.broadcast %159 : vector<16x1xf32> to vector<16x64xf32>
    %161 = arith.subf %155, %160 : vector<16x64xf32>
    %162 = arith.mulf %161, %161 : vector<16x64xf32>
    %cst_92 = arith.constant dense<0.000000e+00> : vector<16xf32>
    %163 = vector.multi_reduction <add>, %162, %cst_92 [1] : vector<16x64xf32> to vector<16xf32>
    %164 = vector.shape_cast %163 : vector<16xf32> to vector<16x1xf32>
    %cst_93 = arith.constant 6.400000e+01 : f32
    %165 = vector.broadcast %cst_93 : f32 to vector<16x1xf32>
    %166 = arith.divf %164, %165 : vector<16x1xf32>
    %167 = vector.broadcast %159 : vector<16x1xf32> to vector<16x64xf32>
    %168 = arith.subf %155, %167 : vector<16x64xf32>
    %cst_94 = arith.constant 9.99999974E-6 : f32
    %169 = vector.broadcast %cst_94 : f32 to vector<16x1xf32>
    %170 = arith.addf %166, %169 : vector<16x1xf32>
    %171 = math.rsqrt %170 : vector<16x1xf32>
    %172 = vector.broadcast %171 : vector<16x1xf32> to vector<16x64xf32>
    %173 = arith.mulf %168, %172 : vector<16x64xf32>
    %174 = vector.broadcast %16 : vector<1x64xf32> to vector<16x64xf32>
    %175 = arith.mulf %173, %174 : vector<16x64xf32>
    %176 = vector.broadcast %17 : vector<1x64xf32> to vector<16x64xf32>
    %177 = arith.addf %175, %176 : vector<16x64xf32>
    %178 = arith.truncf %177 : vector<16x64xf32> to vector<16x64xbf16>
    %cst_95 = arith.constant dense<0.000000e+00> : vector<16x128xf32>
    %179 = tpu.matmul %178, %18, %cst_95 {dimension_numbers = #tpu.dot_dimension_numbers<[1], [0], [0], [1], [0, 0, 1, 1], [], []>} : vector<16x64xbf16>, vector<64x128xbf16>, vector<16x128xf32> -> vector<16x128xf32>
    %180 = vector.broadcast %19 : vector<1x128xf32> to vector<16x128xf32>
    %181 = arith.addf %179, %180 : vector<16x128xf32>
    %182 = vector.extract_strided_slice %181 {offsets = [0, 0], sizes = [16, 64], strides = [1, 1]} : vector<16x128xf32> to vector<16x64xf32>
    %183 = vector.extract_strided_slice %181 {offsets = [0, 64], sizes = [16, 64], strides = [1, 1]} : vector<16x128xf32> to vector<16x64xf32>
    %184 = arith.negf %183 : vector<16x64xf32>
    %185 = math.exp %184 : vector<16x64xf32>
    %cst_96 = arith.constant 1.000000e+00 : f32
    %186 = vector.broadcast %cst_96 : f32 to vector<16x64xf32>
    %187 = arith.addf %186, %185 : vector<16x64xf32>
    %188 = arith.divf %186, %187 : vector<16x64xf32>
    %189 = arith.mulf %182, %188 : vector<16x64xf32>
    %190 = tpu.iota {dimensions = array<i32: 0>} : vector<16x64xi32>
    %cst_97 = arith.constant 0.000000e+00 : f32
    %191 = vector.broadcast %cst_97 : f32 to vector<16x64xf32>
    %c3_i32 = arith.constant 3 : i32
    %192 = tpu.dynamic_rotate %189 by %c3_i32 dim 0 : vector<16x64xf32>, i32 -> vector<16x64xf32>
    %c-3_i32 = arith.constant -3 : i32
    %193 = vector.broadcast %c-3_i32 : i32 to vector<16x64xi32>
    %194 = arith.addi %190, %193 : vector<16x64xi32>
    %c0_i32 = arith.constant 0 : i32
    %195 = vector.broadcast %c0_i32 : i32 to vector<16x64xi32>
    %196 = arith.cmpi sge, %194, %195 : vector<16x64xi32>
    %c-3_i32_98 = arith.constant -3 : i32
    %197 = vector.broadcast %c-3_i32_98 : i32 to vector<16x64xi32>
    %198 = arith.addi %190, %197 : vector<16x64xi32>
    %c16_i32 = arith.constant 16 : i32
    %199 = vector.broadcast %c16_i32 : i32 to vector<16x64xi32>
    %200 = arith.cmpi slt, %198, %199 : vector<16x64xi32>
    %201 = arith.andi %196, %200 : vector<16x64xi1>
    %cst_99 = arith.constant 0.000000e+00 : f32
    %202 = vector.broadcast %cst_99 : f32 to vector<16x64xf32>
    %203 = arith.select %201, %192, %202 : vector<16x64xi1>, vector<16x64xf32>
    %204 = vector.extract_strided_slice %20 {offsets = [0, 0], sizes = [1, 64], strides = [1, 1]} : vector<7x64xf32> to vector<1x64xf32>
    %205 = vector.broadcast %204 : vector<1x64xf32> to vector<16x64xf32>
    %206 = arith.mulf %203, %205 : vector<16x64xf32>
    %207 = arith.addf %191, %206 : vector<16x64xf32>
    %c2_i32 = arith.constant 2 : i32
    %208 = tpu.dynamic_rotate %189 by %c2_i32 dim 0 : vector<16x64xf32>, i32 -> vector<16x64xf32>
    %c-2_i32 = arith.constant -2 : i32
    %209 = vector.broadcast %c-2_i32 : i32 to vector<16x64xi32>
    %210 = arith.addi %190, %209 : vector<16x64xi32>
    %c0_i32_100 = arith.constant 0 : i32
    %211 = vector.broadcast %c0_i32_100 : i32 to vector<16x64xi32>
    %212 = arith.cmpi sge, %210, %211 : vector<16x64xi32>
    %c-2_i32_101 = arith.constant -2 : i32
    %213 = vector.broadcast %c-2_i32_101 : i32 to vector<16x64xi32>
    %214 = arith.addi %190, %213 : vector<16x64xi32>
    %c16_i32_102 = arith.constant 16 : i32
    %215 = vector.broadcast %c16_i32_102 : i32 to vector<16x64xi32>
    %216 = arith.cmpi slt, %214, %215 : vector<16x64xi32>
    %217 = arith.andi %212, %216 : vector<16x64xi1>
    %cst_103 = arith.constant 0.000000e+00 : f32
    %218 = vector.broadcast %cst_103 : f32 to vector<16x64xf32>
    %219 = arith.select %217, %208, %218 : vector<16x64xi1>, vector<16x64xf32>
    %220 = vector.extract_strided_slice %20 {offsets = [1, 0], sizes = [1, 64], strides = [1, 1]} : vector<7x64xf32> to vector<1x64xf32>
    %221 = vector.broadcast %220 : vector<1x64xf32> to vector<16x64xf32>
    %222 = arith.mulf %219, %221 : vector<16x64xf32>
    %223 = arith.addf %207, %222 : vector<16x64xf32>
    %c1_i32 = arith.constant 1 : i32
    %224 = tpu.dynamic_rotate %189 by %c1_i32 dim 0 : vector<16x64xf32>, i32 -> vector<16x64xf32>
    %c-1_i32 = arith.constant -1 : i32
    %225 = vector.broadcast %c-1_i32 : i32 to vector<16x64xi32>
    %226 = arith.addi %190, %225 : vector<16x64xi32>
    %c0_i32_104 = arith.constant 0 : i32
    %227 = vector.broadcast %c0_i32_104 : i32 to vector<16x64xi32>
    %228 = arith.cmpi sge, %226, %227 : vector<16x64xi32>
    %c-1_i32_105 = arith.constant -1 : i32
    %229 = vector.broadcast %c-1_i32_105 : i32 to vector<16x64xi32>
    %230 = arith.addi %190, %229 : vector<16x64xi32>
    %c16_i32_106 = arith.constant 16 : i32
    %231 = vector.broadcast %c16_i32_106 : i32 to vector<16x64xi32>
    %232 = arith.cmpi slt, %230, %231 : vector<16x64xi32>
    %233 = arith.andi %228, %232 : vector<16x64xi1>
    %cst_107 = arith.constant 0.000000e+00 : f32
    %234 = vector.broadcast %cst_107 : f32 to vector<16x64xf32>
    %235 = arith.select %233, %224, %234 : vector<16x64xi1>, vector<16x64xf32>
    %236 = vector.extract_strided_slice %20 {offsets = [2, 0], sizes = [1, 64], strides = [1, 1]} : vector<7x64xf32> to vector<1x64xf32>
    %237 = vector.broadcast %236 : vector<1x64xf32> to vector<16x64xf32>
    %238 = arith.mulf %235, %237 : vector<16x64xf32>
    %239 = arith.addf %223, %238 : vector<16x64xf32>
    %240 = vector.extract_strided_slice %20 {offsets = [3, 0], sizes = [1, 64], strides = [1, 1]} : vector<7x64xf32> to vector<1x64xf32>
    %241 = vector.broadcast %240 : vector<1x64xf32> to vector<16x64xf32>
    %242 = arith.mulf %189, %241 : vector<16x64xf32>
    %243 = arith.addf %239, %242 : vector<16x64xf32>
    %c15_i32 = arith.constant 15 : i32
    %244 = tpu.dynamic_rotate %189 by %c15_i32 dim 0 : vector<16x64xf32>, i32 -> vector<16x64xf32>
    %c1_i32_108 = arith.constant 1 : i32
    %245 = vector.broadcast %c1_i32_108 : i32 to vector<16x64xi32>
    %246 = arith.addi %190, %245 : vector<16x64xi32>
    %c0_i32_109 = arith.constant 0 : i32
    %247 = vector.broadcast %c0_i32_109 : i32 to vector<16x64xi32>
    %248 = arith.cmpi sge, %246, %247 : vector<16x64xi32>
    %c1_i32_110 = arith.constant 1 : i32
    %249 = vector.broadcast %c1_i32_110 : i32 to vector<16x64xi32>
    %250 = arith.addi %190, %249 : vector<16x64xi32>
    %c16_i32_111 = arith.constant 16 : i32
    %251 = vector.broadcast %c16_i32_111 : i32 to vector<16x64xi32>
    %252 = arith.cmpi slt, %250, %251 : vector<16x64xi32>
    %253 = arith.andi %248, %252 : vector<16x64xi1>
    %cst_112 = arith.constant 0.000000e+00 : f32
    %254 = vector.broadcast %cst_112 : f32 to vector<16x64xf32>
    %255 = arith.select %253, %244, %254 : vector<16x64xi1>, vector<16x64xf32>
    %256 = vector.extract_strided_slice %20 {offsets = [4, 0], sizes = [1, 64], strides = [1, 1]} : vector<7x64xf32> to vector<1x64xf32>
    %257 = vector.broadcast %256 : vector<1x64xf32> to vector<16x64xf32>
    %258 = arith.mulf %255, %257 : vector<16x64xf32>
    %259 = arith.addf %243, %258 : vector<16x64xf32>
    %c14_i32 = arith.constant 14 : i32
    %260 = tpu.dynamic_rotate %189 by %c14_i32 dim 0 : vector<16x64xf32>, i32 -> vector<16x64xf32>
    %c2_i32_113 = arith.constant 2 : i32
    %261 = vector.broadcast %c2_i32_113 : i32 to vector<16x64xi32>
    %262 = arith.addi %190, %261 : vector<16x64xi32>
    %c0_i32_114 = arith.constant 0 : i32
    %263 = vector.broadcast %c0_i32_114 : i32 to vector<16x64xi32>
    %264 = arith.cmpi sge, %262, %263 : vector<16x64xi32>
    %c2_i32_115 = arith.constant 2 : i32
    %265 = vector.broadcast %c2_i32_115 : i32 to vector<16x64xi32>
    %266 = arith.addi %190, %265 : vector<16x64xi32>
    %c16_i32_116 = arith.constant 16 : i32
    %267 = vector.broadcast %c16_i32_116 : i32 to vector<16x64xi32>
    %268 = arith.cmpi slt, %266, %267 : vector<16x64xi32>
    %269 = arith.andi %264, %268 : vector<16x64xi1>
    %cst_117 = arith.constant 0.000000e+00 : f32
    %270 = vector.broadcast %cst_117 : f32 to vector<16x64xf32>
    %271 = arith.select %269, %260, %270 : vector<16x64xi1>, vector<16x64xf32>
    %272 = vector.extract_strided_slice %20 {offsets = [5, 0], sizes = [1, 64], strides = [1, 1]} : vector<7x64xf32> to vector<1x64xf32>
    %273 = vector.broadcast %272 : vector<1x64xf32> to vector<16x64xf32>
    %274 = arith.mulf %271, %273 : vector<16x64xf32>
    %275 = arith.addf %259, %274 : vector<16x64xf32>
    %c13_i32 = arith.constant 13 : i32
    %276 = tpu.dynamic_rotate %189 by %c13_i32 dim 0 : vector<16x64xf32>, i32 -> vector<16x64xf32>
    %c3_i32_118 = arith.constant 3 : i32
    %277 = vector.broadcast %c3_i32_118 : i32 to vector<16x64xi32>
    %278 = arith.addi %190, %277 : vector<16x64xi32>
    %c0_i32_119 = arith.constant 0 : i32
    %279 = vector.broadcast %c0_i32_119 : i32 to vector<16x64xi32>
    %280 = arith.cmpi sge, %278, %279 : vector<16x64xi32>
    %c3_i32_120 = arith.constant 3 : i32
    %281 = vector.broadcast %c3_i32_120 : i32 to vector<16x64xi32>
    %282 = arith.addi %190, %281 : vector<16x64xi32>
    %c16_i32_121 = arith.constant 16 : i32
    %283 = vector.broadcast %c16_i32_121 : i32 to vector<16x64xi32>
    %284 = arith.cmpi slt, %282, %283 : vector<16x64xi32>
    %285 = arith.andi %280, %284 : vector<16x64xi1>
    %cst_122 = arith.constant 0.000000e+00 : f32
    %286 = vector.broadcast %cst_122 : f32 to vector<16x64xf32>
    %287 = arith.select %285, %276, %286 : vector<16x64xi1>, vector<16x64xf32>
    %288 = vector.extract_strided_slice %20 {offsets = [6, 0], sizes = [1, 64], strides = [1, 1]} : vector<7x64xf32> to vector<1x64xf32>
    %289 = vector.broadcast %288 : vector<1x64xf32> to vector<16x64xf32>
    %290 = arith.mulf %287, %289 : vector<16x64xf32>
    %291 = arith.addf %275, %290 : vector<16x64xf32>
    %292 = vector.broadcast %21 : vector<1x64xf32> to vector<16x64xf32>
    %293 = arith.addf %291, %292 : vector<16x64xf32>
    %294 = vector.broadcast %22 : vector<1x64xf32> to vector<16x64xf32>
    %295 = arith.mulf %293, %294 : vector<16x64xf32>
    %296 = vector.broadcast %23 : vector<1x64xf32> to vector<16x64xf32>
    %297 = arith.addf %295, %296 : vector<16x64xf32>
    %298 = arith.negf %297 : vector<16x64xf32>
    %299 = math.exp %298 : vector<16x64xf32>
    %cst_123 = arith.constant 1.000000e+00 : f32
    %300 = vector.broadcast %cst_123 : f32 to vector<16x64xf32>
    %301 = arith.addf %300, %299 : vector<16x64xf32>
    %302 = arith.divf %300, %301 : vector<16x64xf32>
    %303 = arith.mulf %297, %302 : vector<16x64xf32>
    %304 = arith.truncf %303 : vector<16x64xf32> to vector<16x64xbf16>
    %cst_124 = arith.constant dense<0.000000e+00> : vector<16x64xf32>
    %305 = tpu.matmul %304, %24, %cst_124 {dimension_numbers = #tpu.dot_dimension_numbers<[1], [0], [0], [1], [0, 0, 1, 1], [], []>} : vector<16x64xbf16>, vector<64x64xbf16>, vector<16x64xf32> -> vector<16x64xf32>
    %306 = vector.broadcast %25 : vector<1x64xf32> to vector<16x64xf32>
    %307 = arith.addf %305, %306 : vector<16x64xf32>
    %308 = arith.addf %155, %307 : vector<16x64xf32>
    %cst_125 = arith.constant dense<0.000000e+00> : vector<16xf32>
    %309 = vector.multi_reduction <add>, %308, %cst_125 [1] : vector<16x64xf32> to vector<16xf32>
    %310 = vector.shape_cast %309 : vector<16xf32> to vector<16x1xf32>
    %cst_126 = arith.constant 6.400000e+01 : f32
    %311 = vector.broadcast %cst_126 : f32 to vector<16x1xf32>
    %312 = arith.divf %310, %311 : vector<16x1xf32>
    %313 = vector.broadcast %312 : vector<16x1xf32> to vector<16x64xf32>
    %314 = arith.subf %308, %313 : vector<16x64xf32>
    %315 = arith.mulf %314, %314 : vector<16x64xf32>
    %cst_127 = arith.constant dense<0.000000e+00> : vector<16xf32>
    %316 = vector.multi_reduction <add>, %315, %cst_127 [1] : vector<16x64xf32> to vector<16xf32>
    %317 = vector.shape_cast %316 : vector<16xf32> to vector<16x1xf32>
    %cst_128 = arith.constant 6.400000e+01 : f32
    %318 = vector.broadcast %cst_128 : f32 to vector<16x1xf32>
    %319 = arith.divf %317, %318 : vector<16x1xf32>
    %320 = vector.broadcast %312 : vector<16x1xf32> to vector<16x64xf32>
    %321 = arith.subf %308, %320 : vector<16x64xf32>
    %cst_129 = arith.constant 9.99999974E-6 : f32
    %322 = vector.broadcast %cst_129 : f32 to vector<16x1xf32>
    %323 = arith.addf %319, %322 : vector<16x1xf32>
    %324 = math.rsqrt %323 : vector<16x1xf32>
    %325 = vector.broadcast %324 : vector<16x1xf32> to vector<16x64xf32>
    %326 = arith.mulf %321, %325 : vector<16x64xf32>
    %327 = vector.broadcast %26 : vector<1x64xf32> to vector<16x64xf32>
    %328 = arith.mulf %326, %327 : vector<16x64xf32>
    %329 = vector.broadcast %27 : vector<1x64xf32> to vector<16x64xf32>
    %330 = arith.addf %328, %329 : vector<16x64xf32>
    %331 = arith.truncf %330 : vector<16x64xf32> to vector<16x64xbf16>
    %cst_130 = arith.constant dense<0.000000e+00> : vector<16x256xf32>
    %332 = tpu.matmul %331, %28, %cst_130 {dimension_numbers = #tpu.dot_dimension_numbers<[1], [0], [0], [1], [0, 0, 1, 1], [], []>} : vector<16x64xbf16>, vector<64x256xbf16>, vector<16x256xf32> -> vector<16x256xf32>
    %333 = vector.broadcast %29 : vector<1x256xf32> to vector<16x256xf32>
    %334 = arith.addf %332, %333 : vector<16x256xf32>
    %335 = arith.negf %334 : vector<16x256xf32>
    %336 = math.exp %335 : vector<16x256xf32>
    %cst_131 = arith.constant 1.000000e+00 : f32
    %337 = vector.broadcast %cst_131 : f32 to vector<16x256xf32>
    %338 = arith.addf %337, %336 : vector<16x256xf32>
    %339 = arith.divf %337, %338 : vector<16x256xf32>
    %340 = arith.mulf %334, %339 : vector<16x256xf32>
    %341 = arith.truncf %340 : vector<16x256xf32> to vector<16x256xbf16>
    %cst_132 = arith.constant dense<0.000000e+00> : vector<16x64xf32>
    %342 = tpu.matmul %341, %30, %cst_132 {dimension_numbers = #tpu.dot_dimension_numbers<[1], [0], [0], [1], [0, 0, 1, 1], [], []>} : vector<16x256xbf16>, vector<256x64xbf16>, vector<16x64xf32> -> vector<16x64xf32>
    %343 = vector.broadcast %31 : vector<1x64xf32> to vector<16x64xf32>
    %344 = arith.addf %342, %343 : vector<16x64xf32>
    %cst_133 = arith.constant 5.000000e-01 : f32
    %345 = vector.broadcast %cst_133 : f32 to vector<16x64xf32>
    %346 = arith.mulf %345, %344 : vector<16x64xf32>
    %347 = arith.addf %308, %346 : vector<16x64xf32>
    %c0_134 = arith.constant 0 : index
    %c0_135 = arith.constant 0 : index
    %c0_136 = arith.constant 0 : index
    %348 = vector.load %arg34[%c0_134, %c0_135, %c0_136] : memref<1x16x64xf32, #tpu.memory_space<vmem>>, vector<1x16x64xf32>
    %349 = vector.shape_cast %348 : vector<1x16x64xf32> to vector<16x64xf32>
    %350 = vector.shape_cast %347 : vector<16x64xf32> to vector<1x16x64xf32>
    tpu.vector_store %arg34[%c0_134, %c0_135, %c0_136], %350 {strides = array<i32>} : memref<1x16x64xf32, #tpu.memory_space<vmem>>, vector<1x16x64xf32>,
    return
  }
  func.func @transform_0(%arg0: i32) -> (i32, i32, i32) {
    %c0_i32 = arith.constant 0 : i32
    %c0_i32_0 = arith.constant 0 : i32
    %c0_i32_1 = arith.constant 0 : i32
    return %arg0, %c0_i32, %c0_i32_0 : i32, i32, i32
  }
  func.func @transform_1(%arg0: i32) -> (i32, i32) {
    %c0_i32 = arith.constant 0 : i32
    %c0_i32_0 = arith.constant 0 : i32
    %c0_i32_1 = arith.constant 0 : i32
    return %c0_i32, %c0_i32_0 : i32, i32
  }
  func.func @transform_2(%arg0: i32) -> (i32, i32) {
    %c0_i32 = arith.constant 0 : i32
    %c0_i32_0 = arith.constant 0 : i32
    %c0_i32_1 = arith.constant 0 : i32
    return %c0_i32, %c0_i32_0 : i32, i32
  }
  func.func @transform_3(%arg0: i32) -> (i32, i32) {
    %c0_i32 = arith.constant 0 : i32
    %c0_i32_0 = arith.constant 0 : i32
    %c0_i32_1 = arith.constant 0 : i32
    return %c0_i32, %c0_i32_0 : i32, i32
  }
  func.func @transform_4(%arg0: i32) -> (i32, i32) {
    %c0_i32 = arith.constant 0 : i32
    %c0_i32_0 = arith.constant 0 : i32
    %c0_i32_1 = arith.constant 0 : i32
    return %c0_i32, %c0_i32_0 : i32, i32
  }
  func.func @transform_5(%arg0: i32) -> (i32, i32) {
    %c0_i32 = arith.constant 0 : i32
    %c0_i32_0 = arith.constant 0 : i32
    %c0_i32_1 = arith.constant 0 : i32
    return %c0_i32, %c0_i32_0 : i32, i32
  }
  func.func @transform_6(%arg0: i32) -> (i32, i32) {
    %c0_i32 = arith.constant 0 : i32
    %c0_i32_0 = arith.constant 0 : i32
    %c0_i32_1 = arith.constant 0 : i32
    return %c0_i32, %c0_i32_0 : i32, i32
  }
  func.func @transform_7(%arg0: i32) -> (i32, i32) {
    %c0_i32 = arith.constant 0 : i32
    %c0_i32_0 = arith.constant 0 : i32
    %c0_i32_1 = arith.constant 0 : i32
    return %c0_i32, %c0_i32_0 : i32, i32
  }
  func.func @transform_8(%arg0: i32) -> (i32, i32) {
    %c0_i32 = arith.constant 0 : i32
    %c0_i32_0 = arith.constant 0 : i32
    %c0_i32_1 = arith.constant 0 : i32
    return %c0_i32, %c0_i32_0 : i32, i32
  }
  func.func @transform_9(%arg0: i32) -> (i32, i32) {
    %c0_i32 = arith.constant 0 : i32
    %c0_i32_0 = arith.constant 0 : i32
    %c0_i32_1 = arith.constant 0 : i32
    return %c0_i32, %c0_i32_0 : i32, i32
  }
  func.func @transform_10(%arg0: i32) -> (i32, i32) {
    %c0_i32 = arith.constant 0 : i32
    %c0_i32_0 = arith.constant 0 : i32
    %c0_i32_1 = arith.constant 0 : i32
    return %c0_i32, %c0_i32_0 : i32, i32
  }
  func.func @transform_11(%arg0: i32) -> (i32, i32) {
    %c0_i32 = arith.constant 0 : i32
    %c0_i32_0 = arith.constant 0 : i32
    %c0_i32_1 = arith.constant 0 : i32
    return %c0_i32, %c0_i32_0 : i32, i32
  }
  func.func @transform_12(%arg0: i32) -> (i32, i32) {
    %c0_i32 = arith.constant 0 : i32
    %c0_i32_0 = arith.constant 0 : i32
    %c0_i32_1 = arith.constant 0 : i32
    return %c0_i32, %c0_i32_0 : i32, i32
  }
  func.func @transform_13(%arg0: i32) -> (i32, i32) {
    %c0_i32 = arith.constant 0 : i32
    %c0_i32_0 = arith.constant 0 : i32
    %c0_i32_1 = arith.constant 0 : i32
    return %c0_i32, %c0_i32_0 : i32, i32
  }
  func.func @transform_14(%arg0: i32) -> (i32, i32) {
    %c0_i32 = arith.constant 0 : i32
    %c0_i32_0 = arith.constant 0 : i32
    %c0_i32_1 = arith.constant 0 : i32
    return %c0_i32, %c0_i32_0 : i32, i32
  }
  func.func @transform_15(%arg0: i32) -> (i32, i32, i32) {
    %c0_i32 = arith.constant 0 : i32
    %c0_i32_0 = arith.constant 0 : i32
    %c0_i32_1 = arith.constant 0 : i32
    %c0_i32_2 = arith.constant 0 : i32
    return %c0_i32, %c0_i32_0, %c0_i32_1 : i32, i32, i32
  }
  func.func @transform_16(%arg0: i32) -> (i32, i32) {
    %c0_i32 = arith.constant 0 : i32
    %c0_i32_0 = arith.constant 0 : i32
    %c0_i32_1 = arith.constant 0 : i32
    return %c0_i32, %c0_i32_0 : i32, i32
  }
  func.func @transform_17(%arg0: i32) -> (i32, i32) {
    %c0_i32 = arith.constant 0 : i32
    %c0_i32_0 = arith.constant 0 : i32
    %c0_i32_1 = arith.constant 0 : i32
    return %c0_i32, %c0_i32_0 : i32, i32
  }
  func.func @transform_18(%arg0: i32) -> (i32, i32) {
    %c0_i32 = arith.constant 0 : i32
    %c0_i32_0 = arith.constant 0 : i32
    %c0_i32_1 = arith.constant 0 : i32
    return %c0_i32, %c0_i32_0 : i32, i32
  }
  func.func @transform_19(%arg0: i32) -> (i32, i32) {
    %c0_i32 = arith.constant 0 : i32
    %c0_i32_0 = arith.constant 0 : i32
    %c0_i32_1 = arith.constant 0 : i32
    return %c0_i32, %c0_i32_0 : i32, i32
  }
  func.func @transform_20(%arg0: i32) -> (i32, i32) {
    %c0_i32 = arith.constant 0 : i32
    %c0_i32_0 = arith.constant 0 : i32
    %c0_i32_1 = arith.constant 0 : i32
    return %c0_i32, %c0_i32_0 : i32, i32
  }
  func.func @transform_21(%arg0: i32) -> (i32, i32) {
    %c0_i32 = arith.constant 0 : i32
    %c0_i32_0 = arith.constant 0 : i32
    %c0_i32_1 = arith.constant 0 : i32
    return %c0_i32, %c0_i32_0 : i32, i32
  }
  func.func @transform_22(%arg0: i32) -> (i32, i32) {
    %c0_i32 = arith.constant 0 : i32
    %c0_i32_0 = arith.constant 0 : i32
    %c0_i32_1 = arith.constant 0 : i32
    return %c0_i32, %c0_i32_0 : i32, i32
  }
  func.func @transform_23(%arg0: i32) -> (i32, i32) {
    %c0_i32 = arith.constant 0 : i32
    %c0_i32_0 = arith.constant 0 : i32
    %c0_i32_1 = arith.constant 0 : i32
    return %c0_i32, %c0_i32_0 : i32, i32
  }
  func.func @transform_24(%arg0: i32) -> (i32, i32) {
    %c0_i32 = arith.constant 0 : i32
    %c0_i32_0 = arith.constant 0 : i32
    %c0_i32_1 = arith.constant 0 : i32
    return %c0_i32, %c0_i32_0 : i32, i32
  }
  func.func @transform_25(%arg0: i32) -> (i32, i32) {
    %c0_i32 = arith.constant 0 : i32
    %c0_i32_0 = arith.constant 0 : i32
    %c0_i32_1 = arith.constant 0 : i32
    return %c0_i32, %c0_i32_0 : i32, i32
  }
  func.func @transform_26(%arg0: i32) -> (i32, i32) {
    %c0_i32 = arith.constant 0 : i32
    %c0_i32_0 = arith.constant 0 : i32
    %c0_i32_1 = arith.constant 0 : i32
    return %c0_i32, %c0_i32_0 : i32, i32
  }
  func.func @transform_27(%arg0: i32) -> (i32, i32) {
    %c0_i32 = arith.constant 0 : i32
    %c0_i32_0 = arith.constant 0 : i32
    %c0_i32_1 = arith.constant 0 : i32
    return %c0_i32, %c0_i32_0 : i32, i32
  }
  func.func @transform_28(%arg0: i32) -> (i32, i32) {
    %c0_i32 = arith.constant 0 : i32
    %c0_i32_0 = arith.constant 0 : i32
    %c0_i32_1 = arith.constant 0 : i32
    return %c0_i32, %c0_i32_0 : i32, i32
  }
  func.func @transform_29(%arg0: i32) -> (i32, i32) {
    %c0_i32 = arith.constant 0 : i32
    %c0_i32_0 = arith.constant 0 : i32
    %c0_i32_1 = arith.constant 0 : i32
    return %c0_i32, %c0_i32_0 : i32, i32
  }
  func.func @transform_30(%arg0: i32) -> (i32, i32) {
    %c0_i32 = arith.constant 0 : i32
    %c0_i32_0 = arith.constant 0 : i32
    %c0_i32_1 = arith.constant 0 : i32
    return %c0_i32, %c0_i32_0 : i32, i32
  }
  func.func @transform_31(%arg0: i32) -> (i32, i32) {
    %c0_i32 = arith.constant 0 : i32
    %c0_i32_0 = arith.constant 0 : i32
    %c0_i32_1 = arith.constant 0 : i32
    return %c0_i32, %c0_i32_0 : i32, i32
  }
  func.func @transform_32(%arg0: i32) -> (i32, i32) {
    %c0_i32 = arith.constant 0 : i32
    %c0_i32_0 = arith.constant 0 : i32
    %c0_i32_1 = arith.constant 0 : i32
    return %c0_i32, %c0_i32_0 : i32, i32
  }
  func.func @transform_33(%arg0: i32) -> (i32, i32, i32) {
    %c0_i32 = arith.constant 0 : i32
    %c0_i32_0 = arith.constant 0 : i32
    %c0_i32_1 = arith.constant 0 : i32
    return %arg0, %c0_i32, %c0_i32_0 : i32, i32, i32
  }
}

</mosaic_0001>

<llo_original>
// kernel: tpu_custom_call.1
$region0: #{tpu_custom_call.1}
  #allocation0 [shape = 'u32[]', space=smem, size = 0x4, offset = 0x4, fixed_abs, tag = 'smem constant byte address 0x4 - core index']
  #allocation1 [shape = 'u32[72,128]{1,0:T(1,128)}', space=vmem, size = 0x9000, scoped, tag = 'internal scratch']
  %s0 = inlined_call_operand.smem [shape: u32[34], index: -1, kind: input, shape index: {}]
  %s1 = sld [smem:[%s0]]
  %s2 = scalar_lea.smem %s0, 1
  %s3 = sld [smem:[%s2]]
  %s4 = scalar_lea.smem %s0, 2
  %s5 = sld [smem:[%s4]]
  %s6 = scalar_lea.smem %s0, 3
  %s7 = sld [smem:[%s6]]
  %s8 = scalar_lea.smem %s0, 4
  %s9 = sld [smem:[%s8]]
  %s10 = scalar_lea.smem %s0, 5
  %s11 = sld [smem:[%s10]]
  %s12 = scalar_lea.smem %s0, 6
  %s13 = sld [smem:[%s12]]
  %s14 = scalar_lea.smem %s0, 7
  %s15 = sld [smem:[%s14]]
  %s16 = scalar_lea.smem %s0, 8
  %s17 = sld [smem:[%s16]]
  %s18 = scalar_lea.smem %s0, 9
  %s19 = sld [smem:[%s18]]
  %s20 = scalar_lea.smem %s0, 10
  %s21 = sld [smem:[%s20]]
  %s22 = scalar_lea.smem %s0, 11
  %s23 = sld [smem:[%s22]]
  %s24 = scalar_lea.smem %s0, 12
  %s25 = sld [smem:[%s24]]
  %s26 = scalar_lea.smem %s0, 13
  %s27 = sld [smem:[%s26]]
  %s28 = scalar_lea.smem %s0, 14
  %s29 = sld [smem:[%s28]]
  %s30 = scalar_lea.smem %s0, 15
  %s31 = sld [smem:[%s30]]
  %s32 = scalar_lea.smem %s0, 16
  %s33 = sld [smem:[%s32]]
  %s34 = scalar_lea.smem %s0, 17
  %s35 = sld [smem:[%s34]]
  %s36 = scalar_lea.smem %s0, 18
  %s37 = sld [smem:[%s36]]
  %s38 = scalar_lea.smem %s0, 19
  %s39 = sld [smem:[%s38]]
  %s40 = scalar_lea.smem %s0, 20
  %s41 = sld [smem:[%s40]]
  %s42 = scalar_lea.smem %s0, 21
  %s43 = sld [smem:[%s42]]
  %s44 = scalar_lea.smem %s0, 22
  %s45 = sld [smem:[%s44]]
  %s46 = scalar_lea.smem %s0, 23
  %s47 = sld [smem:[%s46]]
  %s48 = scalar_lea.smem %s0, 24
  %s49 = sld [smem:[%s48]]
  %s50 = scalar_lea.smem %s0, 25
  %s51 = sld [smem:[%s50]]
  %s52 = scalar_lea.smem %s0, 26
  %s53 = sld [smem:[%s52]]
  %s54 = scalar_lea.smem %s0, 27
  %s55 = sld [smem:[%s54]]
  %s56 = scalar_lea.smem %s0, 28
  %s57 = sld [smem:[%s56]]
  %s58 = scalar_lea.smem %s0, 29
  %s59 = sld [smem:[%s58]]
  %s60 = scalar_lea.smem %s0, 30
  %s61 = sld [smem:[%s60]]
  %s62 = scalar_lea.smem %s0, 31
  %s63 = sld [smem:[%s62]]
  %s64 = scalar_lea.smem %s0, 32
  %s65 = sld [smem:[%s64]]
  %s66 = scalar_lea.smem %s0, 33
  %s67 = sld [smem:[%s66]]
  %s68 = sld [smem:[#allocation0]]
  $region201: #{tpu_custom_call.1} parent=0
    _
  %s70 = ssub.s32 1, %s68
  %s71 = scalar_select 0, %s70, %s68
  $region1: #{tpu_custom_call.1} parent=0
    #allocation2 [shape = 'u8[512]{0}', space=vmem, size = 0x400, scoped, tag = 'input window, operand 1, single buffered']
    #allocation3 [shape = 's32[2]{0}', space=sflag, size = 0x8, scoped, tag = 'scoped memory for tpu_custom_call.1']
    #allocation4 [shape = 's32[2]{0}', space=sflag, size = 0x8, scoped, tag = 'scoped memory for tpu_custom_call.1']
    #allocation5 [shape = 'u8[512]{0}', space=vmem, size = 0x400, scoped, tag = 'input window, operand 2, single buffered']
    #allocation6 [shape = 's32[1]{0}', space=sflag, size = 0x4, scoped, tag = 'scoped memory for tpu_custom_call.1']
    #allocation7 [shape = 'u8[1024]{0}', space=vmem, size = 0x400, scoped, tag = 'input window, operand 4, single buffered']
    #allocation8 [shape = 'u8[512]{0}', space=vmem, size = 0x400, scoped, tag = 'input window, operand 7, single buffered']
    #allocation9 [shape = 's32[1]{0}', space=sflag, size = 0x4, scoped, tag = 'scoped memory for tpu_custom_call.1']
    #allocation10 [shape = 'u8[512]{0}', space=vmem, size = 0x400, scoped, tag = 'input window, operand 8, single buffered']
    #allocation11 [shape = 'u8[512]{0}', space=vmem, size = 0x400, scoped, tag = 'input window, operand 10, single buffered']
    #allocation12 [shape = 's32[1]{0}', space=sflag, size = 0x4, scoped, tag = 'scoped memory for tpu_custom_call.1']
    #allocation13 [shape = 'u8[512]{0}', space=vmem, size = 0x400, scoped, tag = 'input window, operand 12, single buffered']
    #allocation14 [shape = 'u8[512]{0}', space=vmem, size = 0x400, scoped, tag = 'input window, operand 14, single buffered']
    #allocation15 [shape = 's32[1]{0}', space=sflag, size = 0x4, scoped, tag = 'scoped memory for tpu_custom_call.1']
    #allocation16 [shape = 'u8[16384]{0}', space=vmem, size = 0x4000, scoped, tag = 'input window, operand 25, single buffered']
    #allocation17 [shape = 'u8[16384]{0}', space=vmem, size = 0x4000, scoped, tag = 'output window, operand 0']
    %72 = vsyncpa [#allocation3], 0
    %73 = vsyncpa [#allocation6], 0
    %74 = vsyncpa [#allocation9], 0
    %75 = vsyncpa [#allocation12], 0
    %76 = vsyncpa [#allocation15], 0
    %77 = vsyncpa [#allocation4], 0
    %s78 = scalar_lea.sflag [#allocation4], 1
    %79 = vsyncpa %s78, 0
    loop: start=0, step=1, limit=4
    $region2: #{tpu_custom_call.1} parent=1 // loop_pre_header
      _
    $region3: #{tpu_custom_call.1} parent=1 // loop_header
      %s81 = sphi 0, %s85
      %p82 = scmp.ge.s32.totalorder %s81, 4
      %s91 = sphi 0, %s93
      %s94 = sphi 0, %s91
      %s95 = sphi 0, %s94
      %s111 = sphi 0, %s95
      %s115 = sphi 0, %s115
      %s117 = sphi 0, %s115
      %s118 = sphi 0, %s117
      %s132 = sphi 0, %s118
      %s136 = sphi 0, %s136
      %s138 = sphi 0, %s136
      %s139 = sphi 0, %s138
      %s153 = sphi 0, %s139
      %s157 = sphi 0, %s157
      %s159 = sphi 0, %s157
      %s160 = sphi 0, %s159
      %s174 = sphi 0, %s160
      %s178 = sphi 0, %s178
      %s180 = sphi 0, %s178
      %s181 = sphi 0, %s180
      %s195 = sphi 0, %s181
      %s199 = sphi 0, %s199
      %s201 = sphi 0, %s199
      %s202 = sphi 0, %s201
      %s216 = sphi 0, %s202
      %s220 = sphi 0, %s220
      %s222 = sphi 0, %s220
      %s223 = sphi 0, %s222
      %s237 = sphi 0, %s223
      %s241 = sphi 0, %s241
      %s243 = sphi 0, %s241
      %s244 = sphi 0, %s243
      %s258 = sphi 0, %s244
      %s262 = sphi 0, %s262
      %s264 = sphi 0, %s262
      %s265 = sphi 0, %s264
      %s279 = sphi 0, %s265
      %s283 = sphi 0, %s283
      %s285 = sphi 0, %s283
      %s286 = sphi 0, %s285
      %s300 = sphi 0, %s286
      %s304 = sphi 0, %s304
      %s306 = sphi 0, %s304
      %s307 = sphi 0, %s306
      %s321 = sphi 0, %s307
      %s325 = sphi 0, %s325
      %s327 = sphi 0, %s325
      %s328 = sphi 0, %s327
      %s342 = sphi 0, %s328
      %s346 = sphi 0, %s346
      %s348 = sphi 0, %s346
      %s349 = sphi 0, %s348
      %s363 = sphi 0, %s349
      %s367 = sphi 0, %s367
      %s369 = sphi 0, %s367
      %s370 = sphi 0, %s369
      %s384 = sphi 0, %s370
      %s388 = sphi 0, %s388
      %s390 = sphi 0, %s388
      %s391 = sphi 0, %s390
      %s405 = sphi 0, %s391
      %s409 = sphi 0, %s409
      %s411 = sphi 0, %s409
      %s412 = sphi 0, %s411
      %s426 = sphi 0, %s412
      %s430 = sphi 0, %s430
      %s432 = sphi 0, %s430
      %s433 = sphi 0, %s432
      %s447 = sphi 0, %s433
      %s451 = sphi 0, %s451
      %s453 = sphi 0, %s451
      %s454 = sphi 0, %s453
      %s468 = sphi 0, %s454
      %s472 = sphi 0, %s472
      %s474 = sphi 0, %s472
      %s475 = sphi 0, %s474
      %s489 = sphi 0, %s475
      %s493 = sphi 0, %s493
      %s495 = sphi 0, %s493
      %s496 = sphi 0, %s495
      %s510 = sphi 0, %s496
      %s514 = sphi 0, %s514
      %s516 = sphi 0, %s514
      %s517 = sphi 0, %s516
      %s531 = sphi 0, %s517
      %s535 = sphi 0, %s535
      %s537 = sphi 0, %s535
      %s538 = sphi 0, %s537
      %s552 = sphi 0, %s538
      %s556 = sphi 0, %s556
      %s558 = sphi 0, %s556
      %s559 = sphi 0, %s558
      %s573 = sphi 0, %s559
      %s577 = sphi 0, %s577
      %s579 = sphi 0, %s577
      %s580 = sphi 0, %s579
      %s594 = sphi 0, %s580
      %s598 = sphi 0, %s598
      %s600 = sphi 0, %s598
      %s601 = sphi 0, %s600
      %s615 = sphi 0, %s601
      %s619 = sphi 0, %s619
      %s621 = sphi 0, %s619
      %s622 = sphi 0, %s621
      %s636 = sphi 0, %s622
      %s640 = sphi 0, %s640
      %s642 = sphi 0, %s640
      %s643 = sphi 0, %s642
      %s657 = sphi 0, %s643
      %s661 = sphi 0, %s661
      %s663 = sphi 0, %s661
      %s664 = sphi 0, %s663
      %s678 = sphi 0, %s664
      %s682 = sphi 0, %s682
      %s684 = sphi 0, %s682
      %s685 = sphi 0, %s684
      %s699 = sphi 0, %s685
      %s703 = sphi 0, %s703
      %s705 = sphi 0, %s703
      %s706 = sphi 0, %s705
      %s720 = sphi 0, %s706
      %s724 = sphi 0, %s724
      %s726 = sphi 0, %s724
      %s727 = sphi 0, %s726
      %s741 = sphi 0, %s727
      %s745 = sphi 0, %s745
      %s747 = sphi 0, %s745
      %s748 = sphi 0, %s747
      %s762 = sphi 0, %s748
      %s766 = sphi 0, %s766
      %s768 = sphi 0, %s766
      %s769 = sphi 0, %s768
      %s783 = sphi 0, %s769
      %s789 = sphi 0, %s791
      %s792 = sphi 0, %s789
      %s793 = sphi 0, %s792
      %s809 = sphi 0, %s793
    $region4: #{tpu_custom_call.1} parent=1 // loop_header_branch
      %84 = sbr.rel (%p82) target = $region8
    $region5: #{tpu_custom_call.1} parent=1 // loop_body
      %s86 = ssub.s32 %s81, 1
      %s87 = ssub.s32 %s81, 2
      %s88 = sadd.s32 %s81, 1
      %s89 = ssub.s32 %s81, %s88
      %p90 = scmp.eq.s32.totalorder %s89, 0
      %s92 = sadd.s32 %s91, 1
      %s93 = scalar_select %p90, %s91, %s92
      %p96 = pneg %p90
      %p97 = scmp.eq.s32.totalorder %s81, 1
      %p98 = por %p96, %p97
      %p99 = scmp.ne.s32.totalorder %s91, %s94
      %p100 = scmp.eq.s32.totalorder %s81, 0
      %p101 = por %p99, %p100
      %p102 = scmp.ne.s32.totalorder %s91, %s94
      %p103 = scmp.eq.s32.totalorder %s86, 1
      %p104 = por %p102, %p103
      %p105 = scmp.ne.s32.totalorder %s94, %s95
      %p106 = scmp.eq.s32.totalorder %s86, 0
      %p107 = por %p105, %p106
      %p108 = scmp.ne.s32.totalorder %s94, %s95
      %p109 = scmp.eq.s32.totalorder %s87, 1
      %p110 = por %p108, %p109
      %p112 = scmp.ne.s32.totalorder %s95, %s111
      %p113 = scmp.eq.s32.totalorder %s87, 0
      %p114 = por %p112, %p113
      %s116 = sadd.s32 %s115, 1
      %p119 = scmp.eq.s32.totalorder %s81, 1
      %p120 = scmp.ne.s32.totalorder %s115, %s117
      %p121 = scmp.eq.s32.totalorder %s81, 0
      %p122 = por %p120, %p121
      %p123 = scmp.ne.s32.totalorder %s115, %s117
      %p124 = scmp.eq.s32.totalorder %s86, 1
      %p125 = por %p123, %p124
      %p126 = scmp.ne.s32.totalorder %s117, %s118
      %p127 = scmp.eq.s32.totalorder %s86, 0
      %p128 = por %p126, %p127
      %p129 = scmp.ne.s32.totalorder %s117, %s118
      %p130 = scmp.eq.s32.totalorder %s87, 1
      %p131 = por %p129, %p130
      %p133 = scmp.ne.s32.totalorder %s118, %s132
      %p134 = scmp.eq.s32.totalorder %s87, 0
      %p135 = por %p133, %p134
      %s137 = sadd.s32 %s136, 1
      %p140 = scmp.eq.s32.totalorder %s81, 1
      %p141 = scmp.ne.s32.totalorder %s136, %s138
      %p142 = scmp.eq.s32.totalorder %s81, 0
      %p143 = por %p141, %p142
      %p144 = scmp.ne.s32.totalorder %s136, %s138
      %p145 = scmp.eq.s32.totalorder %s86, 1
      %p146 = por %p144, %p145
      %p147 = scmp.ne.s32.totalorder %s138, %s139
      %p148 = scmp.eq.s32.totalorder %s86, 0
      %p149 = por %p147, %p148
      %p150 = scmp.ne.s32.totalorder %s138, %s139
      %p151 = scmp.eq.s32.totalorder %s87, 1
      %p152 = por %p150, %p151
      %p154 = scmp.ne.s32.totalorder %s139, %s153
      %p155 = scmp.eq.s32.totalorder %s87, 0
      %p156 = por %p154, %p155
      %s158 = sadd.s32 %s157, 1
      %p161 = scmp.eq.s32.totalorder %s81, 1
      %p162 = scmp.ne.s32.totalorder %s157, %s159
      %p163 = scmp.eq.s32.totalorder %s81, 0
      %p164 = por %p162, %p163
      %p165 = scmp.ne.s32.totalorder %s157, %s159
      %p166 = scmp.eq.s32.totalorder %s86, 1
      %p167 = por %p165, %p166
      %p168 = scmp.ne.s32.totalorder %s159, %s160
      %p169 = scmp.eq.s32.totalorder %s86, 0
      %p170 = por %p168, %p169
      %p171 = scmp.ne.s32.totalorder %s159, %s160
      %p172 = scmp.eq.s32.totalorder %s87, 1
      %p173 = por %p171, %p172
      %p175 = scmp.ne.s32.totalorder %s160, %s174
      %p176 = scmp.eq.s32.totalorder %s87, 0
      %p177 = por %p175, %p176
      %s179 = sadd.s32 %s178, 1
      %p182 = scmp.eq.s32.totalorder %s81, 1
      %p183 = scmp.ne.s32.totalorder %s178, %s180
      %p184 = scmp.eq.s32.totalorder %s81, 0
      %p185 = por %p183, %p184
      %p186 = scmp.ne.s32.totalorder %s178, %s180
      %p187 = scmp.eq.s32.totalorder %s86, 1
      %p188 = por %p186, %p187
      %p189 = scmp.ne.s32.totalorder %s180, %s181
      %p190 = scmp.eq.s32.totalorder %s86, 0
      %p191 = por %p189, %p190
      %p192 = scmp.ne.s32.totalorder %s180, %s181
      %p193 = scmp.eq.s32.totalorder %s87, 1
      %p194 = por %p192, %p193
      %p196 = scmp.ne.s32.totalorder %s181, %s195
      %p197 = scmp.eq.s32.totalorder %s87, 0
      %p198 = por %p196, %p197
      %s200 = sadd.s32 %s199, 1
      %p203 = scmp.eq.s32.totalorder %s81, 1
      %p204 = scmp.ne.s32.totalorder %s199, %s201
      %p205 = scmp.eq.s32.totalorder %s81, 0
      %p206 = por %p204, %p205
      %p207 = scmp.ne.s32.totalorder %s199, %s201
      %p208 = scmp.eq.s32.totalorder %s86, 1
      %p209 = por %p207, %p208
      %p210 = scmp.ne.s32.totalorder %s201, %s202
      %p211 = scmp.eq.s32.totalorder %s86, 0
      %p212 = por %p210, %p211
      %p213 = scmp.ne.s32.totalorder %s201, %s202
      %p214 = scmp.eq.s32.totalorder %s87, 1
      %p215 = por %p213, %p214
      %p217 = scmp.ne.s32.totalorder %s202, %s216
      %p218 = scmp.eq.s32.totalorder %s87, 0
      %p219 = por %p217, %p218
      %s221 = sadd.s32 %s220, 1
      %p224 = scmp.eq.s32.totalorder %s81, 1
      %p225 = scmp.ne.s32.totalorder %s220, %s222
      %p226 = scmp.eq.s32.totalorder %s81, 0
      %p227 = por %p225, %p226
      %p228 = scmp.ne.s32.totalorder %s220, %s222
      %p229 = scmp.eq.s32.totalorder %s86, 1
      %p230 = por %p228, %p229
      %p231 = scmp.ne.s32.totalorder %s222, %s223
      %p232 = scmp.eq.s32.totalorder %s86, 0
      %p233 = por %p231, %p232
      %p234 = scmp.ne.s32.totalorder %s222, %s223
      %p235 = scmp.eq.s32.totalorder %s87, 1
      %p236 = por %p234, %p235
      %p238 = scmp.ne.s32.totalorder %s223, %s237
      %p239 = scmp.eq.s32.totalorder %s87, 0
      %p240 = por %p238, %p239
      %s242 = sadd.s32 %s241, 1
      %p245 = scmp.eq.s32.totalorder %s81, 1
      %p246 = scmp.ne.s32.totalorder %s241, %s243
      %p247 = scmp.eq.s32.totalorder %s81, 0
      %p248 = por %p246, %p247
      %p249 = scmp.ne.s32.totalorder %s241, %s243
      %p250 = scmp.eq.s32.totalorder %s86, 1
      %p251 = por %p249, %p250
      %p252 = scmp.ne.s32.totalorder %s243, %s244
      %p253 = scmp.eq.s32.totalorder %s86, 0
      %p254 = por %p252, %p253
      %p255 = scmp.ne.s32.totalorder %s243, %s244
      %p256 = scmp.eq.s32.totalorder %s87, 1
      %p257 = por %p255, %p256
      %p259 = scmp.ne.s32.totalorder %s244, %s258
      %p260 = scmp.eq.s32.totalorder %s87, 0
      %p261 = por %p259, %p260
      %s263 = sadd.s32 %s262, 1
      %p266 = scmp.eq.s32.totalorder %s81, 1
      %p267 = scmp.ne.s32.totalorder %s262, %s264
      %p268 = scmp.eq.s32.totalorder %s81, 0
      %p269 = por %p267, %p268
      %p270 = scmp.ne.s32.totalorder %s262, %s264
      %p271 = scmp.eq.s32.totalorder %s86, 1
      %p272 = por %p270, %p271
      %p273 = scmp.ne.s32.totalorder %s264, %s265
      %p274 = scmp.eq.s32.totalorder %s86, 0
      %p275 = por %p273, %p274
      %p276 = scmp.ne.s32.totalorder %s264, %s265
      %p277 = scmp.eq.s32.totalorder %s87, 1
      %p278 = por %p276, %p277
      %p280 = scmp.ne.s32.totalorder %s265, %s279
      %p281 = scmp.eq.s32.totalorder %s87, 0
      %p282 = por %p280, %p281
      %s284 = sadd.s32 %s283, 1
      %p287 = scmp.eq.s32.totalorder %s81, 1
      %p288 = scmp.ne.s32.totalorder %s283, %s285
      %p289 = scmp.eq.s32.totalorder %s81, 0
      %p290 = por %p288, %p289
      %p291 = scmp.ne.s32.totalorder %s283, %s285
      %p292 = scmp.eq.s32.totalorder %s86, 1
      %p293 = por %p291, %p292
      %p294 = scmp.ne.s32.totalorder %s285, %s286
      %p295 = scmp.eq.s32.totalorder %s86, 0
      %p296 = por %p294, %p295
      %p297 = scmp.ne.s32.totalorder %s285, %s286
      %p298 = scmp.eq.s32.totalorder %s87, 1
      %p299 = por %p297, %p298
      %p301 = scmp.ne.s32.totalorder %s286, %s300
      %p302 = scmp.eq.s32.totalorder %s87, 0
      %p303 = por %p301, %p302
      %s305 = sadd.s32 %s304, 1
      %p308 = scmp.eq.s32.totalorder %s81, 1
      %p309 = scmp.ne.s32.totalorder %s304, %s306
      %p310 = scmp.eq.s32.totalorder %s81, 0
      %p311 = por %p309, %p310
      %p312 = scmp.ne.s32.totalorder %s304, %s306
      %p313 = scmp.eq.s32.totalorder %s86, 1
      %p314 = por %p312, %p313
      %p315 = scmp.ne.s32.totalorder %s306, %s307
      %p316 = scmp.eq.s32.totalorder %s86, 0
      %p317 = por %p315, %p316
      %p318 = scmp.ne.s32.totalorder %s306, %s307
      %p319 = scmp.eq.s32.totalorder %s87, 1
      %p320 = por %p318, %p319
      %p322 = scmp.ne.s32.totalorder %s307, %s321
      %p323 = scmp.eq.s32.totalorder %s87, 0
      %p324 = por %p322, %p323
      %s326 = sadd.s32 %s325, 1
      %p329 = scmp.eq.s32.totalorder %s81, 1
      %p330 = scmp.ne.s32.totalorder %s325, %s327
      %p331 = scmp.eq.s32.totalorder %s81, 0
      %p332 = por %p330, %p331
      %p333 = scmp.ne.s32.totalorder %s325, %s327
      %p334 = scmp.eq.s32.totalorder %s86, 1
      %p335 = por %p333, %p334
      %p336 = scmp.ne.s32.totalorder %s327, %s328
      %p337 = scmp.eq.s32.totalorder %s86, 0
      %p338 = por %p336, %p337
      %p339 = scmp.ne.s32.totalorder %s327, %s328
      %p340 = scmp.eq.s32.totalorder %s87, 1
      %p341 = por %p339, %p340
      %p343 = scmp.ne.s32.totalorder %s328, %s342
      %p344 = scmp.eq.s32.totalorder %s87, 0
      %p345 = por %p343, %p344
      %s347 = sadd.s32 %s346, 1
      %p350 = scmp.eq.s32.totalorder %s81, 1
      %p351 = scmp.ne.s32.totalorder %s346, %s348
      %p352 = scmp.eq.s32.totalorder %s81, 0
      %p353 = por %p351, %p352
      %p354 = scmp.ne.s32.totalorder %s346, %s348
      %p355 = scmp.eq.s32.totalorder %s86, 1
      %p356 = por %p354, %p355
      %p357 = scmp.ne.s32.totalorder %s348, %s349
      %p358 = scmp.eq.s32.totalorder %s86, 0
      %p359 = por %p357, %p358
      %p360 = scmp.ne.s32.totalorder %s348, %s349
      %p361 = scmp.eq.s32.totalorder %s87, 1
      %p362 = por %p360, %p361
      %p364 = scmp.ne.s32.totalorder %s349, %s363
      %p365 = scmp.eq.s32.totalorder %s87, 0
      %p366 = por %p364, %p365
      %s368 = sadd.s32 %s367, 1
      %p371 = scmp.eq.s32.totalorder %s81, 1
      %p372 = scmp.ne.s32.totalorder %s367, %s369
      %p373 = scmp.eq.s32.totalorder %s81, 0
      %p374 = por %p372, %p373
      %p375 = scmp.ne.s32.totalorder %s367, %s369
      %p376 = scmp.eq.s32.totalorder %s86, 1
      %p377 = por %p375, %p376
      %p378 = scmp.ne.s32.totalorder %s369, %s370
      %p379 = scmp.eq.s32.totalorder %s86, 0
      %p380 = por %p378, %p379
      %p381 = scmp.ne.s32.totalorder %s369, %s370
      %p382 = scmp.eq.s32.totalorder %s87, 1
      %p383 = por %p381, %p382
      %p385 = scmp.ne.s32.totalorder %s370, %s384
      %p386 = scmp.eq.s32.totalorder %s87, 0
      %p387 = por %p385, %p386
      %s389 = sadd.s32 %s388, 1
      %p392 = scmp.eq.s32.totalorder %s81, 1
      %p393 = scmp.ne.s32.totalorder %s388, %s390
      %p394 = scmp.eq.s32.totalorder %s81, 0
      %p395 = por %p393, %p394
      %p396 = scmp.ne.s32.totalorder %s388, %s390
      %p397 = scmp.eq.s32.totalorder %s86, 1
      %p398 = por %p396, %p397
      %p399 = scmp.ne.s32.totalorder %s390, %s391
      %p400 = scmp.eq.s32.totalorder %s86, 0
      %p401 = por %p399, %p400
      %p402 = scmp.ne.s32.totalorder %s390, %s391
      %p403 = scmp.eq.s32.totalorder %s87, 1
      %p404 = por %p402, %p403
      %p406 = scmp.ne.s32.totalorder %s391, %s405
      %p407 = scmp.eq.s32.totalorder %s87, 0
      %p408 = por %p406, %p407
      %s410 = sadd.s32 %s409, 1
      %p413 = scmp.eq.s32.totalorder %s81, 1
      %p414 = scmp.ne.s32.totalorder %s409, %s411
      %p415 = scmp.eq.s32.totalorder %s81, 0
      %p416 = por %p414, %p415
      %p417 = scmp.ne.s32.totalorder %s409, %s411
      %p418 = scmp.eq.s32.totalorder %s86, 1
      %p419 = por %p417, %p418
      %p420 = scmp.ne.s32.totalorder %s411, %s412
      %p421 = scmp.eq.s32.totalorder %s86, 0
      %p422 = por %p420, %p421
      %p423 = scmp.ne.s32.totalorder %s411, %s412
      %p424 = scmp.eq.s32.totalorder %s87, 1
      %p425 = por %p423, %p424
      %p427 = scmp.ne.s32.totalorder %s412, %s426
      %p428 = scmp.eq.s32.totalorder %s87, 0
      %p429 = por %p427, %p428
      %s431 = sadd.s32 %s430, 1
      %p434 = scmp.eq.s32.totalorder %s81, 1
      %p435 = scmp.ne.s32.totalorder %s430, %s432
      %p436 = scmp.eq.s32.totalorder %s81, 0
      %p437 = por %p435, %p436
      %p438 = scmp.ne.s32.totalorder %s430, %s432
      %p439 = scmp.eq.s32.totalorder %s86, 1
      %p440 = por %p438, %p439
      %p441 = scmp.ne.s32.totalorder %s432, %s433
      %p442 = scmp.eq.s32.totalorder %s86, 0
      %p443 = por %p441, %p442
      %p444 = scmp.ne.s32.totalorder %s432, %s433
      %p445 = scmp.eq.s32.totalorder %s87, 1
      %p446 = por %p444, %p445
      %p448 = scmp.ne.s32.totalorder %s433, %s447
      %p449 = scmp.eq.s32.totalorder %s87, 0
      %p450 = por %p448, %p449
      %s452 = sadd.s32 %s451, 1
      %p455 = scmp.eq.s32.totalorder %s81, 1
      %p456 = scmp.ne.s32.totalorder %s451, %s453
      %p457 = scmp.eq.s32.totalorder %s81, 0
      %p458 = por %p456, %p457
      %p459 = scmp.ne.s32.totalorder %s451, %s453
      %p460 = scmp.eq.s32.totalorder %s86, 1
      %p461 = por %p459, %p460
      %p462 = scmp.ne.s32.totalorder %s453, %s454
      %p463 = scmp.eq.s32.totalorder %s86, 0
      %p464 = por %p462, %p463
      %p465 = scmp.ne.s32.totalorder %s453, %s454
      %p466 = scmp.eq.s32.totalorder %s87, 1
      %p467 = por %p465, %p466
      %p469 = scmp.ne.s32.totalorder %s454, %s468
      %p470 = scmp.eq.s32.totalorder %s87, 0
      %p471 = por %p469, %p470
      %s473 = sadd.s32 %s472, 1
      %p476 = scmp.eq.s32.totalorder %s81, 1
      %p477 = scmp.ne.s32.totalorder %s472, %s474
      %p478 = scmp.eq.s32.totalorder %s81, 0
      %p479 = por %p477, %p478
      %p480 = scmp.ne.s32.totalorder %s472, %s474
      %p481 = scmp.eq.s32.totalorder %s86, 1
      %p482 = por %p480, %p481
      %p483 = scmp.ne.s32.totalorder %s474, %s475
      %p484 = scmp.eq.s32.totalorder %s86, 0
      %p485 = por %p483, %p484
      %p486 = scmp.ne.s32.totalorder %s474, %s475
      %p487 = scmp.eq.s32.totalorder %s87, 1
      %p488 = por %p486, %p487
      %p490 = scmp.ne.s32.totalorder %s475, %s489
      %p491 = scmp.eq.s32.totalorder %s87, 0
      %p492 = por %p490, %p491
      %s494 = sadd.s32 %s493, 1
      %p497 = scmp.eq.s32.totalorder %s81, 1
      %p498 = scmp.ne.s32.totalorder %s493, %s495
      %p499 = scmp.eq.s32.totalorder %s81, 0
      %p500 = por %p498, %p499
      %p501 = scmp.ne.s32.totalorder %s493, %s495
      %p502 = scmp.eq.s32.totalorder %s86, 1
      %p503 = por %p501, %p502
      %p504 = scmp.ne.s32.totalorder %s495, %s496
      %p505 = scmp.eq.s32.totalorder %s86, 0
      %p506 = por %p504, %p505
      %p507 = scmp.ne.s32.totalorder %s495, %s496
      %p508 = scmp.eq.s32.totalorder %s87, 1
      %p509 = por %p507, %p508
      %p511 = scmp.ne.s32.totalorder %s496, %s510
      %p512 = scmp.eq.s32.totalorder %s87, 0
      %p513 = por %p511, %p512
      %s515 = sadd.s32 %s514, 1
      %p518 = scmp.eq.s32.totalorder %s81, 1
      %p519 = scmp.ne.s32.totalorder %s514, %s516
      %p520 = scmp.eq.s32.totalorder %s81, 0
      %p521 = por %p519, %p520
      %p522 = scmp.ne.s32.totalorder %s514, %s516
      %p523 = scmp.eq.s32.totalorder %s86, 1
      %p524 = por %p522, %p523
      %p525 = scmp.ne.s32.totalorder %s516, %s517
      %p526 = scmp.eq.s32.totalorder %s86, 0
      %p527 = por %p525, %p526
      %p528 = scmp.ne.s32.totalorder %s516, %s517
      %p529 = scmp.eq.s32.totalorder %s87, 1
      %p530 = por %p528, %p529
      %p532 = scmp.ne.s32.totalorder %s517, %s531
      %p533 = scmp.eq.s32.totalorder %s87, 0
      %p534 = por %p532, %p533
      %s536 = sadd.s32 %s535, 1
      %p539 = scmp.eq.s32.totalorder %s81, 1
      %p540 = scmp.ne.s32.totalorder %s535, %s537
      %p541 = scmp.eq.s32.totalorder %s81, 0
      %p542 = por %p540, %p541
      %p543 = scmp.ne.s32.totalorder %s535, %s537
      %p544 = scmp.eq.s32.totalorder %s86, 1
      %p545 = por %p543, %p544
      %p546 = scmp.ne.s32.totalorder %s537, %s538
      %p547 = scmp.eq.s32.totalorder %s86, 0
      %p548 = por %p546, %p547
      %p549 = scmp.ne.s32.totalorder %s537, %s538
      %p550 = scmp.eq.s32.totalorder %s87, 1
      %p551 = por %p549, %p550
      %p553 = scmp.ne.s32.totalorder %s538, %s552
      %p554 = scmp.eq.s32.totalorder %s87, 0
      %p555 = por %p553, %p554
      %s557 = sadd.s32 %s556, 1
      %p560 = scmp.eq.s32.totalorder %s81, 1
      %p561 = scmp.ne.s32.totalorder %s556, %s558
      %p562 = scmp.eq.s32.totalorder %s81, 0
      %p563 = por %p561, %p562
      %p564 = scmp.ne.s32.totalorder %s556, %s558
      %p565 = scmp.eq.s32.totalorder %s86, 1
      %p566 = por %p564, %p565
      %p567 = scmp.ne.s32.totalorder %s558, %s559
      %p568 = scmp.eq.s32.totalorder %s86, 0
      %p569 = por %p567, %p568
      %p570 = scmp.ne.s32.totalorder %s558, %s559
      %p571 = scmp.eq.s32.totalorder %s87, 1
      %p572 = por %p570, %p571
      %p574 = scmp.ne.s32.totalorder %s559, %s573
      %p575 = scmp.eq.s32.totalorder %s87, 0
      %p576 = por %p574, %p575
      %s578 = sadd.s32 %s577, 1
      %p581 = scmp.eq.s32.totalorder %s81, 1
      %p582 = scmp.ne.s32.totalorder %s577, %s579
      %p583 = scmp.eq.s32.totalorder %s81, 0
      %p584 = por %p582, %p583
      %p585 = scmp.ne.s32.totalorder %s577, %s579
      %p586 = scmp.eq.s32.totalorder %s86, 1
      %p587 = por %p585, %p586
      %p588 = scmp.ne.s32.totalorder %s579, %s580
      %p589 = scmp.eq.s32.totalorder %s86, 0
      %p590 = por %p588, %p589
      %p591 = scmp.ne.s32.totalorder %s579, %s580
      %p592 = scmp.eq.s32.totalorder %s87, 1
      %p593 = por %p591, %p592
      %p595 = scmp.ne.s32.totalorder %s580, %s594
      %p596 = scmp.eq.s32.totalorder %s87, 0
      %p597 = por %p595, %p596
      %s599 = sadd.s32 %s598, 1
      %p602 = scmp.eq.s32.totalorder %s81, 1
      %p603 = scmp.ne.s32.totalorder %s598, %s600
      %p604 = scmp.eq.s32.totalorder %s81, 0
      %p605 = por %p603, %p604
      %p606 = scmp.ne.s32.totalorder %s598, %s600
      %p607 = scmp.eq.s32.totalorder %s86, 1
      %p608 = por %p606, %p607
      %p609 = scmp.ne.s32.totalorder %s600, %s601
      %p610 = scmp.eq.s32.totalorder %s86, 0
      %p611 = por %p609, %p610
      %p612 = scmp.ne.s32.totalorder %s600, %s601
      %p613 = scmp.eq.s32.totalorder %s87, 1
      %p614 = por %p612, %p613
      %p616 = scmp.ne.s32.totalorder %s601, %s615
      %p617 = scmp.eq.s32.totalorder %s87, 0
      %p618 = por %p616, %p617
      %s620 = sadd.s32 %s619, 1
      %p623 = scmp.eq.s32.totalorder %s81, 1
      %p624 = scmp.ne.s32.totalorder %s619, %s621
      %p625 = scmp.eq.s32.totalorder %s81, 0
      %p626 = por %p624, %p625
      %p627 = scmp.ne.s32.totalorder %s619, %s621
      %p628 = scmp.eq.s32.totalorder %s86, 1
      %p629 = por %p627, %p628
      %p630 = scmp.ne.s32.totalorder %s621, %s622
      %p631 = scmp.eq.s32.totalorder %s86, 0
      %p632 = por %p630, %p631
      %p633 = scmp.ne.s32.totalorder %s621, %s622
      %p634 = scmp.eq.s32.totalorder %s87, 1
      %p635 = por %p633, %p634
      %p637 = scmp.ne.s32.totalorder %s622, %s636
      %p638 = scmp.eq.s32.totalorder %s87, 0
      %p639 = por %p637, %p638
      %s641 = sadd.s32 %s640, 1
      %p644 = scmp.eq.s32.totalorder %s81, 1
      %p645 = scmp.ne.s32.totalorder %s640, %s642
      %p646 = scmp.eq.s32.totalorder %s81, 0
      %p647 = por %p645, %p646
      %p648 = scmp.ne.s32.totalorder %s640, %s642
      %p649 = scmp.eq.s32.totalorder %s86, 1
      %p650 = por %p648, %p649
      %p651 = scmp.ne.s32.totalorder %s642, %s643
      %p652 = scmp.eq.s32.totalorder %s86, 0
      %p653 = por %p651, %p652
      %p654 = scmp.ne.s32.totalorder %s642, %s643
      %p655 = scmp.eq.s32.totalorder %s87, 1
      %p656 = por %p654, %p655
      %p658 = scmp.ne.s32.totalorder %s643, %s657
      %p659 = scmp.eq.s32.totalorder %s87, 0
      %p660 = por %p658, %p659
      %s662 = sadd.s32 %s661, 1
      %p665 = scmp.eq.s32.totalorder %s81, 1
      %p666 = scmp.ne.s32.totalorder %s661, %s663
      %p667 = scmp.eq.s32.totalorder %s81, 0
      %p668 = por %p666, %p667
      %p669 = scmp.ne.s32.totalorder %s661, %s663
      %p670 = scmp.eq.s32.totalorder %s86, 1
      %p671 = por %p669, %p670
      %p672 = scmp.ne.s32.totalorder %s663, %s664
      %p673 = scmp.eq.s32.totalorder %s86, 0
      %p674 = por %p672, %p673
      %p675 = scmp.ne.s32.totalorder %s663, %s664
      %p676 = scmp.eq.s32.totalorder %s87, 1
      %p677 = por %p675, %p676
      %p679 = scmp.ne.s32.totalorder %s664, %s678
      %p680 = scmp.eq.s32.totalorder %s87, 0
      %p681 = por %p679, %p680
      %s683 = sadd.s32 %s682, 1
      %p686 = scmp.eq.s32.totalorder %s81, 1
      %p687 = scmp.ne.s32.totalorder %s682, %s684
      %p688 = scmp.eq.s32.totalorder %s81, 0
      %p689 = por %p687, %p688
      %p690 = scmp.ne.s32.totalorder %s682, %s684
      %p691 = scmp.eq.s32.totalorder %s86, 1
      %p692 = por %p690, %p691
      %p693 = scmp.ne.s32.totalorder %s684, %s685
      %p694 = scmp.eq.s32.totalorder %s86, 0
      %p695 = por %p693, %p694
      %p696 = scmp.ne.s32.totalorder %s684, %s685
      %p697 = scmp.eq.s32.totalorder %s87, 1
      %p698 = por %p696, %p697
      %p700 = scmp.ne.s32.totalorder %s685, %s699
      %p701 = scmp.eq.s32.totalorder %s87, 0
      %p702 = por %p700, %p701
      %s704 = sadd.s32 %s703, 1
      %p707 = scmp.eq.s32.totalorder %s81, 1
      %p708 = scmp.ne.s32.totalorder %s703, %s705
      %p709 = scmp.eq.s32.totalorder %s81, 0
      %p710 = por %p708, %p709
      %p711 = scmp.ne.s32.totalorder %s703, %s705
      %p712 = scmp.eq.s32.totalorder %s86, 1
      %p713 = por %p711, %p712
      %p714 = scmp.ne.s32.totalorder %s705, %s706
      %p715 = scmp.eq.s32.totalorder %s86, 0
      %p716 = por %p714, %p715
      %p717 = scmp.ne.s32.totalorder %s705, %s706
      %p718 = scmp.eq.s32.totalorder %s87, 1
      %p719 = por %p717, %p718
      %p721 = scmp.ne.s32.totalorder %s706, %s720
      %p722 = scmp.eq.s32.totalorder %s87, 0
      %p723 = por %p721, %p722
      %s725 = sadd.s32 %s724, 1
      %p728 = scmp.eq.s32.totalorder %s81, 1
      %p729 = scmp.ne.s32.totalorder %s724, %s726
      %p730 = scmp.eq.s32.totalorder %s81, 0
      %p731 = por %p729, %p730
      %p732 = scmp.ne.s32.totalorder %s724, %s726
      %p733 = scmp.eq.s32.totalorder %s86, 1
      %p734 = por %p732, %p733
      %p735 = scmp.ne.s32.totalorder %s726, %s727
      %p736 = scmp.eq.s32.totalorder %s86, 0
      %p737 = por %p735, %p736
      %p738 = scmp.ne.s32.totalorder %s726, %s727
      %p739 = scmp.eq.s32.totalorder %s87, 1
      %p740 = por %p738, %p739
      %p742 = scmp.ne.s32.totalorder %s727, %s741
      %p743 = scmp.eq.s32.totalorder %s87, 0
      %p744 = por %p742, %p743
      %s746 = sadd.s32 %s745, 1
      %p749 = scmp.eq.s32.totalorder %s81, 1
      %p750 = scmp.ne.s32.totalorder %s745, %s747
      %p751 = scmp.eq.s32.totalorder %s81, 0
      %p752 = por %p750, %p751
      %p753 = scmp.ne.s32.totalorder %s745, %s747
      %p754 = scmp.eq.s32.totalorder %s86, 1
      %p755 = por %p753, %p754
      %p756 = scmp.ne.s32.totalorder %s747, %s748
      %p757 = scmp.eq.s32.totalorder %s86, 0
      %p758 = por %p756, %p757
      %p759 = scmp.ne.s32.totalorder %s747, %s748
      %p760 = scmp.eq.s32.totalorder %s87, 1
      %p761 = por %p759, %p760
      %p763 = scmp.ne.s32.totalorder %s748, %s762
      %p764 = scmp.eq.s32.totalorder %s87, 0
      %p765 = por %p763, %p764
      %s767 = sadd.s32 %s766, 1
      %p770 = scmp.eq.s32.totalorder %s81, 1
      %p771 = scmp.ne.s32.totalorder %s766, %s768
      %p772 = scmp.eq.s32.totalorder %s81, 0
      %p773 = por %p771, %p772
      %p774 = scmp.ne.s32.totalorder %s766, %s768
      %p775 = scmp.eq.s32.totalorder %s86, 1
      %p776 = por %p774, %p775
      %p777 = scmp.ne.s32.totalorder %s768, %s769
      %p778 = scmp.eq.s32.totalorder %s86, 0
      %p779 = por %p777, %p778
      %p780 = scmp.ne.s32.totalorder %s768, %s769
      %p781 = scmp.eq.s32.totalorder %s87, 1
      %p782 = por %p780, %p781
      %p784 = scmp.ne.s32.totalorder %s769, %s783
      %p785 = scmp.eq.s32.totalorder %s87, 0
      %p786 = por %p784, %p785
      %s787 = ssub.s32 %s81, %s88
      %p788 = scmp.eq.s32.totalorder %s787, 0
      %s790 = sadd.s32 %s789, 1
      %s791 = scalar_select %p788, %s789, %s790
      %p794 = pneg %p788
      %p795 = scmp.eq.s32.totalorder %s81, 1
      %p796 = por %p794, %p795
      %p797 = scmp.ne.s32.totalorder %s789, %s792
      %p798 = scmp.eq.s32.totalorder %s81, 0
      %p799 = por %p797, %p798
      %p800 = scmp.ne.s32.totalorder %s789, %s792
      %p801 = scmp.eq.s32.totalorder %s86, 1
      %p802 = por %p800, %p801
      %p803 = scmp.ne.s32.totalorder %s792, %s793
      %p804 = scmp.eq.s32.totalorder %s86, 0
      %p805 = por %p803, %p804
      %p806 = scmp.ne.s32.totalorder %s792, %s793
      %p807 = scmp.eq.s32.totalorder %s87, 1
      %p808 = por %p806, %p807
      %p810 = scmp.ne.s32.totalorder %s793, %s809
      %p811 = scmp.eq.s32.totalorder %s87, 0
      %p812 = por %p810, %p811
      %p813 = scmp.le.s32.totalorder 1, %s81
      %p814 = scmp.lt.s32.totalorder %s81, 3
      %p815 = pnand %p813, %p814
      %p816 = pneg %p815
      // Predicated region
      $region9: #{tpu_custom_call.1} parent=5 // pred_check
        _
      $region10: #{tpu_custom_call.1} parent=5 // pred_check_branch
        %818 = sbr.rel (%p815) target = $region12
      $region11: #{tpu_custom_call.1} parent=5 // pred_region
        %s819 = ssub.s32 %s81, 1
        // Predicated region
        $region13: #{tpu_custom_call.1} parent=11 // pred_check
          %p820 = pneg %p128
        $region14: #{tpu_custom_call.1} parent=11 // pred_check_branch
          %822 = sbr.rel (%p820) target = $region16
        $region15: #{tpu_custom_call.1} parent=11 // pred_region
          %824 = vsyncadd [#allocation3], 0
          %s826 = sshll.u32 %s3, 4
          %s827 = int_to_ptr.hbm [resolvable:$true] %s826
          %s828 = sshll.u32 [#allocation2], 4
          %s829 = int_to_ptr.vmem [resolvable:$true] %s828
          %831 = dma.hbm_to_vmem [thread:$0]  %s827, 16, %s829, [#allocation3]
        $region16: #{tpu_custom_call.1} parent=11 // pred_fallthru
          _
        // Predicated region
        $region17: #{tpu_custom_call.1} parent=11 // pred_check
          %p832 = pneg %p149
        $region18: #{tpu_custom_call.1} parent=11 // pred_check_branch
          %834 = sbr.rel (%p832) target = $region20
        $region19: #{tpu_custom_call.1} parent=11 // pred_region
          %836 = vsyncadd [#allocation6], 0
          %s838 = sshll.u32 %s5, 4
          %s839 = int_to_ptr.hbm [resolvable:$true] %s838
          %s840 = sshll.u32 [#allocation5], 4
          %s841 = int_to_ptr.vmem [resolvable:$true] %s840
          %843 = dma.hbm_to_vmem [thread:$0]  %s839, 16, %s841, [#allocation6]
        $region20: #{tpu_custom_call.1} parent=11 // pred_fallthru
          _
        // Predicated region
        $region21: #{tpu_custom_call.1} parent=11 // pred_check
          %p844 = pneg %p170
        $region22: #{tpu_custom_call.1} parent=11 // pred_check_branch
          %846 = sbr.rel (%p844) target = $region24
        $region23: #{tpu_custom_call.1} parent=11 // pred_region
          _
        $region24: #{tpu_custom_call.1} parent=11 // pred_fallthru
          _
        // Predicated region
        $region25: #{tpu_custom_call.1} parent=11 // pred_check
          %p847 = pneg %p191
        $region26: #{tpu_custom_call.1} parent=11 // pred_check_branch
          %849 = sbr.rel (%p847) target = $region28
        $region27: #{tpu_custom_call.1} parent=11 // pred_region
          %851 = vsyncadd [#allocation6], 0
          %s853 = sshll.u32 %s9, 4
          %s854 = int_to_ptr.hbm [resolvable:$true] %s853
          %s855 = sshll.u32 [#allocation7], 4
          %s856 = int_to_ptr.vmem [resolvable:$true] %s855
          %858 = dma.hbm_to_vmem [thread:$0]  %s854, 32, %s856, [#allocation6]
        $region28: #{tpu_custom_call.1} parent=11 // pred_fallthru
          _
        // Predicated region
        $region29: #{tpu_custom_call.1} parent=11 // pred_check
          %p859 = pneg %p212
        $region30: #{tpu_custom_call.1} parent=11 // pred_check_branch
          %861 = sbr.rel (%p859) target = $region32
        $region31: #{tpu_custom_call.1} parent=11 // pred_region
          _
        $region32: #{tpu_custom_call.1} parent=11 // pred_fallthru
          _
        // Predicated region
        $region33: #{tpu_custom_call.1} parent=11 // pred_check
          %p862 = pneg %p233
        $region34: #{tpu_custom_call.1} parent=11 // pred_check_branch
          %864 = sbr.rel (%p862) target = $region36
        $region35: #{tpu_custom_call.1} parent=11 // pred_region
          _
        $region36: #{tpu_custom_call.1} parent=11 // pred_fallthru
          _
        // Predicated region
        $region37: #{tpu_custom_call.1} parent=11 // pred_check
          %p865 = pneg %p254
        $region38: #{tpu_custom_call.1} parent=11 // pred_check_branch
          %867 = sbr.rel (%p865) target = $region40
        $region39: #{tpu_custom_call.1} parent=11 // pred_region
          %869 = vsyncadd [#allocation9], 0
          %s871 = sshll.u32 %s15, 4
          %s872 = int_to_ptr.hbm [resolvable:$true] %s871
          %s873 = sshll.u32 [#allocation8], 4
          %s874 = int_to_ptr.vmem [resolvable:$true] %s873
          %876 = dma.hbm_to_vmem [thread:$0]  %s872, 16, %s874, [#allocation9]
        $region40: #{tpu_custom_call.1} parent=11 // pred_fallthru
          _
        // Predicated region
        $region41: #{tpu_custom_call.1} parent=11 // pred_check
          %p877 = pneg %p275
        $region42: #{tpu_custom_call.1} parent=11 // pred_check_branch
          %879 = sbr.rel (%p877) target = $region44
        $region43: #{tpu_custom_call.1} parent=11 // pred_region
          %881 = vsyncadd [#allocation9], 0
          %s883 = sshll.u32 %s17, 4
          %s884 = int_to_ptr.hbm [resolvable:$true] %s883
          %s885 = sshll.u32 [#allocation10], 4
          %s886 = int_to_ptr.vmem [resolvable:$true] %s885
          %888 = dma.hbm_to_vmem [thread:$0]  %s884, 16, %s886, [#allocation9]
        $region44: #{tpu_custom_call.1} parent=11 // pred_fallthru
          _
        // Predicated region
        $region45: #{tpu_custom_call.1} parent=11 // pred_check
          %p889 = pneg %p296
        $region46: #{tpu_custom_call.1} parent=11 // pred_check_branch
          %891 = sbr.rel (%p889) target = $region48
        $region47: #{tpu_custom_call.1} parent=11 // pred_region
          _
        $region48: #{tpu_custom_call.1} parent=11 // pred_fallthru
          _
        // Predicated region
        $region49: #{tpu_custom_call.1} parent=11 // pred_check
          %p892 = pneg %p317
        $region50: #{tpu_custom_call.1} parent=11 // pred_check_branch
          %894 = sbr.rel (%p892) target = $region52
        $region51: #{tpu_custom_call.1} parent=11 // pred_region
          %896 = vsyncadd [#allocation12], 0
          %s898 = sshll.u32 %s21, 4
          %s899 = int_to_ptr.hbm [resolvable:$true] %s898
          %s900 = sshll.u32 [#allocation11], 4
          %s901 = int_to_ptr.vmem [resolvable:$true] %s900
          %903 = dma.hbm_to_vmem [thread:$0]  %s899, 16, %s901, [#allocation12]
        $region52: #{tpu_custom_call.1} parent=11 // pred_fallthru
          _
        // Predicated region
        $region53: #{tpu_custom_call.1} parent=11 // pred_check
          %p904 = pneg %p338
        $region54: #{tpu_custom_call.1} parent=11 // pred_check_branch
          %906 = sbr.rel (%p904) target = $region56
        $region55: #{tpu_custom_call.1} parent=11 // pred_region
          _
        $region56: #{tpu_custom_call.1} parent=11 // pred_fallthru
          _
        // Predicated region
        $region57: #{tpu_custom_call.1} parent=11 // pred_check
          %p907 = pneg %p359
        $region58: #{tpu_custom_call.1} parent=11 // pred_check_branch
          %909 = sbr.rel (%p907) target = $region60
        $region59: #{tpu_custom_call.1} parent=11 // pred_region
          %911 = vsyncadd [#allocation12], 0
          %s913 = sshll.u32 %s25, 4
          %s914 = int_to_ptr.hbm [resolvable:$true] %s913
          %s915 = sshll.u32 [#allocation13], 4
          %s916 = int_to_ptr.vmem [resolvable:$true] %s915
          %918 = dma.hbm_to_vmem [thread:$0]  %s914, 16, %s916, [#allocation12]
        $region60: #{tpu_custom_call.1} parent=11 // pred_fallthru
          _
        // Predicated region
        $region61: #{tpu_custom_call.1} parent=11 // pred_check
          %p919 = pneg %p380
        $region62: #{tpu_custom_call.1} parent=11 // pred_check_branch
          %921 = sbr.rel (%p919) target = $region64
        $region63: #{tpu_custom_call.1} parent=11 // pred_region
          _
        $region64: #{tpu_custom_call.1} parent=11 // pred_fallthru
          _
        // Predicated region
        $region65: #{tpu_custom_call.1} parent=11 // pred_check
          %p922 = pneg %p401
        $region66: #{tpu_custom_call.1} parent=11 // pred_check_branch
          %924 = sbr.rel (%p922) target = $region68
        $region67: #{tpu_custom_call.1} parent=11 // pred_region
          %926 = vsyncadd [#allocation15], 0
          %s928 = sshll.u32 %s29, 4
          %s929 = int_to_ptr.hbm [resolvable:$true] %s928
          %s930 = sshll.u32 [#allocation14], 4
          %s931 = int_to_ptr.vmem [resolvable:$true] %s930
          %933 = dma.hbm_to_vmem [thread:$0]  %s929, 16, %s931, [#allocation15]
        $region68: #{tpu_custom_call.1} parent=11 // pred_fallthru
          _
        // Predicated region
        $region69: #{tpu_custom_call.1} parent=11 // pred_check
          %p934 = pneg %p422
        $region70: #{tpu_custom_call.1} parent=11 // pred_check_branch
          %936 = sbr.rel (%p934) target = $region72
        $region71: #{tpu_custom_call.1} parent=11 // pred_region
          _
        $region72: #{tpu_custom_call.1} parent=11 // pred_fallthru
          _
        // Predicated region
        $region73: #{tpu_custom_call.1} parent=11 // pred_check
          %p937 = pneg %p443
        $region74: #{tpu_custom_call.1} parent=11 // pred_check_branch
          %939 = sbr.rel (%p937) target = $region76
        $region75: #{tpu_custom_call.1} parent=11 // pred_region
          _
        $region76: #{tpu_custom_call.1} parent=11 // pred_fallthru
          _
        // Predicated region
        $region77: #{tpu_custom_call.1} parent=11 // pred_check
          %p940 = pneg %p464
        $region78: #{tpu_custom_call.1} parent=11 // pred_check_branch
          %942 = sbr.rel (%p940) target = $region80
        $region79: #{tpu_custom_call.1} parent=11 // pred_region
          _
        $region80: #{tpu_custom_call.1} parent=11 // pred_fallthru
          _
        // Predicated region
        $region81: #{tpu_custom_call.1} parent=11 // pred_check
          %p943 = pneg %p485
        $region82: #{tpu_custom_call.1} parent=11 // pred_check_branch
          %945 = sbr.rel (%p943) target = $region84
        $region83: #{tpu_custom_call.1} parent=11 // pred_region
          _
        $region84: #{tpu_custom_call.1} parent=11 // pred_fallthru
          _
        // Predicated region
        $region85: #{tpu_custom_call.1} parent=11 // pred_check
          %p946 = pneg %p506
        $region86: #{tpu_custom_call.1} parent=11 // pred_check_branch
          %948 = sbr.rel (%p946) target = $region88
        $region87: #{tpu_custom_call.1} parent=11 // pred_region
          _
        $region88: #{tpu_custom_call.1} parent=11 // pred_fallthru
          _
        // Predicated region
        $region89: #{tpu_custom_call.1} parent=11 // pred_check
          %p949 = pneg %p527
        $region90: #{tpu_custom_call.1} parent=11 // pred_check_branch
          %951 = sbr.rel (%p949) target = $region92
        $region91: #{tpu_custom_call.1} parent=11 // pred_region
          _
        $region92: #{tpu_custom_call.1} parent=11 // pred_fallthru
          _
        // Predicated region
        $region93: #{tpu_custom_call.1} parent=11 // pred_check
          %p952 = pneg %p548
        $region94: #{tpu_custom_call.1} parent=11 // pred_check_branch
          %954 = sbr.rel (%p952) target = $region96
        $region95: #{tpu_custom_call.1} parent=11 // pred_region
          _
        $region96: #{tpu_custom_call.1} parent=11 // pred_fallthru
          _
        // Predicated region
        $region97: #{tpu_custom_call.1} parent=11 // pred_check
          %p955 = pneg %p569
        $region98: #{tpu_custom_call.1} parent=11 // pred_check_branch
          %957 = sbr.rel (%p955) target = $region100
        $region99: #{tpu_custom_call.1} parent=11 // pred_region
          _
        $region100: #{tpu_custom_call.1} parent=11 // pred_fallthru
          _
        // Predicated region
        $region101: #{tpu_custom_call.1} parent=11 // pred_check
          %p958 = pneg %p590
        $region102: #{tpu_custom_call.1} parent=11 // pred_check_branch
          %960 = sbr.rel (%p958) target = $region104
        $region103: #{tpu_custom_call.1} parent=11 // pred_region
          _
        $region104: #{tpu_custom_call.1} parent=11 // pred_fallthru
          _
        // Predicated region
        $region105: #{tpu_custom_call.1} parent=11 // pred_check
          %p961 = pneg %p611
        $region106: #{tpu_custom_call.1} parent=11 // pred_check_branch
          %963 = sbr.rel (%p961) target = $region108
        $region107: #{tpu_custom_call.1} parent=11 // pred_region
          _
        $region108: #{tpu_custom_call.1} parent=11 // pred_fallthru
          _
        // Predicated region
        $region109: #{tpu_custom_call.1} parent=11 // pred_check
          %p964 = pneg %p632
        $region110: #{tpu_custom_call.1} parent=11 // pred_check_branch
          %966 = sbr.rel (%p964) target = $region112
        $region111: #{tpu_custom_call.1} parent=11 // pred_region
          %968 = vsyncadd [#allocation15], 0
          %s969 = sshll.u32 %s51, 4
          %s970 = int_to_ptr.hbm [resolvable:$true] %s969
          %s971 = sshll.u32 [#allocation16], 4
          %s972 = int_to_ptr.vmem [resolvable:$true] %s971
          %977 = dma.hbm_to_vmem [thread:$0]  %s970, 512, %s972, [#allocation15], 64, 64, 4
        $region112: #{tpu_custom_call.1} parent=11 // pred_fallthru
          _
        // Predicated region
        $region113: #{tpu_custom_call.1} parent=11 // pred_check
          %p978 = pneg %p653
        $region114: #{tpu_custom_call.1} parent=11 // pred_check_branch
          %980 = sbr.rel (%p978) target = $region116
        $region115: #{tpu_custom_call.1} parent=11 // pred_region
          _
        $region116: #{tpu_custom_call.1} parent=11 // pred_fallthru
          _
        // Predicated region
        $region117: #{tpu_custom_call.1} parent=11 // pred_check
          %p981 = pneg %p674
        $region118: #{tpu_custom_call.1} parent=11 // pred_check_branch
          %983 = sbr.rel (%p981) target = $region120
        $region119: #{tpu_custom_call.1} parent=11 // pred_region
          _
        $region120: #{tpu_custom_call.1} parent=11 // pred_fallthru
          _
        // Predicated region
        $region121: #{tpu_custom_call.1} parent=11 // pred_check
          %p984 = pneg %p695
        $region122: #{tpu_custom_call.1} parent=11 // pred_check_branch
          %986 = sbr.rel (%p984) target = $region124
        $region123: #{tpu_custom_call.1} parent=11 // pred_region
          _
        $region124: #{tpu_custom_call.1} parent=11 // pred_fallthru
          _
        // Predicated region
        $region125: #{tpu_custom_call.1} parent=11 // pred_check
          %p987 = pneg %p716
        $region126: #{tpu_custom_call.1} parent=11 // pred_check_branch
          %989 = sbr.rel (%p987) target = $region128
        $region127: #{tpu_custom_call.1} parent=11 // pred_region
          _
        $region128: #{tpu_custom_call.1} parent=11 // pred_fallthru
          _
        // Predicated region
        $region129: #{tpu_custom_call.1} parent=11 // pred_check
          %p990 = pneg %p737
        $region130: #{tpu_custom_call.1} parent=11 // pred_check_branch
          %992 = sbr.rel (%p990) target = $region132
        $region131: #{tpu_custom_call.1} parent=11 // pred_region
          _
        $region132: #{tpu_custom_call.1} parent=11 // pred_fallthru
          _
        // Predicated region
        $region133: #{tpu_custom_call.1} parent=11 // pred_check
          %p993 = pneg %p758
        $region134: #{tpu_custom_call.1} parent=11 // pred_check_branch
          %995 = sbr.rel (%p993) target = $region136
        $region135: #{tpu_custom_call.1} parent=11 // pred_region
          _
        $region136: #{tpu_custom_call.1} parent=11 // pred_fallthru
          _
        // Predicated region
        $region137: #{tpu_custom_call.1} parent=11 // pred_check
          %p996 = pneg %p779
        $region138: #{tpu_custom_call.1} parent=11 // pred_check_branch
          %998 = sbr.rel (%p996) target = $region140
        $region139: #{tpu_custom_call.1} parent=11 // pred_region
          _
        $region140: #{tpu_custom_call.1} parent=11 // pred_fallthru
          _
      $region12: #{tpu_custom_call.1} parent=5 // pred_fallthru
        _
      %p999 = scmp.lt.s32.totalorder %s81, 2
      // Predicated region
      $region141: #{tpu_custom_call.1} parent=5 // pred_check
        %p1000 = pneg %p999
      $region142: #{tpu_custom_call.1} parent=5 // pred_check_branch
        %1002 = sbr.rel (%p1000) target = $region144
      $region143: #{tpu_custom_call.1} parent=5 // pred_region
        // Predicated region
        $region145: #{tpu_custom_call.1} parent=143 // pred_check
          %p1003 = pneg %p101
        $region146: #{tpu_custom_call.1} parent=143 // pred_check_branch
          %1005 = sbr.rel (%p1003) target = $region148
        $region147: #{tpu_custom_call.1} parent=143 // pred_region
          %p1006 = scmp.lt.s32.totalorder %s81, 1
          %s1007 = scalar_select %p1006, %s81, 1
          %s1008 = smul.addr %s1007, 2
          %s1009 = smul.addr %s1008, 8
          %s1010 = scalar_lea.vmem %s1, %s1009
        $region148: #{tpu_custom_call.1} parent=143 // pred_fallthru
          _
      $region144: #{tpu_custom_call.1} parent=5 // pred_fallthru
        _
      %p1011 = scmp.le.s32.totalorder 1, %s81
      %p1012 = scmp.lt.s32.totalorder %s81, 3
      %p1013 = pnand %p1011, %p1012
      %p1014 = pneg %p1013
      // Predicated region
      $region149: #{tpu_custom_call.1} parent=5 // pred_check
        _
      $region150: #{tpu_custom_call.1} parent=5 // pred_check_branch
        %1016 = sbr.rel (%p1013) target = $region152
      $region151: #{tpu_custom_call.1} parent=5 // pred_region
        %s1017 = ssub.s32 %s81, 1
        // Predicated region
        $region153: #{tpu_custom_call.1} parent=151 // pred_check
          %p1018 = pneg %p128
        $region154: #{tpu_custom_call.1} parent=151 // pred_check_branch
          %1020 = sbr.rel (%p1018) target = $region156
        $region155: #{tpu_custom_call.1} parent=151 // pred_region
          %1022 = dma.done [#allocation3], 16
        $region156: #{tpu_custom_call.1} parent=151 // pred_fallthru
          _
        // Predicated region
        $region157: #{tpu_custom_call.1} parent=151 // pred_check
          %p1023 = pneg %p149
        $region158: #{tpu_custom_call.1} parent=151 // pred_check_branch
          %1025 = sbr.rel (%p1023) target = $region160
        $region159: #{tpu_custom_call.1} parent=151 // pred_region
          %1027 = dma.done [#allocation6], 16
        $region160: #{tpu_custom_call.1} parent=151 // pred_fallthru
          _
        // Predicated region
        $region161: #{tpu_custom_call.1} parent=151 // pred_check
          %p1028 = pneg %p191
        $region162: #{tpu_custom_call.1} parent=151 // pred_check_branch
          %1030 = sbr.rel (%p1028) target = $region164
        $region163: #{tpu_custom_call.1} parent=151 // pred_region
          %1032 = dma.done [#allocation6], 32
        $region164: #{tpu_custom_call.1} parent=151 // pred_fallthru
          _
        // Predicated region
        $region165: #{tpu_custom_call.1} parent=151 // pred_check
          %p1033 = pneg %p254
        $region166: #{tpu_custom_call.1} parent=151 // pred_check_branch
          %1035 = sbr.rel (%p1033) target = $region168
        $region167: #{tpu_custom_call.1} parent=151 // pred_region
          %1037 = dma.done [#allocation9], 16
        $region168: #{tpu_custom_call.1} parent=151 // pred_fallthru
          _
        // Predicated region
        $region169: #{tpu_custom_call.1} parent=151 // pred_check
          %p1038 = pneg %p275
        $region170: #{tpu_custom_call.1} parent=151 // pred_check_branch
          %1040 = sbr.rel (%p1038) target = $region172
        $region171: #{tpu_custom_call.1} parent=151 // pred_region
          %1042 = dma.done [#allocation9], 16
        $region172: #{tpu_custom_call.1} parent=151 // pred_fallthru
          _
        // Predicated region
        $region173: #{tpu_custom_call.1} parent=151 // pred_check
          %p1043 = pneg %p317
        $region174: #{tpu_custom_call.1} parent=151 // pred_check_branch
          %1045 = sbr.rel (%p1043) target = $region176
        $region175: #{tpu_custom_call.1} parent=151 // pred_region
          %1047 = dma.done [#allocation12], 16
        $region176: #{tpu_custom_call.1} parent=151 // pred_fallthru
          _
        // Predicated region
        $region177: #{tpu_custom_call.1} parent=151 // pred_check
          %p1048 = pneg %p359
        $region178: #{tpu_custom_call.1} parent=151 // pred_check_branch
          %1050 = sbr.rel (%p1048) target = $region180
        $region179: #{tpu_custom_call.1} parent=151 // pred_region
          %1052 = dma.done [#allocation12], 16
        $region180: #{tpu_custom_call.1} parent=151 // pred_fallthru
          _
        // Predicated region
        $region181: #{tpu_custom_call.1} parent=151 // pred_check
          %p1053 = pneg %p401
        $region182: #{tpu_custom_call.1} parent=151 // pred_check_branch
          %1055 = sbr.rel (%p1053) target = $region184
        $region183: #{tpu_custom_call.1} parent=151 // pred_region
          %1057 = dma.done [#allocation15], 16
        $region184: #{tpu_custom_call.1} parent=151 // pred_fallthru
          _
        // Predicated region
        $region185: #{tpu_custom_call.1} parent=151 // pred_check
          %p1058 = pneg %p632
        $region186: #{tpu_custom_call.1} parent=151 // pred_check_branch
          %1060 = sbr.rel (%p1058) target = $region188
        $region187: #{tpu_custom_call.1} parent=151 // pred_region
          %1062 = dma.done [#allocation15], 512
        $region188: #{tpu_custom_call.1} parent=151 // pred_fallthru
          _
        %p1063 = scmp.lt.s32.totalorder %s86, 1
        %s1064 = scalar_select %p1063, %s86, 1
        %s1065 = smul.addr %s1064, 2
        %s1066 = smul.addr %s1065, 8
        %s1067 = scalar_lea.vmem %s1, %s1066
        %p1068 = pneg %p107
        %p1069 = pneg %p104
        %p1070 = pneg %p128
        %p1071 = pneg %p125
        %p1072 = pneg %p149
        %p1073 = pneg %p146
        %p1074 = pneg %p170
        %p1075 = pneg %p167
        %p1076 = pneg %p191
        %p1077 = pneg %p188
        %p1078 = pneg %p212
        %p1079 = pneg %p209
        %p1080 = pneg %p233
        %p1081 = pneg %p230
        %p1082 = pneg %p254
        %p1083 = pneg %p251
        %p1084 = pneg %p275
        %p1085 = pneg %p272
        %p1086 = pneg %p296
        %p1087 = pneg %p293
        %p1088 = pneg %p317
        %p1089 = pneg %p314
        %p1090 = pneg %p338
        %p1091 = pneg %p335
        %p1092 = pneg %p359
        %p1093 = pneg %p356
        %p1094 = pneg %p380
        %p1095 = pneg %p377
        %p1096 = pneg %p401
        %p1097 = pneg %p398
        %p1098 = pneg %p422
        %p1099 = pneg %p419
        %p1100 = pneg %p443
        %p1101 = pneg %p440
        %p1102 = pneg %p464
        %p1103 = pneg %p461
        %p1104 = pneg %p485
        %p1105 = pneg %p482
        %p1106 = pneg %p506
        %p1107 = pneg %p503
        %p1108 = pneg %p527
        %p1109 = pneg %p524
        %p1110 = pneg %p548
        %p1111 = pneg %p545
        %p1112 = pneg %p569
        %p1113 = pneg %p566
        %p1114 = pneg %p590
        %p1115 = pneg %p587
        %p1116 = pneg %p611
        %p1117 = pneg %p608
        %p1118 = pneg %p632
        %p1119 = pneg %p629
        %p1120 = pneg %p653
        %p1121 = pneg %p650
        %p1122 = pneg %p674
        %p1123 = pneg %p671
        %p1124 = pneg %p695
        %p1125 = pneg %p692
        %p1126 = pneg %p716
        %p1127 = pneg %p713
        %p1128 = pneg %p737
        %p1129 = pneg %p734
        %p1130 = pneg %p758
        %p1131 = pneg %p755
        %p1132 = pneg %p779
        %p1133 = pneg %p776
        %p1134 = pneg %p805
        %p1135 = pneg %p802
        %s1136 = sand.u32 %s792, 1
        %s1137 = scalar_lea.sflag [#allocation4], %s1136
        %s1138 = sand.u32 %s792, 1
        %s1139 = smul.addr %s1138, 16
        %s1140 = scalar_lea.vmem [#allocation17], %s1139
        %p1141 = scmp.lt.s32.totalorder %s86, 1
        %s1142 = scalar_select %p1141, %s86, 1
        %s1143 = smul.addr %s1142, 2
        %s1144 = smul.addr %s1143, 8
        %s1145 = scalar_lea.vmem %s1, %s1144
        %v1147 = vld [vmem:[#allocation2] sm:$0x1]
        %v1148 = vld [vmem:[#allocation5] sm:$0x1]
        %v1149 = vld [vmem:[%s7] sm:$0xff]
        %v1150 = vld [vmem:[%s7 + $0x8] sm:$0xff]
        %v1151 = vld [vmem:[%s7 + $0x10] sm:$0xff]
        %v1152 = vld [vmem:[%s7 + $0x18] sm:$0xff]
        %v1153 = vld [vmem:[%s7 + $0x20] sm:$0xff]
        %v1154 = vld [vmem:[%s7 + $0x28] sm:$0xff]
        %v1155 = vld [vmem:[%s7 + $0x30] sm:$0xff]
        %v1156 = vld [vmem:[%s7 + $0x38] sm:$0xff]
        %v1157 = vld [vmem:[#allocation7] sm:$0x3]
        %v1158 = vld [vmem:[%s11] sm:$0xf]
        %v1159 = vld [vmem:[%s11 + $0x4] sm:$0xf]
        %v1160 = vld [vmem:[%s11 + $0x8] sm:$0xf]
        %v1161 = vld [vmem:[%s11 + $0xc] sm:$0xf]
        %v1162 = vld [vmem:[%s11 + $0x10] sm:$0xf]
        %v1163 = vld [vmem:[%s11 + $0x14] sm:$0xf]
        %v1164 = vld [vmem:[%s11 + $0x18] sm:$0xf]
        %v1165 = vld [vmem:[%s11 + $0x1c] sm:$0xf]
        %v1166 = vld [vmem:[%s11 + $0x20] sm:$0xf]
        %v1167 = vld [vmem:[%s11 + $0x24] sm:$0xf]
        %v1168 = vld [vmem:[%s11 + $0x28] sm:$0xf]
        %v1169 = vld [vmem:[%s11 + $0x2c] sm:$0xf]
        %v1170 = vld [vmem:[%s11 + $0x30] sm:$0xf]
        %v1171 = vld [vmem:[%s11 + $0x34] sm:$0xf]
        %v1172 = vld [vmem:[%s11 + $0x38] sm:$0xf]
        %v1173 = vld [vmem:[%s11 + $0x3c] sm:$0xf]
        %v1174 = vld [vmem:[%s11 + $0x40] sm:$0xf]
        %v1175 = vld [vmem:[%s11 + $0x44] sm:$0xf]
        %v1176 = vld [vmem:[%s11 + $0x48] sm:$0xf]
        %v1177 = vld [vmem:[%s11 + $0x4c] sm:$0xf]
        %v1178 = vld [vmem:[%s11 + $0x50] sm:$0xf]
        %v1179 = vld [vmem:[%s11 + $0x54] sm:$0xf]
        %v1180 = vld [vmem:[%s11 + $0x58] sm:$0xf]
        %v1181 = vld [vmem:[%s11 + $0x5c] sm:$0xf]
        %v1182 = vld [vmem:[%s11 + $0x60] sm:$0xf]
        %v1183 = vld [vmem:[%s11 + $0x64] sm:$0xf]
        %v1184 = vld [vmem:[%s11 + $0x68] sm:$0xf]
        %v1185 = vld [vmem:[%s11 + $0x6c] sm:$0xf]
        %v1186 = vld [vmem:[%s11 + $0x70] sm:$0xf]
        %v1187 = vld [vmem:[%s11 + $0x74] sm:$0xf]
        %v1188 = vld [vmem:[%s11 + $0x78] sm:$0xf]
        %v1189 = vld [vmem:[%s11 + $0x7c] sm:$0xf]
        %v1190 = vld [vmem:[%s13] sm:$0x1]
        %v1191 = vld [vmem:[#allocation8] sm:$0x1]
        %v1192 = vld [vmem:[#allocation10] sm:$0x1]
        %v1193 = vld [vmem:[%s19] sm:$0xf]
        %v1194 = vld [vmem:[%s19 + $0x4] sm:$0xf]
        %v1195 = vld [vmem:[%s19 + $0x8] sm:$0xf]
        %v1196 = vld [vmem:[%s19 + $0xc] sm:$0xf]
        %v1197 = vld [vmem:[%s19 + $0x10] sm:$0xf]
        %v1198 = vld [vmem:[%s19 + $0x14] sm:$0xf]
        %v1199 = vld [vmem:[%s19 + $0x18] sm:$0xf]
        %v1200 = vld [vmem:[%s19 + $0x1c] sm:$0xf]
        %v1201 = vld [vmem:[#allocation11] sm:$0x1]
        %v1202 = vld [vmem:[%s23] sm:$0xf]
        %v1203 = vld [vmem:[%s23 + $0x4] sm:$0xf]
        %v1204 = vld [vmem:[%s23 + $0x8] sm:$0xf]
        %v1205 = vld [vmem:[%s23 + $0xc] sm:$0xf]
        %v1206 = vld [vmem:[%s23 + $0x10] sm:$0xf]
        %v1207 = vld [vmem:[%s23 + $0x14] sm:$0xf]
        %v1208 = vld [vmem:[%s23 + $0x18] sm:$0xf]
        %v1209 = vld [vmem:[%s23 + $0x1c] sm:$0xf]
        %v1210 = vld [vmem:[#allocation13] sm:$0x1]
        %v1211 = vld [vmem:[%s27] sm:$0xf]
        %v1212 = vld [vmem:[%s27 + $0x4] sm:$0xf]
        %v1213 = vld [vmem:[%s27 + $0x8] sm:$0xf]
        %v1214 = vld [vmem:[%s27 + $0xc] sm:$0xf]
        %v1215 = vld [vmem:[%s27 + $0x10] sm:$0xf]
        %v1216 = vld [vmem:[%s27 + $0x14] sm:$0xf]
        %v1217 = vld [vmem:[%s27 + $0x18] sm:$0xf]
        %v1218 = vld [vmem:[%s27 + $0x1c] sm:$0xf]
        %v1219 = vld [vmem:[#allocation14] sm:$0x1]
        %v1220 = vld [vmem:[%s31] sm:$0xf]
        %v1221 = vld [vmem:[%s31 + $0x4] sm:$0xf]
        %v1222 = vld [vmem:[%s31 + $0x8] sm:$0xf]
        %v1223 = vld [vmem:[%s31 + $0xc] sm:$0xf]
        %v1224 = vld [vmem:[%s31 + $0x10] sm:$0xf]
        %v1225 = vld [vmem:[%s31 + $0x14] sm:$0xf]
        %v1226 = vld [vmem:[%s31 + $0x18] sm:$0xf]
        %v1227 = vld [vmem:[%s31 + $0x1c] sm:$0xf]
        %v1228 = vld [vmem:[%s33] sm:$0x1]
        %v1229 = vld [vmem:[%s35] sm:$0x1]
        %v1230 = vld [vmem:[%s37] sm:$0x1]
        %v1231 = vld [vmem:[%s39] sm:$0xf]
        %v1232 = vld [vmem:[%s39 + $0x4] sm:$0xf]
        %v1233 = vld [vmem:[%s39 + $0x8] sm:$0xf]
        %v1234 = vld [vmem:[%s39 + $0xc] sm:$0xf]
        %v1235 = vld [vmem:[%s39 + $0x10] sm:$0xf]
        %v1236 = vld [vmem:[%s39 + $0x14] sm:$0xf]
        %v1237 = vld [vmem:[%s39 + $0x18] sm:$0xf]
        %v1238 = vld [vmem:[%s39 + $0x1c] sm:$0xf]
        %v1239 = vld [vmem:[%s41] sm:$0x1]
        %v1240 = vld [vmem:[%s43] sm:$0x7f]
        %v1241 = vld [vmem:[%s45] sm:$0x1]
        %v1242 = vld [vmem:[%s47] sm:$0x1]
        %v1243 = vld [vmem:[%s49] sm:$0x1]
        %v1244 = vld [vmem:[#allocation16] sm:$0xf]
        %v1245 = vld [vmem:[#allocation16 + $0x4] sm:$0xf]
        %v1246 = vld [vmem:[#allocation16 + $0x8] sm:$0xf]
        %v1247 = vld [vmem:[#allocation16 + $0xc] sm:$0xf]
        %v1248 = vld [vmem:[#allocation16 + $0x10] sm:$0xf]
        %v1249 = vld [vmem:[#allocation16 + $0x14] sm:$0xf]
        %v1250 = vld [vmem:[#allocation16 + $0x18] sm:$0xf]
        %v1251 = vld [vmem:[#allocation16 + $0x1c] sm:$0xf]
        %v1252 = vld [vmem:[%s53] sm:$0x1]
        %v1253 = vld [vmem:[%s55] sm:$0x1]
        %v1254 = vld [vmem:[%s57] sm:$0x1]
        %v1255 = vld [vmem:[%s59] sm:$0xff]
        %v1256 = vld [vmem:[%s59 + $0x8] sm:$0xff]
        %v1257 = vld [vmem:[%s59 + $0x10] sm:$0xff]
        %v1258 = vld [vmem:[%s59 + $0x18] sm:$0xff]
        %v1259 = vld [vmem:[%s59 + $0x20] sm:$0xff]
        %v1260 = vld [vmem:[%s59 + $0x28] sm:$0xff]
        %v1261 = vld [vmem:[%s59 + $0x30] sm:$0xff]
        %v1262 = vld [vmem:[%s59 + $0x38] sm:$0xff]
        %v1263 = vld [vmem:[%s61] sm:$0x3]
        %v1264 = vld [vmem:[%s63] sm:$0xf]
        %v1265 = vld [vmem:[%s63 + $0x4] sm:$0xf]
        %v1266 = vld [vmem:[%s63 + $0x8] sm:$0xf]
        %v1267 = vld [vmem:[%s63 + $0xc] sm:$0xf]
        %v1268 = vld [vmem:[%s63 + $0x10] sm:$0xf]
        %v1269 = vld [vmem:[%s63 + $0x14] sm:$0xf]
        %v1270 = vld [vmem:[%s63 + $0x18] sm:$0xf]
        %v1271 = vld [vmem:[%s63 + $0x1c] sm:$0xf]
        %v1272 = vld [vmem:[%s63 + $0x20] sm:$0xf]
        %v1273 = vld [vmem:[%s63 + $0x24] sm:$0xf]
        %v1274 = vld [vmem:[%s63 + $0x28] sm:$0xf]
        %v1275 = vld [vmem:[%s63 + $0x2c] sm:$0xf]
        %v1276 = vld [vmem:[%s63 + $0x30] sm:$0xf]
        %v1277 = vld [vmem:[%s63 + $0x34] sm:$0xf]
        %v1278 = vld [vmem:[%s63 + $0x38] sm:$0xf]
        %v1279 = vld [vmem:[%s63 + $0x3c] sm:$0xf]
        %v1280 = vld [vmem:[%s63 + $0x40] sm:$0xf]
        %v1281 = vld [vmem:[%s63 + $0x44] sm:$0xf]
        %v1282 = vld [vmem:[%s63 + $0x48] sm:$0xf]
        %v1283 = vld [vmem:[%s63 + $0x4c] sm:$0xf]
        %v1284 = vld [vmem:[%s63 + $0x50] sm:$0xf]
        %v1285 = vld [vmem:[%s63 + $0x54] sm:$0xf]
        %v1286 = vld [vmem:[%s63 + $0x58] sm:$0xf]
        %v1287 = vld [vmem:[%s63 + $0x5c] sm:$0xf]
        %v1288 = vld [vmem:[%s63 + $0x60] sm:$0xf]
        %v1289 = vld [vmem:[%s63 + $0x64] sm:$0xf]
        %v1290 = vld [vmem:[%s63 + $0x68] sm:$0xf]
        %v1291 = vld [vmem:[%s63 + $0x6c] sm:$0xf]
        %v1292 = vld [vmem:[%s63 + $0x70] sm:$0xf]
        %v1293 = vld [vmem:[%s63 + $0x74] sm:$0xf]
        %v1294 = vld [vmem:[%s63 + $0x78] sm:$0xf]
        %v1295 = vld [vmem:[%s63 + $0x7c] sm:$0xf]
        %v1296 = vld [vmem:[%s65] sm:$0x1]
        %v1297 = vld [vmem:[%s1145] sm:$0xff]
        %v1298 = vld [vmem:[%s1145 + $0x8] sm:$0xff]
        %vm1299 = vcmask 523264
        %v1300 = vsel %vm1299, %v1297, 0.0
        %1301 = vadd.xlane.f32.xlu0 %v1300
        %v1302 = vpop.xlane.xlu0 %1301
        %v1303 = vsel %vm1299, %v1298, 0.0
        %1304 = vadd.xlane.f32.xlu0 %v1303
        %v1305 = vpop.xlane.xlu0 %1304
        %v1306 = vrcp.pop 64.0
        %v1307 = vmul.f32 64.0, %v1306
        %v1308 = vsub.f32 1.0, %v1307
        %v1309 = vmul.f32 %v1306, %v1308
        %v1310 = vadd.f32 %v1306, %v1309
        %vm1311 = vweird.f32 %v1306
        %v1312 = vsel %vm1311, %v1306, %v1310
        %v1313 = vmul.f32 %v1302, %v1312
        %v1314 = vmul.f32 %v1305, %v1312
        %v1315 = vsub.f32 %v1297, %v1313
        %v1316 = vsub.f32 %v1298, %v1314
        %v1317 = vmul.f32 %v1315, %v1315
        %v1318 = vmul.f32 %v1316, %v1316
        %v1319 = vsel %vm1299, %v1317, 0.0
        %1320 = vadd.xlane.f32.xlu0 %v1319
        %v1321 = vpop.xlane.xlu0 %1320
        %v1322 = vsel %vm1299, %v1318, 0.0
        %1323 = vadd.xlane.f32.xlu0 %v1322
        %v1324 = vpop.xlane.xlu0 %1323
        %v1325 = vmul.f32 %v1321, %v1312
        %v1326 = vmul.f32 %v1324, %v1312
        %v1327 = vadd.f32 %v1325, 1e-05
        %v1328 = vadd.f32 %v1326, 1e-05
        %v1329 = vrsqrt.pop %v1327
        %v1330 = vmul.f32 %v1329, %v1327
        %v1331 = vmul.f32 %v1330, %v1329
        %v1332 = vmul.f32 0.5, %v1331
        %v1333 = vsub.f32 1.5, %v1332
        %v1334 = vmul.f32 %v1329, %v1333
        %vm1335 = vweird.f32 %v1327
        %vm1336 = vweird.f32 %v1329
        %vm1337 = vmor %vm1335, %vm1336
        %v1338 = vsel %vm1337, %v1329, %v1334
        %v1339 = vrsqrt.pop %v1328
        %v1340 = vmul.f32 %v1339, %v1328
        %v1341 = vmul.f32 %v1340, %v1339
        %v1342 = vmul.f32 0.5, %v1341
        %v1343 = vsub.f32 1.5, %v1342
        %v1344 = vmul.f32 %v1339, %v1343
        %vm1345 = vweird.f32 %v1328
        %vm1346 = vweird.f32 %v1339
        %vm1347 = vmor %vm1345, %vm1346
        %v1348 = vsel %vm1347, %v1339, %v1344
        %v1349 = vmul.f32 %v1315, %v1338
        %v1350 = vmul.f32 %v1316, %v1348
        %v1352 = vperm.slane %v1147, 0
        %v1354 = vmul.f32 %v1349, %v1352
        %v1355 = vmul.f32 %v1350, %v1352
        %v1357 = vperm.slane %v1148, 0
        %v1359 = vadd.f32 %v1354, %v1357
        %v1360 = vadd.f32 %v1355, %v1357
        %v1361 = vpack.c.bf16 %v1360, %v1359
        %v1363 = vperm.slane %v1157, 0
        %v1364 = vperm.slane %v1157, 1
        %v1375 = vunpack.c.l.b16 %v1149
        %v1376 = vunpack.c.h.b16 %v1149
        %v1377 = vunpack.c.l.b16 %v1150
        %v1378 = vunpack.c.h.b16 %v1150
        %v1379 = vunpack.c.l.b16 %v1151
        %v1380 = vunpack.c.h.b16 %v1151
        %v1381 = vunpack.c.l.b16 %v1152
        %v1382 = vunpack.c.h.b16 %v1152
        %v1383 = vunpack.c.l.b16 %v1153
        %v1384 = vunpack.c.h.b16 %v1153
        %v1385 = vunpack.c.l.b16 %v1154
        %v1386 = vunpack.c.h.b16 %v1154
        %v1387 = vunpack.c.l.b16 %v1155
        %v1388 = vunpack.c.h.b16 %v1155
        %v1389 = vunpack.c.l.b16 %v1156
        %v1390 = vunpack.c.h.b16 %v1156
        %v1391 = vpack.c.b16 %v1377, %v1375
        %v1392 = vpack.c.b16 %v1378, %v1376
        %v1393 = vpack.c.b16 %v1381, %v1379
        %v1394 = vpack.c.b16 %v1382, %v1380
        %v1395 = vpack.c.b16 %v1385, %v1383
        %v1396 = vpack.c.b16 %v1386, %v1384
        %v1397 = vpack.c.b16 %v1389, %v1387
        %v1398 = vpack.c.b16 %v1390, %v1388
        %v1408 = vsel %vm1299, %v1361, 0
        %1410 = vmatpush.bf16.msra.mxu0 0
        %1411 = vmatpush.bf16.msra.mxu0 0
        %1412 = vmatpush.bf16.msra.mxu0 0
        %1413 = vmatpush.bf16.msra.mxu0 0
        %1414 = vmatpush.bf16.msra.mxu0 %v1397
        %1415 = vmatpush.bf16.msra.mxu0 %v1395
        %1416 = vmatpush.bf16.msra.mxu0 %v1393
        %1417 = vmatpush.bf16.msra.mxu0 %v1391
        %1418 = vmatmul.bf16.gmra.mxu0 %v1408
        %v1419 = vpop.f32.mrf.mxu0
        %v1420 = vadd.f32 %v1363, %v1419
        %v1421 = vpop.f32.mrf.mxu0
        %v1422 = vadd.f32 %v1363, %v1421
        %1423 = vdwg.mxu0
        %1424 = vmatpush.bf16.msra.mxu0 0
        %1425 = vmatpush.bf16.msra.mxu0 0
        %1426 = vmatpush.bf16.msra.mxu0 0
        %1427 = vmatpush.bf16.msra.mxu0 0
        %1428 = vmatpush.bf16.msra.mxu0 %v1398
        %1429 = vmatpush.bf16.msra.mxu0 %v1396
        %1430 = vmatpush.bf16.msra.mxu0 %v1394
        %1431 = vmatpush.bf16.msra.mxu0 %v1392
        %1432 = vmatmul.bf16.gmra.mxu0 %v1408
        %v1433 = vpop.f32.mrf.mxu0
        %v1434 = vadd.f32 %v1364, %v1433
        %v1435 = vpop.f32.mrf.mxu0
        %v1436 = vadd.f32 %v1364, %v1435
        %1437 = vdwg.mxu0
        %v1438 = vxor.u32 %v1420, 2147483648
        %v1439 = vxor.u32 %v1434, 2147483648
        %v1440 = vxor.u32 %v1422, 2147483648
        %v1441 = vxor.u32 %v1436, 2147483648
        %v1442 = vmul.f32 %v1438, 1.442695
        %v1443 = vpow.pop %v1442
        %v1444 = vmul.f32 %v1439, 1.442695
        %v1445 = vpow.pop %v1444
        %v1446 = vmul.f32 %v1440, 1.442695
        %v1447 = vpow.pop %v1446
        %v1448 = vmul.f32 %v1441, 1.442695
        %v1449 = vpow.pop %v1448
        %v1450 = vadd.f32 %v1443, 1.0
        %v1451 = vadd.f32 %v1445, 1.0
        %v1452 = vadd.f32 %v1447, 1.0
        %v1453 = vadd.f32 %v1449, 1.0
        %v1454 = vrcp.pop %v1450
        %v1455 = vmul.f32 %v1450, %v1454
        %v1456 = vsub.f32 1.0, %v1455
        %v1457 = vmul.f32 %v1454, %v1456
        %v1458 = vadd.f32 %v1454, %v1457
        %vm1459 = vweird.f32 %v1450
        %vm1460 = vweird.f32 %v1454
        %vm1461 = vmor %vm1459, %vm1460
        %v1462 = vsel %vm1461, %v1454, %v1458
        %v1463 = vand.u32 2147483647, %v1450
        %vm1464 = vcmp.eq.f32.partialorder %v1463, 8.507059e+37
        %v1465 = vand.u32 %v1450, 2147483648
        %v1466 = vor.u32 1.1754944e-38, %v1465
        %v1467 = vsel %vm1464, %v1466, %v1462
        %v1468 = vmul.f32 1.0, %v1467
        %v1469 = vrcp.pop %v1451
        %v1470 = vmul.f32 %v1451, %v1469
        %v1471 = vsub.f32 1.0, %v1470
        %v1472 = vmul.f32 %v1469, %v1471
        %v1473 = vadd.f32 %v1469, %v1472
        %vm1474 = vweird.f32 %v1451
        %vm1475 = vweird.f32 %v1469
        %vm1476 = vmor %vm1474, %vm1475
        %v1477 = vsel %vm1476, %v1469, %v1473
        %v1478 = vand.u32 2147483647, %v1451
        %vm1479 = vcmp.eq.f32.partialorder %v1478, 8.507059e+37
        %v1480 = vand.u32 %v1451, 2147483648
        %v1481 = vor.u32 1.1754944e-38, %v1480
        %v1482 = vsel %vm1479, %v1481, %v1477
        %v1483 = vmul.f32 1.0, %v1482
        %v1484 = vrcp.pop %v1452
        %v1485 = vmul.f32 %v1452, %v1484
        %v1486 = vsub.f32 1.0, %v1485
        %v1487 = vmul.f32 %v1484, %v1486
        %v1488 = vadd.f32 %v1484, %v1487
        %vm1489 = vweird.f32 %v1452
        %vm1490 = vweird.f32 %v1484
        %vm1491 = vmor %vm1489, %vm1490
        %v1492 = vsel %vm1491, %v1484, %v1488
        %v1493 = vand.u32 2147483647, %v1452
        %vm1494 = vcmp.eq.f32.partialorder %v1493, 8.507059e+37
        %v1495 = vand.u32 %v1452, 2147483648
        %v1496 = vor.u32 1.1754944e-38, %v1495
        %v1497 = vsel %vm1494, %v1496, %v1492
        %v1498 = vmul.f32 1.0, %v1497
        %v1499 = vrcp.pop %v1453
        %v1500 = vmul.f32 %v1453, %v1499
        %v1501 = vsub.f32 1.0, %v1500
        %v1502 = vmul.f32 %v1499, %v1501
        %v1503 = vadd.f32 %v1499, %v1502
        %vm1504 = vweird.f32 %v1453
        %vm1505 = vweird.f32 %v1499
        %vm1506 = vmor %vm1504, %vm1505
        %v1507 = vsel %vm1506, %v1499, %v1503
        %v1508 = vand.u32 2147483647, %v1453
        %vm1509 = vcmp.eq.f32.partialorder %v1508, 8.507059e+37
        %v1510 = vand.u32 %v1453, 2147483648
        %v1511 = vor.u32 1.1754944e-38, %v1510
        %v1512 = vsel %vm1509, %v1511, %v1507
        %v1513 = vmul.f32 1.0, %v1512
        %v1514 = vmul.f32 %v1420, %v1468
        %v1515 = vmul.f32 %v1434, %v1483
        %v1516 = vmul.f32 %v1422, %v1498
        %v1517 = vmul.f32 %v1436, %v1513
        %v1518 = vpack.c.bf16 %v1516, %v1514
        %v1519 = vpack.c.bf16 %v1517, %v1515
        %v1521 = vperm.slane %v1190, 0
        %v1555 = vunpack.c.l.b16 %v1158
        %v1556 = vunpack.c.l.b16 %v1159
        %v1557 = vunpack.c.l.b16 %v1160
        %v1558 = vunpack.c.l.b16 %v1161
        %v1559 = vunpack.c.l.b16 %v1162
        %v1560 = vunpack.c.l.b16 %v1163
        %v1561 = vunpack.c.l.b16 %v1164
        %v1562 = vunpack.c.l.b16 %v1165
        %v1563 = vunpack.c.l.b16 %v1166
        %v1564 = vunpack.c.l.b16 %v1167
        %v1565 = vunpack.c.l.b16 %v1168
        %v1566 = vunpack.c.l.b16 %v1169
        %v1567 = vunpack.c.l.b16 %v1170
        %v1568 = vunpack.c.l.b16 %v1171
        %v1569 = vunpack.c.l.b16 %v1172
        %v1570 = vunpack.c.l.b16 %v1173
        %v1571 = vunpack.c.l.b16 %v1174
        %v1572 = vunpack.c.l.b16 %v1175
        %v1573 = vunpack.c.l.b16 %v1176
        %v1574 = vunpack.c.l.b16 %v1177
        %v1575 = vunpack.c.l.b16 %v1178
        %v1576 = vunpack.c.l.b16 %v1179
        %v1577 = vunpack.c.l.b16 %v1180
        %v1578 = vunpack.c.l.b16 %v1181
        %v1579 = vunpack.c.l.b16 %v1182
        %v1580 = vunpack.c.l.b16 %v1183
        %v1581 = vunpack.c.l.b16 %v1184
        %v1582 = vunpack.c.l.b16 %v1185
        %v1583 = vunpack.c.l.b16 %v1186
        %v1584 = vunpack.c.l.b16 %v1187
        %v1585 = vunpack.c.l.b16 %v1188
        %v1586 = vunpack.c.l.b16 %v1189
        %v1587 = vpack.c.b16 %v1556, %v1555
        %v1588 = vpack.c.b16 %v1558, %v1557
        %v1589 = vpack.c.b16 %v1560, %v1559
        %v1590 = vpack.c.b16 %v1562, %v1561
        %v1591 = vpack.c.b16 %v1564, %v1563
        %v1592 = vpack.c.b16 %v1566, %v1565
        %v1593 = vpack.c.b16 %v1568, %v1567
        %v1594 = vpack.c.b16 %v1570, %v1569
        %v1595 = vpack.c.b16 %v1572, %v1571
        %v1596 = vpack.c.b16 %v1574, %v1573
        %v1597 = vpack.c.b16 %v1576, %v1575
        %v1598 = vpack.c.b16 %v1578, %v1577
        %v1599 = vpack.c.b16 %v1580, %v1579
        %v1600 = vpack.c.b16 %v1582, %v1581
        %v1601 = vpack.c.b16 %v1584, %v1583
        %v1602 = vpack.c.b16 %v1586, %v1585
        %1619 = vmatpush.bf16.msra.mxu0 %v1594
        %1620 = vmatpush.bf16.msra.mxu0 %v1593
        %1621 = vmatpush.bf16.msra.mxu0 %v1592
        %1622 = vmatpush.bf16.msra.mxu0 %v1591
        %1623 = vmatpush.bf16.msra.mxu0 %v1590
        %1624 = vmatpush.bf16.msra.mxu0 %v1589
        %1625 = vmatpush.bf16.msra.mxu0 %v1588
        %1626 = vmatpush.bf16.msra.mxu0 %v1587
        %1627 = vmatmul.bf16.gmra.mxu0 %v1518
        %v1628 = vpop.f32.mrf.mxu0
        %v1629 = vadd.f32 %v1521, %v1628
        %v1630 = vpop.f32.mrf.mxu0
        %v1631 = vadd.f32 %v1521, %v1630
        %1632 = vdwg.mxu0
        %1633 = vmatpush.bf16.msra.mxu0 %v1602
        %1634 = vmatpush.bf16.msra.mxu0 %v1601
        %1635 = vmatpush.bf16.msra.mxu0 %v1600
        %1636 = vmatpush.bf16.msra.mxu0 %v1599
        %1637 = vmatpush.bf16.msra.mxu0 %v1598
        %1638 = vmatpush.bf16.msra.mxu0 %v1597
        %1639 = vmatpush.bf16.msra.mxu0 %v1596
        %1640 = vmatpush.bf16.msra.mxu0 %v1595
        %1641 = vmatmul.bf16.gmra.mxu0 %v1519
        %v1642 = vpop.f32.mrf.mxu0
        %v1643 = vadd.f32 %v1629, %v1642
        %v1644 = vpop.f32.mrf.mxu0
        %v1645 = vadd.f32 %v1631, %v1644
        %1646 = vdwg.mxu0
        %v1647 = vmul.f32 %v1643, 0.5
        %v1648 = vmul.f32 %v1645, 0.5
        %v1649 = vadd.f32 %v1297, %v1647
        %v1650 = vadd.f32 %v1298, %v1648
        %v1651 = vsel %vm1299, %v1649, 0.0
        %1652 = vadd.xlane.f32.xlu0 %v1651
        %v1653 = vpop.xlane.xlu0 %1652
        %v1654 = vsel %vm1299, %v1650, 0.0
        %1655 = vadd.xlane.f32.xlu0 %v1654
        %v1656 = vpop.xlane.xlu0 %1655
        %v1657 = vmul.f32 %v1653, %v1312
        %v1658 = vmul.f32 %v1656, %v1312
        %v1659 = vsub.f32 %v1649, %v1657
        %v1660 = vsub.f32 %v1650, %v1658
        %v1661 = vmul.f32 %v1659, %v1659
        %v1662 = vmul.f32 %v1660, %v1660
        %v1663 = vsel %vm1299, %v1661, 0.0
        %1664 = vadd.xlane.f32.xlu0 %v1663
        %v1665 = vpop.xlane.xlu0 %1664
        %v1666 = vsel %vm1299, %v1662, 0.0
        %1667 = vadd.xlane.f32.xlu0 %v1666
        %v1668 = vpop.xlane.xlu0 %1667
        %v1669 = vmul.f32 %v1665, %v1312
        %v1670 = vmul.f32 %v1668, %v1312
        %v1671 = vadd.f32 %v1669, 1e-05
        %v1672 = vadd.f32 %v1670, 1e-05
        %v1673 = vrsqrt.pop %v1671
        %v1674 = vmul.f32 %v1673, %v1671
        %v1675 = vmul.f32 %v1674, %v1673
        %v1676 = vmul.f32 0.5, %v1675
        %v1677 = vsub.f32 1.5, %v1676
        %v1678 = vmul.f32 %v1673, %v1677
        %vm1679 = vweird.f32 %v1671
        %vm1680 = vweird.f32 %v1673
        %vm1681 = vmor %vm1679, %vm1680
        %v1682 = vsel %vm1681, %v1673, %v1678
        %v1683 = vrsqrt.pop %v1672
        %v1684 = vmul.f32 %v1683, %v1672
        %v1685 = vmul.f32 %v1684, %v1683
        %v1686 = vmul.f32 0.5, %v1685
        %v1687 = vsub.f32 1.5, %v1686
        %v1688 = vmul.f32 %v1683, %v1687
        %vm1689 = vweird.f32 %v1672
        %vm1690 = vweird.f32 %v1683
        %vm1691 = vmor %vm1689, %vm1690
        %v1692 = vsel %vm1691, %v1683, %v1688
        %v1693 = vmul.f32 %v1659, %v1682
        %v1694 = vmul.f32 %v1660, %v1692
        %v1696 = vperm.slane %v1191, 0
        %v1698 = vmul.f32 %v1693, %v1696
        %v1699 = vmul.f32 %v1694, %v1696
        %v1701 = vperm.slane %v1192, 0
        %v1703 = vadd.f32 %v1698, %v1701
        %v1704 = vadd.f32 %v1699, %v1701
        %v1705 = vpack.c.bf16 %v1704, %v1703
        %v1707 = vperm.slane %v1201, 0
        %v1717 = vunpack.c.l.b16 %v1193
        %v1718 = vunpack.c.l.b16 %v1194
        %v1719 = vunpack.c.l.b16 %v1195
        %v1720 = vunpack.c.l.b16 %v1196
        %v1721 = vunpack.c.l.b16 %v1197
        %v1722 = vunpack.c.l.b16 %v1198
        %v1723 = vunpack.c.l.b16 %v1199
        %v1724 = vunpack.c.l.b16 %v1200
        %v1725 = vpack.c.b16 %v1718, %v1717
        %v1726 = vpack.c.b16 %v1720, %v1719
        %v1727 = vpack.c.b16 %v1722, %v1721
        %v1728 = vpack.c.b16 %v1724, %v1723
        %v1734 = vsel %vm1299, %v1705, 0
        %1736 = vmatpush.bf16.msra.mxu0 0
        %1737 = vmatpush.bf16.msra.mxu0 0
        %1738 = vmatpush.bf16.msra.mxu0 0
        %1739 = vmatpush.bf16.msra.mxu0 0
        %1740 = vmatpush.bf16.msra.mxu0 %v1728
        %1741 = vmatpush.bf16.msra.mxu0 %v1727
        %1742 = vmatpush.bf16.msra.mxu0 %v1726
        %1743 = vmatpush.bf16.msra.mxu0 %v1725
        %1744 = vmatmul.bf16.gmra.mxu0 %v1734
        %v1745 = vpop.f32.mrf.mxu0
        %v1746 = vadd.f32 %v1707, %v1745
        %v1747 = vpop.f32.mrf.mxu0
        %v1748 = vadd.f32 %v1707, %v1747
        %1749 = vdwg.mxu0
        %v1751 = vperm.slane %v1210, 0
        %v1761 = vunpack.c.l.b16 %v1202
        %v1762 = vunpack.c.l.b16 %v1203
        %v1763 = vunpack.c.l.b16 %v1204
        %v1764 = vunpack.c.l.b16 %v1205
        %v1765 = vunpack.c.l.b16 %v1206
        %v1766 = vunpack.c.l.b16 %v1207
        %v1767 = vunpack.c.l.b16 %v1208
        %v1768 = vunpack.c.l.b16 %v1209
        %v1769 = vpack.c.b16 %v1762, %v1761
        %v1770 = vpack.c.b16 %v1764, %v1763
        %v1771 = vpack.c.b16 %v1766, %v1765
        %v1772 = vpack.c.b16 %v1768, %v1767
        %1777 = vmatpush.bf16.msra.mxu0 0
        %1778 = vmatpush.bf16.msra.mxu0 0
        %1779 = vmatpush.bf16.msra.mxu0 0
        %1780 = vmatpush.bf16.msra.mxu0 0
        %1781 = vmatpush.bf16.msra.mxu0 %v1772
        %1782 = vmatpush.bf16.msra.mxu0 %v1771
        %1783 = vmatpush.bf16.msra.mxu0 %v1770
        %1784 = vmatpush.bf16.msra.mxu0 %v1769
        %1785 = vmatmul.bf16.gmra.mxu0 %v1734
        %v1786 = vpop.f32.mrf.mxu0
        %v1787 = vadd.f32 %v1751, %v1786
        %v1788 = vpop.f32.mrf.mxu0
        %v1789 = vadd.f32 %v1751, %v1788
        %1790 = vdwg.mxu0
        %v1792 = vperm.slane %v1219, 0
        %v1802 = vunpack.c.l.b16 %v1211
        %v1803 = vunpack.c.l.b16 %v1212
        %v1804 = vunpack.c.l.b16 %v1213
        %v1805 = vunpack.c.l.b16 %v1214
        %v1806 = vunpack.c.l.b16 %v1215
        %v1807 = vunpack.c.l.b16 %v1216
        %v1808 = vunpack.c.l.b16 %v1217
        %v1809 = vunpack.c.l.b16 %v1218
        %v1810 = vpack.c.b16 %v1803, %v1802
        %v1811 = vpack.c.b16 %v1805, %v1804
        %v1812 = vpack.c.b16 %v1807, %v1806
        %v1813 = vpack.c.b16 %v1809, %v1808
        %1818 = vmatpush.bf16.msra.mxu0 0
        %1819 = vmatpush.bf16.msra.mxu0 0
        %1820 = vmatpush.bf16.msra.mxu0 0
        %1821 = vmatpush.bf16.msra.mxu0 0
        %1822 = vmatpush.bf16.msra.mxu0 %v1813
        %1823 = vmatpush.bf16.msra.mxu0 %v1812
        %1824 = vmatpush.bf16.msra.mxu0 %v1811
        %1825 = vmatpush.bf16.msra.mxu0 %v1810
        %1826 = vmatmul.bf16.gmra.mxu0 %v1734
        %v1827 = vpop.f32.mrf.mxu0
        %v1828 = vadd.f32 %v1792, %v1827
        %v1829 = vpop.f32.mrf.mxu0
        %v1830 = vadd.f32 %v1792, %v1829
        %1831 = vdwg.mxu0
        %1834 = vrot.lane.b32.xlu0 %v1746, 112
        %v1835 = vpop.permute.xlu0 %1834
        %1836 = vrot.lane.b32.xlu0 %v1748, 112
        %v1837 = vpop.permute.xlu0 %1836
        %1840 = vrot.lane.b32.xlu0 %v1746, 96
        %v1841 = vpop.permute.xlu0 %1840
        %1842 = vrot.lane.b32.xlu0 %v1748, 96
        %v1843 = vpop.permute.xlu0 %1842
        %1846 = vrot.lane.b32.xlu0 %v1746, 80
        %v1847 = vpop.permute.xlu0 %1846
        %1848 = vrot.lane.b32.xlu0 %v1748, 80
        %v1849 = vpop.permute.xlu0 %1848
        %v1852 = vpack.c.bf16 %v1746, %v1746
        %v1853 = vpack.c.bf16 %v1748, %v1748
        %v1854 = vpack.c.bf16 %v1835, %v1835
        %v1855 = vpack.c.bf16 %v1837, %v1837
        %v1856 = vpack.c.bf16 %v1841, %v1841
        %v1857 = vpack.c.bf16 %v1843, %v1843
        %v1858 = vpack.c.bf16 %v1847, %v1847
        %v1859 = vpack.c.bf16 %v1849, %v1849
        %1862 = vrot.lane.b32.xlu0 %v1787, 112
        %v1863 = vpop.permute.xlu0 %1862
        %1864 = vrot.lane.b32.xlu0 %v1789, 112
        %v1865 = vpop.permute.xlu0 %1864
        %1868 = vrot.lane.b32.xlu0 %v1787, 96
        %v1869 = vpop.permute.xlu0 %1868
        %1870 = vrot.lane.b32.xlu0 %v1789, 96
        %v1871 = vpop.permute.xlu0 %1870
        %1874 = vrot.lane.b32.xlu0 %v1787, 80
        %v1875 = vpop.permute.xlu0 %1874
        %1876 = vrot.lane.b32.xlu0 %v1789, 80
        %v1877 = vpop.permute.xlu0 %1876
        %v1880 = vpack.c.bf16 %v1787, %v1787
        %v1881 = vpack.c.bf16 %v1789, %v1789
        %v1882 = vpack.c.bf16 %v1863, %v1863
        %v1883 = vpack.c.bf16 %v1865, %v1865
        %v1884 = vpack.c.bf16 %v1869, %v1869
        %v1885 = vpack.c.bf16 %v1871, %v1871
        %v1886 = vpack.c.bf16 %v1875, %v1875
        %v1887 = vpack.c.bf16 %v1877, %v1877
        %1890 = vrot.lane.b32.xlu0 %v1828, 112
        %v1891 = vpop.permute.xlu0 %1890
        %1892 = vrot.lane.b32.xlu0 %v1830, 112
        %v1893 = vpop.permute.xlu0 %1892
        %1896 = vrot.lane.b32.xlu0 %v1828, 96
        %v1897 = vpop.permute.xlu0 %1896
        %1898 = vrot.lane.b32.xlu0 %v1830, 96
        %v1899 = vpop.permute.xlu0 %1898
        %1902 = vrot.lane.b32.xlu0 %v1828, 80
        %v1903 = vpop.permute.xlu0 %1902
        %1904 = vrot.lane.b32.xlu0 %v1830, 80
        %v1905 = vpop.permute.xlu0 %1904
        %v1908 = vpack.c.bf16 %v1828, %v1828
        %v1909 = vpack.c.bf16 %v1830, %v1830
        %v1910 = vpack.c.bf16 %v1891, %v1891
        %v1911 = vpack.c.bf16 %v1893, %v1893
        %v1912 = vpack.c.bf16 %v1897, %v1897
        %v1913 = vpack.c.bf16 %v1899, %v1899
        %v1914 = vpack.c.bf16 %v1903, %v1903
        %v1915 = vpack.c.bf16 %v1905, %v1905
        %v1918 = vunpack.c.l.b16 %v1852
        %v1919 = vunpack.c.l.b16 %v1853
        %v1920 = vpack.c.b16 %v1919, %v1918
        %v1923 = vunpack.c.l.b16 %v1880
        %v1924 = vunpack.c.l.b16 %v1881
        %v1925 = vpack.c.b16 %v1924, %v1923
        %vm1926 = vcmask 130048
        %v1928 = vsel %vm1926, %v1920, 0
        %v1931 = vsel %vm1926, %v1925, 0
        %1933 = vmatpush.bf16.xpose.msra.mxu0 0
        %1934 = vmatpush.bf16.xpose.msra.mxu0 0
        %1935 = vmatpush.bf16.xpose.msra.mxu0 0
        %1936 = vmatpush.bf16.xpose.msra.mxu0 0
        %1937 = vmatpush.bf16.xpose.msra.mxu0 0
        %1938 = vmatpush.bf16.xpose.msra.mxu0 0
        %1939 = vmatpush.bf16.xpose.msra.mxu0 0
        %1940 = vmatpush.bf16.xpose.msra.mxu0 %v1931
        %1941 = vmatmul.bf16.gmra.mxu0 %v1928
        %v1942 = vpop.f32.mrf.mxu0
        %v1943 = vadd.f32 0.0, %v1942
        %v1944 = vpop.f32.mrf.mxu0
        %v1945 = vadd.f32 0.0, %v1944
        %1946 = vdwg.mxu0
        %v1949 = vunpack.c.l.b16 %v1854
        %v1950 = vunpack.c.l.b16 %v1855
        %v1951 = vpack.c.b16 %v1950, %v1949
        %v1954 = vunpack.c.l.b16 %v1882
        %v1955 = vunpack.c.l.b16 %v1883
        %v1956 = vpack.c.b16 %v1955, %v1954
        %v1958 = vsel %vm1926, %v1951, 0
        %v1961 = vsel %vm1926, %v1956, 0
        %1963 = vmatpush.bf16.xpose.msra.mxu0 0
        %1964 = vmatpush.bf16.xpose.msra.mxu0 0
        %1965 = vmatpush.bf16.xpose.msra.mxu0 0
        %1966 = vmatpush.bf16.xpose.msra.mxu0 0
        %1967 = vmatpush.bf16.xpose.msra.mxu0 0
        %1968 = vmatpush.bf16.xpose.msra.mxu0 0
        %1969 = vmatpush.bf16.xpose.msra.mxu0 0
        %1970 = vmatpush.bf16.xpose.msra.mxu0 %v1961
        %1971 = vmatmul.bf16.gmra.mxu0 %v1958
        %v1972 = vpop.f32.mrf.mxu0
        %v1973 = vadd.f32 0.0, %v1972
        %v1974 = vpop.f32.mrf.mxu0
        %v1975 = vadd.f32 0.0, %v1974
        %1976 = vdwg.mxu0
        %v1979 = vunpack.c.l.b16 %v1856
        %v1980 = vunpack.c.l.b16 %v1857
        %v1981 = vpack.c.b16 %v1980, %v1979
        %v1984 = vunpack.c.l.b16 %v1884
        %v1985 = vunpack.c.l.b16 %v1885
        %v1986 = vpack.c.b16 %v1985, %v1984
        %v1988 = vsel %vm1926, %v1981, 0
        %v1991 = vsel %vm1926, %v1986, 0
        %1993 = vmatpush.bf16.xpose.msra.mxu0 0
        %1994 = vmatpush.bf16.xpose.msra.mxu0 0
        %1995 = vmatpush.bf16.xpose.msra.mxu0 0
        %1996 = vmatpush.bf16.xpose.msra.mxu0 0
        %1997 = vmatpush.bf16.xpose.msra.mxu0 0
        %1998 = vmatpush.bf16.xpose.msra.mxu0 0
        %1999 = vmatpush.bf16.xpose.msra.mxu0 0
        %2000 = vmatpush.bf16.xpose.msra.mxu0 %v1991
        %2001 = vmatmul.bf16.gmra.mxu0 %v1988
        %v2002 = vpop.f32.mrf.mxu0
        %v2003 = vadd.f32 0.0, %v2002
        %v2004 = vpop.f32.mrf.mxu0
        %v2005 = vadd.f32 0.0, %v2004
        %2006 = vdwg.mxu0
        %v2009 = vunpack.c.l.b16 %v1858
        %v2010 = vunpack.c.l.b16 %v1859
        %v2011 = vpack.c.b16 %v2010, %v2009
        %v2014 = vunpack.c.l.b16 %v1886
        %v2015 = vunpack.c.l.b16 %v1887
        %v2016 = vpack.c.b16 %v2015, %v2014
        %v2018 = vsel %vm1926, %v2011, 0
        %v2021 = vsel %vm1926, %v2016, 0
        %2023 = vmatpush.bf16.xpose.msra.mxu0 0
        %2024 = vmatpush.bf16.xpose.msra.mxu0 0
        %2025 = vmatpush.bf16.xpose.msra.mxu0 0
        %2026 = vmatpush.bf16.xpose.msra.mxu0 0
        %2027 = vmatpush.bf16.xpose.msra.mxu0 0
        %2028 = vmatpush.bf16.xpose.msra.mxu0 0
        %2029 = vmatpush.bf16.xpose.msra.mxu0 0
        %2030 = vmatpush.bf16.xpose.msra.mxu0 %v2021
        %2031 = vmatmul.bf16.gmra.mxu0 %v2018
        %v2032 = vpop.f32.mrf.mxu0
        %v2033 = vadd.f32 0.0, %v2032
        %v2034 = vpop.f32.mrf.mxu0
        %v2035 = vadd.f32 0.0, %v2034
        %2036 = vdwg.mxu0
        %v2037 = vmul.f32 %v1943, 0.25
        %v2038 = vmul.f32 %v1945, 0.25
        %v2039 = vmul.f32 %v1973, 0.25
        %v2040 = vmul.f32 %v1975, 0.25
        %v2041 = vmul.f32 %v2003, 0.25
        %v2042 = vmul.f32 %v2005, 0.25
        %v2043 = vmul.f32 %v2033, 0.25
        %v2044 = vmul.f32 %v2035, 0.25
        %v2045 = vsel %vm1926, %v2037, -inf
        %2046 = vmax.xlane.f32.xlu0 %v2045
        %v2047 = vpop.xlane.xlu0 %2046
        %v2048 = vsel %vm1926, %v2038, -inf
        %2049 = vmax.xlane.f32.xlu0 %v2048
        %v2050 = vpop.xlane.xlu0 %2049
        %v2051 = vsel %vm1926, %v2039, -inf
        %2052 = vmax.xlane.f32.xlu0 %v2051
        %v2053 = vpop.xlane.xlu0 %2052
        %v2054 = vsel %vm1926, %v2040, -inf
        %2055 = vmax.xlane.f32.xlu0 %v2054
        %v2056 = vpop.xlane.xlu0 %2055
        %v2057 = vsel %vm1926, %v2041, -inf
        %2058 = vmax.xlane.f32.xlu0 %v2057
        %v2059 = vpop.xlane.xlu0 %2058
        %v2060 = vsel %vm1926, %v2042, -inf
        %2061 = vmax.xlane.f32.xlu0 %v2060
        %v2062 = vpop.xlane.xlu0 %2061
        %v2063 = vsel %vm1926, %v2043, -inf
        %2064 = vmax.xlane.f32.xlu0 %v2063
        %v2065 = vpop.xlane.xlu0 %2064
        %v2066 = vsel %vm1926, %v2044, -inf
        %2067 = vmax.xlane.f32.xlu0 %v2066
        %v2068 = vpop.xlane.xlu0 %2067
        %v2069 = vsub.f32 %v2037, %v2047
        %v2070 = vsub.f32 %v2038, %v2050
        %v2071 = vsub.f32 %v2039, %v2053
        %v2072 = vsub.f32 %v2040, %v2056
        %v2073 = vsub.f32 %v2041, %v2059
        %v2074 = vsub.f32 %v2042, %v2062
        %v2075 = vsub.f32 %v2043, %v2065
        %v2076 = vsub.f32 %v2044, %v2068
        %v2077 = vmul.f32 %v2069, 1.442695
        %v2078 = vpow.pop %v2077
        %v2079 = vmul.f32 %v2070, 1.442695
        %v2080 = vpow.pop %v2079
        %v2081 = vmul.f32 %v2071, 1.442695
        %v2082 = vpow.pop %v2081
        %v2083 = vmul.f32 %v2072, 1.442695
        %v2084 = vpow.pop %v2083
        %v2085 = vmul.f32 %v2073, 1.442695
        %v2086 = vpow.pop %v2085
        %v2087 = vmul.f32 %v2074, 1.442695
        %v2088 = vpow.pop %v2087
        %v2089 = vmul.f32 %v2075, 1.442695
        %v2090 = vpow.pop %v2089
        %v2091 = vmul.f32 %v2076, 1.442695
        %v2092 = vpow.pop %v2091
        %v2093 = vsel %vm1926, %v2078, 0.0
        %2094 = vadd.xlane.f32.xlu0 %v2093
        %v2095 = vpop.xlane.xlu0 %2094
        %v2096 = vsel %vm1926, %v2080, 0.0
        %2097 = vadd.xlane.f32.xlu0 %v2096
        %v2098 = vpop.xlane.xlu0 %2097
        %v2099 = vsel %vm1926, %v2082, 0.0
        %2100 = vadd.xlane.f32.xlu0 %v2099
        %v2101 = vpop.xlane.xlu0 %2100
        %v2102 = vsel %vm1926, %v2084, 0.0
        %2103 = vadd.xlane.f32.xlu0 %v2102
        %v2104 = vpop.xlane.xlu0 %2103
        %v2105 = vsel %vm1926, %v2086, 0.0
        %2106 = vadd.xlane.f32.xlu0 %v2105
        %v2107 = vpop.xlane.xlu0 %2106
        %v2108 = vsel %vm1926, %v2088, 0.0
        %2109 = vadd.xlane.f32.xlu0 %v2108
        %v2110 = vpop.xlane.xlu0 %2109
        %v2111 = vsel %vm1926, %v2090, 0.0
        %2112 = vadd.xlane.f32.xlu0 %v2111
        %v2113 = vpop.xlane.xlu0 %2112
        %v2114 = vsel %vm1926, %v2092, 0.0
        %2115 = vadd.xlane.f32.xlu0 %v2114
        %v2116 = vpop.xlane.xlu0 %2115
        %v2117 = vrcp.pop %v2095
        %v2118 = vrcp.pop %v2098
        %v2119 = vrcp.pop %v2101
        %v2120 = vrcp.pop %v2104
        %v2121 = vrcp.pop %v2107
        %v2122 = vrcp.pop %v2110
        %v2123 = vrcp.pop %v2113
        %v2124 = vrcp.pop %v2116
        %v2125 = vmul.f32 %v2078, %v2117
        %v2126 = vmul.f32 %v2080, %v2118
        %v2127 = vmul.f32 %v2082, %v2119
        %v2128 = vmul.f32 %v2084, %v2120
        %v2129 = vmul.f32 %v2086, %v2121
        %v2130 = vmul.f32 %v2088, %v2122
        %v2131 = vmul.f32 %v2090, %v2123
        %v2132 = vmul.f32 %v2092, %v2124
        %v2133 = vpack.c.bf16 %v2125, %v2125
        %v2134 = vpack.c.bf16 %v2126, %v2126
        %v2135 = vpack.c.bf16 %v2127, %v2127
        %v2136 = vpack.c.bf16 %v2128, %v2128
        %v2137 = vpack.c.bf16 %v2129, %v2129
        %v2138 = vpack.c.bf16 %v2130, %v2130
        %v2139 = vpack.c.bf16 %v2131, %v2131
        %v2140 = vpack.c.bf16 %v2132, %v2132
        %v2143 = vunpack.c.l.b16 %v2133
        %v2144 = vunpack.c.l.b16 %v2134
        %v2145 = vpack.c.b16 %v2144, %v2143
        %v2148 = vunpack.c.l.b16 %v1908
        %v2149 = vunpack.c.l.b16 %v1909
        %v2150 = vpack.c.b16 %v2149, %v2148
        %v2153 = vsel %vm1926, %v2145, 0
        %2155 = vmatpush.bf16.msra.mxu0 0
        %2156 = vmatpush.bf16.msra.mxu0 0
        %2157 = vmatpush.bf16.msra.mxu0 0
        %2158 = vmatpush.bf16.msra.mxu0 0
        %2159 = vmatpush.bf16.msra.mxu0 0
        %2160 = vmatpush.bf16.msra.mxu0 0
        %2161 = vmatpush.bf16.msra.mxu0 0
        %2162 = vmatpush.bf16.msra.mxu0 %v2150
        %2163 = vmatmul.bf16.gmra.mxu0 %v2153
        %v2164 = vpop.f32.mrf.mxu0
        %v2165 = vadd.f32 0.0, %v2164
        %v2166 = vpop.f32.mrf.mxu0
        %v2167 = vadd.f32 0.0, %v2166
        %2168 = vdwg.mxu0
        %v2171 = vunpack.c.l.b16 %v2135
        %v2172 = vunpack.c.l.b16 %v2136
        %v2173 = vpack.c.b16 %v2172, %v2171
        %v2176 = vunpack.c.l.b16 %v1910
        %v2177 = vunpack.c.l.b16 %v1911
        %v2178 = vpack.c.b16 %v2177, %v2176
        %v2181 = vsel %vm1926, %v2173, 0
        %2183 = vmatpush.bf16.msra.mxu0 0
        %2184 = vmatpush.bf16.msra.mxu0 0
        %2185 = vmatpush.bf16.msra.mxu0 0
        %2186 = vmatpush.bf16.msra.mxu0 0
        %2187 = vmatpush.bf16.msra.mxu0 0
        %2188 = vmatpush.bf16.msra.mxu0 0
        %2189 = vmatpush.bf16.msra.mxu0 0
        %2190 = vmatpush.bf16.msra.mxu0 %v2178
        %2191 = vmatmul.bf16.gmra.mxu0 %v2181
        %v2192 = vpop.f32.mrf.mxu0
        %v2193 = vadd.f32 0.0, %v2192
        %v2194 = vpop.f32.mrf.mxu0
        %v2195 = vadd.f32 0.0, %v2194
        %2196 = vdwg.mxu0
        %v2199 = vunpack.c.l.b16 %v2137
        %v2200 = vunpack.c.l.b16 %v2138
        %v2201 = vpack.c.b16 %v2200, %v2199
        %v2204 = vunpack.c.l.b16 %v1912
        %v2205 = vunpack.c.l.b16 %v1913
        %v2206 = vpack.c.b16 %v2205, %v2204
        %v2209 = vsel %vm1926, %v2201, 0
        %2211 = vmatpush.bf16.msra.mxu0 0
        %2212 = vmatpush.bf16.msra.mxu0 0
        %2213 = vmatpush.bf16.msra.mxu0 0
        %2214 = vmatpush.bf16.msra.mxu0 0
        %2215 = vmatpush.bf16.msra.mxu0 0
        %2216 = vmatpush.bf16.msra.mxu0 0
        %2217 = vmatpush.bf16.msra.mxu0 0
        %2218 = vmatpush.bf16.msra.mxu0 %v2206
        %2219 = vmatmul.bf16.gmra.mxu0 %v2209
        %v2220 = vpop.f32.mrf.mxu0
        %v2221 = vadd.f32 0.0, %v2220
        %v2222 = vpop.f32.mrf.mxu0
        %v2223 = vadd.f32 0.0, %v2222
        %2224 = vdwg.mxu0
        %v2227 = vunpack.c.l.b16 %v2139
        %v2228 = vunpack.c.l.b16 %v2140
        %v2229 = vpack.c.b16 %v2228, %v2227
        %v2232 = vunpack.c.l.b16 %v1914
        %v2233 = vunpack.c.l.b16 %v1915
        %v2234 = vpack.c.b16 %v2233, %v2232
        %v2237 = vsel %vm1926, %v2229, 0
        %2239 = vmatpush.bf16.msra.mxu0 0
        %2240 = vmatpush.bf16.msra.mxu0 0
        %2241 = vmatpush.bf16.msra.mxu0 0
        %2242 = vmatpush.bf16.msra.mxu0 0
        %2243 = vmatpush.bf16.msra.mxu0 0
        %2244 = vmatpush.bf16.msra.mxu0 0
        %2245 = vmatpush.bf16.msra.mxu0 0
        %2246 = vmatpush.bf16.msra.mxu0 %v2234
        %2247 = vmatmul.bf16.gmra.mxu0 %v2237
        %v2248 = vpop.f32.mrf.mxu0
        %v2249 = vadd.f32 0.0, %v2248
        %v2250 = vpop.f32.mrf.mxu0
        %v2251 = vadd.f32 0.0, %v2250
        %2252 = vdwg.mxu0
        %v2253 = vpack.c.bf16 %v2165, %v2165
        %v2254 = vpack.c.bf16 %v2167, %v2167
        %v2255 = vpack.c.bf16 %v2193, %v2193
        %v2256 = vpack.c.bf16 %v2195, %v2195
        %v2257 = vpack.c.bf16 %v2221, %v2221
        %v2258 = vpack.c.bf16 %v2223, %v2223
        %v2259 = vpack.c.bf16 %v2249, %v2249
        %v2260 = vpack.c.bf16 %v2251, %v2251
        %v2263 = vunpack.c.l.b16 %v2253
        %v2264 = vunpack.c.l.b16 %v2254
        %v2265 = vpack.c.b16 %v2264, %v2263
        %v2268 = vunpack.c.l.b16 %v1220
        %v2269 = vunpack.c.l.b16 %v1221
        %v2270 = vpack.c.b16 %v2269, %v2268
        %v2273 = vsel %vm1926, %v2265, 0
        %2275 = vmatpush.bf16.msra.mxu0 0
        %2276 = vmatpush.bf16.msra.mxu0 0
        %2277 = vmatpush.bf16.msra.mxu0 0
        %2278 = vmatpush.bf16.msra.mxu0 0
        %2279 = vmatpush.bf16.msra.mxu0 0
        %2280 = vmatpush.bf16.msra.mxu0 0
        %2281 = vmatpush.bf16.msra.mxu0 0
        %2282 = vmatpush.bf16.msra.mxu0 %v2270
        %2283 = vmatmul.bf16.gmra.mxu0 %v2273
        %v2284 = vpop.f32.mrf.mxu0
        %v2285 = vadd.f32 0.0, %v2284
        %v2286 = vpop.f32.mrf.mxu0
        %v2287 = vadd.f32 0.0, %v2286
        %2288 = vdwg.mxu0
        %v2291 = vunpack.c.l.b16 %v2255
        %v2292 = vunpack.c.l.b16 %v2256
        %v2293 = vpack.c.b16 %v2292, %v2291
        %v2296 = vunpack.c.l.b16 %v1222
        %v2297 = vunpack.c.l.b16 %v1223
        %v2298 = vpack.c.b16 %v2297, %v2296
        %v2301 = vsel %vm1926, %v2293, 0
        %2303 = vmatpush.bf16.msra.mxu0 0
        %2304 = vmatpush.bf16.msra.mxu0 0
        %2305 = vmatpush.bf16.msra.mxu0 0
        %2306 = vmatpush.bf16.msra.mxu0 0
        %2307 = vmatpush.bf16.msra.mxu0 0
        %2308 = vmatpush.bf16.msra.mxu0 0
        %2309 = vmatpush.bf16.msra.mxu0 0
        %2310 = vmatpush.bf16.msra.mxu0 %v2298
        %2311 = vmatmul.bf16.gmra.mxu0 %v2301
        %v2312 = vpop.f32.mrf.mxu0
        %v2313 = vadd.f32 0.0, %v2312
        %v2314 = vpop.f32.mrf.mxu0
        %v2315 = vadd.f32 0.0, %v2314
        %2316 = vdwg.mxu0
        %v2319 = vunpack.c.l.b16 %v2257
        %v2320 = vunpack.c.l.b16 %v2258
        %v2321 = vpack.c.b16 %v2320, %v2319
        %v2324 = vunpack.c.l.b16 %v1224
        %v2325 = vunpack.c.l.b16 %v1225
        %v2326 = vpack.c.b16 %v2325, %v2324
        %v2329 = vsel %vm1926, %v2321, 0
        %2331 = vmatpush.bf16.msra.mxu0 0
        %2332 = vmatpush.bf16.msra.mxu0 0
        %2333 = vmatpush.bf16.msra.mxu0 0
        %2334 = vmatpush.bf16.msra.mxu0 0
        %2335 = vmatpush.bf16.msra.mxu0 0
        %2336 = vmatpush.bf16.msra.mxu0 0
        %2337 = vmatpush.bf16.msra.mxu0 0
        %2338 = vmatpush.bf16.msra.mxu0 %v2326
        %2339 = vmatmul.bf16.gmra.mxu0 %v2329
        %v2340 = vpop.f32.mrf.mxu0
        %v2341 = vadd.f32 0.0, %v2340
        %v2342 = vpop.f32.mrf.mxu0
        %v2343 = vadd.f32 0.0, %v2342
        %2344 = vdwg.mxu0
        %v2347 = vunpack.c.l.b16 %v2259
        %v2348 = vunpack.c.l.b16 %v2260
        %v2349 = vpack.c.b16 %v2348, %v2347
        %v2352 = vunpack.c.l.b16 %v1226
        %v2353 = vunpack.c.l.b16 %v1227
        %v2354 = vpack.c.b16 %v2353, %v2352
        %v2357 = vsel %vm1926, %v2349, 0
        %2359 = vmatpush.bf16.msra.mxu0 0
        %2360 = vmatpush.bf16.msra.mxu0 0
        %2361 = vmatpush.bf16.msra.mxu0 0
        %2362 = vmatpush.bf16.msra.mxu0 0
        %2363 = vmatpush.bf16.msra.mxu0 0
        %2364 = vmatpush.bf16.msra.mxu0 0
        %2365 = vmatpush.bf16.msra.mxu0 0
        %2366 = vmatpush.bf16.msra.mxu0 %v2354
        %2367 = vmatmul.bf16.gmra.mxu0 %v2357
        %v2368 = vpop.f32.mrf.mxu0
        %v2369 = vadd.f32 0.0, %v2368
        %v2370 = vpop.f32.mrf.mxu0
        %v2371 = vadd.f32 0.0, %v2370
        %2372 = vdwg.mxu0
        %v2373 = vsel %vm1299, %v2285, 0.0
        %v2374 = vsel %vm1299, %v2313, 0.0
        %v2375 = vadd.f32 %v2373, %v2374
        %v2376 = vsel %vm1299, %v2341, 0.0
        %v2377 = vadd.f32 %v2375, %v2376
        %v2378 = vsel %vm1299, %v2369, 0.0
        %v2379 = vadd.f32 %v2377, %v2378
        %v2380 = vsel %vm1299, %v2287, 0.0
        %v2381 = vsel %vm1299, %v2315, 0.0
        %v2382 = vadd.f32 %v2380, %v2381
        %v2383 = vsel %vm1299, %v2343, 0.0
        %v2384 = vadd.f32 %v2382, %v2383
        %v2385 = vsel %vm1299, %v2371, 0.0
        %v2386 = vadd.f32 %v2384, %v2385
        %v2388 = vperm.slane %v1228, 0
        %v2390 = vadd.f32 %v2379, %v2388
        %v2391 = vadd.f32 %v2386, %v2388
        %v2392 = vadd.f32 %v1649, %v2390
        %v2393 = vadd.f32 %v1650, %v2391
        %v2394 = vsel %vm1299, %v2392, 0.0
        %2395 = vadd.xlane.f32.xlu0 %v2394
        %v2396 = vpop.xlane.xlu0 %2395
        %v2397 = vsel %vm1299, %v2393, 0.0
        %2398 = vadd.xlane.f32.xlu0 %v2397
        %v2399 = vpop.xlane.xlu0 %2398
        %v2400 = vmul.f32 %v2396, %v1312
        %v2401 = vmul.f32 %v2399, %v1312
        %v2402 = vsub.f32 %v2392, %v2400
        %v2403 = vsub.f32 %v2393, %v2401
        %v2404 = vmul.f32 %v2402, %v2402
        %v2405 = vmul.f32 %v2403, %v2403
        %v2406 = vsel %vm1299, %v2404, 0.0
        %2407 = vadd.xlane.f32.xlu0 %v2406
        %v2408 = vpop.xlane.xlu0 %2407
        %v2409 = vsel %vm1299, %v2405, 0.0
        %2410 = vadd.xlane.f32.xlu0 %v2409
        %v2411 = vpop.xlane.xlu0 %2410
        %v2412 = vmul.f32 %v2408, %v1312
        %v2413 = vmul.f32 %v2411, %v1312
        %v2414 = vadd.f32 %v2412, 1e-05
        %v2415 = vadd.f32 %v2413, 1e-05
        %v2416 = vrsqrt.pop %v2414
        %v2417 = vmul.f32 %v2416, %v2414
        %v2418 = vmul.f32 %v2417, %v2416
        %v2419 = vmul.f32 0.5, %v2418
        %v2420 = vsub.f32 1.5, %v2419
        %v2421 = vmul.f32 %v2416, %v2420
        %vm2422 = vweird.f32 %v2414
        %vm2423 = vweird.f32 %v2416
        %vm2424 = vmor %vm2422, %vm2423
        %v2425 = vsel %vm2424, %v2416, %v2421
        %v2426 = vrsqrt.pop %v2415
        %v2427 = vmul.f32 %v2426, %v2415
        %v2428 = vmul.f32 %v2427, %v2426
        %v2429 = vmul.f32 0.5, %v2428
        %v2430 = vsub.f32 1.5, %v2429
        %v2431 = vmul.f32 %v2426, %v2430
        %vm2432 = vweird.f32 %v2415
        %vm2433 = vweird.f32 %v2426
        %vm2434 = vmor %vm2432, %vm2433
        %v2435 = vsel %vm2434, %v2426, %v2431
        %v2436 = vmul.f32 %v2402, %v2425
        %v2437 = vmul.f32 %v2403, %v2435
        %v2439 = vperm.slane %v1229, 0
        %v2441 = vmul.f32 %v2436, %v2439
        %v2442 = vmul.f32 %v2437, %v2439
        %v2444 = vperm.slane %v1230, 0
        %v2446 = vadd.f32 %v2441, %v2444
        %v2447 = vadd.f32 %v2442, %v2444
        %v2448 = vpack.c.bf16 %v2447, %v2446
        %v2450 = vperm.slane %v1239, 0
        %v2460 = vunpack.c.l.b16 %v1231
        %v2461 = vunpack.c.l.b16 %v1232
        %v2462 = vunpack.c.l.b16 %v1233
        %v2463 = vunpack.c.l.b16 %v1234
        %v2464 = vunpack.c.l.b16 %v1235
        %v2465 = vunpack.c.l.b16 %v1236
        %v2466 = vunpack.c.l.b16 %v1237
        %v2467 = vunpack.c.l.b16 %v1238
        %v2468 = vpack.c.b16 %v2461, %v2460
        %v2469 = vpack.c.b16 %v2463, %v2462
        %v2470 = vpack.c.b16 %v2465, %v2464
        %v2471 = vpack.c.b16 %v2467, %v2466
        %v2477 = vsel %vm1299, %v2448, 0
        %2479 = vmatpush.bf16.msra.mxu0 0
        %2480 = vmatpush.bf16.msra.mxu0 0
        %2481 = vmatpush.bf16.msra.mxu0 0
        %2482 = vmatpush.bf16.msra.mxu0 0
        %2483 = vmatpush.bf16.msra.mxu0 %v2471
        %2484 = vmatpush.bf16.msra.mxu0 %v2470
        %2485 = vmatpush.bf16.msra.mxu0 %v2469
        %2486 = vmatpush.bf16.msra.mxu0 %v2468
        %2487 = vmatmul.bf16.gmra.mxu0 %v2477
        %v2488 = vpop.f32.mrf.mxu0
        %v2489 = vadd.f32 %v2450, %v2488
        %v2490 = vpop.f32.mrf.mxu0
        %v2491 = vadd.f32 %v2450, %v2490
        %2492 = vdwg.mxu0
        %v2493 = vxor.u32 %v2489, 2147483648
        %v2494 = vxor.u32 %v2491, 2147483648
        %v2495 = vmul.f32 %v2493, 1.442695
        %v2496 = vpow.pop %v2495
        %v2497 = vmul.f32 %v2494, 1.442695
        %v2498 = vpow.pop %v2497
        %v2499 = vadd.f32 %v2496, 1.0
        %v2500 = vadd.f32 %v2498, 1.0
        %v2501 = vrcp.pop %v2499
        %v2502 = vmul.f32 %v2499, %v2501
        %v2503 = vsub.f32 1.0, %v2502
        %v2504 = vmul.f32 %v2501, %v2503
        %v2505 = vadd.f32 %v2501, %v2504
        %vm2506 = vweird.f32 %v2499
        %vm2507 = vweird.f32 %v2501
        %vm2508 = vmor %vm2506, %vm2507
        %v2509 = vsel %vm2508, %v2501, %v2505
        %v2510 = vand.u32 2147483647, %v2499
        %vm2511 = vcmp.eq.f32.partialorder %v2510, 8.507059e+37
        %v2512 = vand.u32 %v2499, 2147483648
        %v2513 = vor.u32 1.1754944e-38, %v2512
        %v2514 = vsel %vm2511, %v2513, %v2509
        %v2515 = vmul.f32 1.0, %v2514
        %v2516 = vrcp.pop %v2500
        %v2517 = vmul.f32 %v2500, %v2516
        %v2518 = vsub.f32 1.0, %v2517
        %v2519 = vmul.f32 %v2516, %v2518
        %v2520 = vadd.f32 %v2516, %v2519
        %vm2521 = vweird.f32 %v2500
        %vm2522 = vweird.f32 %v2516
        %vm2523 = vmor %vm2521, %vm2522
        %v2524 = vsel %vm2523, %v2516, %v2520
        %v2525 = vand.u32 2147483647, %v2500
        %vm2526 = vcmp.eq.f32.partialorder %v2525, 8.507059e+37
        %v2527 = vand.u32 %v2500, 2147483648
        %v2528 = vor.u32 1.1754944e-38, %v2527
        %v2529 = vsel %vm2526, %v2528, %v2524
        %v2530 = vmul.f32 1.0, %v2529
        %2533 = vrot.lane.b32.xlu0 %v2515, 64
        %v2534 = vpop.permute.xlu0 %2533
        %2535 = vrot.lane.b32.xlu0 %v2530, 64
        %v2536 = vpop.permute.xlu0 %2535
        %v2539 = vmul.f32 %v2489, %v2534
        %v2540 = vmul.f32 %v2491, %v2536
        %v2541 = vlaneseq
        %v2542 = vshrl.u32 %v2541, 7
        %v2543 = vadd.s32 %v2542, 8
        %v2544 = vrot.slane %v2539, 5
        %v2545 = vrot.slane %v2540, 5
        %vm2546 = vcmp.lt.s32.totalorder %v2542, 3
        %v2547 = vsel %vm2546, %v2544, %v2545
        %v2548 = vsel %vm2546, %v2545, %v2544
        %v2549 = vadd.s32 %v2542, 4294967293
        %v2550 = vadd.s32 %v2543, 4294967293
        %vm2551 = vcmp.ge.s32.totalorder %v2549, 0
        %vm2552 = vcmp.ge.s32.totalorder %v2550, 0
        %vm2553 = vcmp.lt.s32.totalorder %v2549, 16
        %vm2554 = vcmp.lt.s32.totalorder %v2550, 16
        %vm2555 = vmand %vm2551, %vm2553
        %vm2556 = vmand %vm2552, %vm2554
        %v2557 = vsel %vm2555, %v2548, 0.0
        %v2558 = vsel %vm2556, %v2547, 0.0
        %v2559 = vperm.slane %v1240, 0
        %v2560 = vmul.f32 %v2557, %v2559
        %v2561 = vmul.f32 %v2558, %v2559
        %v2562 = vadd.f32 %v2560, 0.0
        %v2563 = vadd.f32 %v2561, 0.0
        %v2564 = vrot.slane %v2539, 6
        %v2565 = vrot.slane %v2540, 6
        %vm2566 = vcmp.lt.s32.totalorder %v2542, 2
        %v2567 = vsel %vm2566, %v2564, %v2565
        %v2568 = vsel %vm2566, %v2565, %v2564
        %v2569 = vadd.s32 %v2542, 4294967294
        %v2570 = vadd.s32 %v2543, 4294967294
        %vm2571 = vcmp.ge.s32.totalorder %v2569, 0
        %vm2572 = vcmp.ge.s32.totalorder %v2570, 0
        %vm2573 = vcmp.lt.s32.totalorder %v2569, 16
        %vm2574 = vcmp.lt.s32.totalorder %v2570, 16
        %vm2575 = vmand %vm2571, %vm2573
        %vm2576 = vmand %vm2572, %vm2574
        %v2577 = vsel %vm2575, %v2568, 0.0
        %v2578 = vsel %vm2576, %v2567, 0.0
        %v2579 = vperm.slane %v1240, 1
        %v2580 = vmul.f32 %v2577, %v2579
        %v2581 = vmul.f32 %v2578, %v2579
        %v2582 = vadd.f32 %v2562, %v2580
        %v2583 = vadd.f32 %v2563, %v2581
        %v2584 = vrot.slane %v2539, 7
        %v2585 = vrot.slane %v2540, 7
        %vm2586 = vcmp.lt.s32.totalorder %v2542, 1
        %v2587 = vsel %vm2586, %v2584, %v2585
        %v2588 = vsel %vm2586, %v2585, %v2584
        %v2589 = vadd.s32 %v2542, 4294967295
        %v2590 = vadd.s32 %v2543, 4294967295
        %vm2591 = vcmp.ge.s32.totalorder %v2589, 0
        %vm2592 = vcmp.ge.s32.totalorder %v2590, 0
        %vm2593 = vcmp.lt.s32.totalorder %v2589, 16
        %vm2594 = vcmp.lt.s32.totalorder %v2590, 16
        %vm2595 = vmand %vm2591, %vm2593
        %vm2596 = vmand %vm2592, %vm2594
        %v2597 = vsel %vm2595, %v2588, 0.0
        %v2598 = vsel %vm2596, %v2587, 0.0
        %v2599 = vperm.slane %v1240, 2
        %v2600 = vmul.f32 %v2597, %v2599
        %v2601 = vmul.f32 %v2598, %v2599
        %v2602 = vadd.f32 %v2582, %v2600
        %v2603 = vadd.f32 %v2583, %v2601
        %v2604 = vperm.slane %v1240, 3
        %v2605 = vmul.f32 %v2539, %v2604
        %v2606 = vmul.f32 %v2540, %v2604
        %v2607 = vadd.f32 %v2602, %v2605
        %v2608 = vadd.f32 %v2603, %v2606
        %v2609 = vrot.slane %v2539, 1
        %v2610 = vrot.slane %v2540, 1
        %vm2611 = vcmp.lt.s32.totalorder %v2542, 7
        %v2612 = vsel %vm2611, %v2609, %v2610
        %v2613 = vsel %vm2611, %v2610, %v2609
        %v2614 = vadd.s32 %v2542, 1
        %v2615 = vadd.s32 %v2543, 1
        %vm2616 = vcmp.ge.s32.totalorder %v2614, 0
        %vm2617 = vcmp.ge.s32.totalorder %v2615, 0
        %vm2618 = vcmp.lt.s32.totalorder %v2614, 16
        %vm2619 = vcmp.lt.s32.totalorder %v2615, 16
        %vm2620 = vmand %vm2616, %vm2618
        %vm2621 = vmand %vm2617, %vm2619
        %v2622 = vsel %vm2620, %v2612, 0.0
        %v2623 = vsel %vm2621, %v2613, 0.0
        %v2624 = vperm.slane %v1240, 4
        %v2625 = vmul.f32 %v2622, %v2624
        %v2626 = vmul.f32 %v2623, %v2624
        %v2627 = vadd.f32 %v2607, %v2625
        %v2628 = vadd.f32 %v2608, %v2626
        %v2629 = vrot.slane %v2539, 2
        %v2630 = vrot.slane %v2540, 2
        %vm2631 = vcmp.lt.s32.totalorder %v2542, 6
        %v2632 = vsel %vm2631, %v2629, %v2630
        %v2633 = vsel %vm2631, %v2630, %v2629
        %v2634 = vadd.s32 %v2542, 2
        %v2635 = vadd.s32 %v2543, 2
        %vm2636 = vcmp.ge.s32.totalorder %v2634, 0
        %vm2637 = vcmp.ge.s32.totalorder %v2635, 0
        %vm2638 = vcmp.lt.s32.totalorder %v2634, 16
        %vm2639 = vcmp.lt.s32.totalorder %v2635, 16
        %vm2640 = vmand %vm2636, %vm2638
        %vm2641 = vmand %vm2637, %vm2639
        %v2642 = vsel %vm2640, %v2632, 0.0
        %v2643 = vsel %vm2641, %v2633, 0.0
        %v2644 = vperm.slane %v1240, 5
        %v2645 = vmul.f32 %v2642, %v2644
        %v2646 = vmul.f32 %v2643, %v2644
        %v2647 = vadd.f32 %v2627, %v2645
        %v2648 = vadd.f32 %v2628, %v2646
        %v2649 = vrot.slane %v2539, 3
        %v2650 = vrot.slane %v2540, 3
        %vm2651 = vcmp.lt.s32.totalorder %v2542, 5
        %v2652 = vsel %vm2651, %v2649, %v2650
        %v2653 = vsel %vm2651, %v2650, %v2649
        %v2654 = vadd.s32 %v2542, 3
        %v2655 = vadd.s32 %v2543, 3
        %vm2656 = vcmp.ge.s32.totalorder %v2654, 0
        %vm2657 = vcmp.ge.s32.totalorder %v2655, 0
        %vm2658 = vcmp.lt.s32.totalorder %v2654, 16
        %vm2659 = vcmp.lt.s32.totalorder %v2655, 16
        %vm2660 = vmand %vm2656, %vm2658
        %vm2661 = vmand %vm2657, %vm2659
        %v2662 = vsel %vm2660, %v2652, 0.0
        %v2663 = vsel %vm2661, %v2653, 0.0
        %v2664 = vperm.slane %v1240, 6
        %v2665 = vmul.f32 %v2662, %v2664
        %v2666 = vmul.f32 %v2663, %v2664
        %v2667 = vadd.f32 %v2647, %v2665
        %v2668 = vadd.f32 %v2648, %v2666
        %v2670 = vperm.slane %v1241, 0
        %v2672 = vadd.f32 %v2667, %v2670
        %v2673 = vadd.f32 %v2668, %v2670
        %v2675 = vperm.slane %v1242, 0
        %v2677 = vmul.f32 %v2672, %v2675
        %v2678 = vmul.f32 %v2673, %v2675
        %v2680 = vperm.slane %v1243, 0
        %v2682 = vadd.f32 %v2677, %v2680
        %v2683 = vadd.f32 %v2678, %v2680
        %v2684 = vxor.u32 %v2682, 2147483648
        %v2685 = vxor.u32 %v2683, 2147483648
        %v2686 = vmul.f32 %v2684, 1.442695
        %v2687 = vpow.pop %v2686
        %v2688 = vmul.f32 %v2685, 1.442695
        %v2689 = vpow.pop %v2688
        %v2690 = vadd.f32 %v2687, 1.0
        %v2691 = vadd.f32 %v2689, 1.0
        %v2692 = vrcp.pop %v2690
        %v2693 = vmul.f32 %v2690, %v2692
        %v2694 = vsub.f32 1.0, %v2693
        %v2695 = vmul.f32 %v2692, %v2694
        %v2696 = vadd.f32 %v2692, %v2695
        %vm2697 = vweird.f32 %v2690
        %vm2698 = vweird.f32 %v2692
        %vm2699 = vmor %vm2697, %vm2698
        %v2700 = vsel %vm2699, %v2692, %v2696
        %v2701 = vand.u32 2147483647, %v2690
        %vm2702 = vcmp.eq.f32.partialorder %v2701, 8.507059e+37
        %v2703 = vand.u32 %v2690, 2147483648
        %v2704 = vor.u32 1.1754944e-38, %v2703
        %v2705 = vsel %vm2702, %v2704, %v2700
        %v2706 = vmul.f32 1.0, %v2705
        %v2707 = vrcp.pop %v2691
        %v2708 = vmul.f32 %v2691, %v2707
        %v2709 = vsub.f32 1.0, %v2708
        %v2710 = vmul.f32 %v2707, %v2709
        %v2711 = vadd.f32 %v2707, %v2710
        %vm2712 = vweird.f32 %v2691
        %vm2713 = vweird.f32 %v2707
        %vm2714 = vmor %vm2712, %vm2713
        %v2715 = vsel %vm2714, %v2707, %v2711
        %v2716 = vand.u32 2147483647, %v2691
        %vm2717 = vcmp.eq.f32.partialorder %v2716, 8.507059e+37
        %v2718 = vand.u32 %v2691, 2147483648
        %v2719 = vor.u32 1.1754944e-38, %v2718
        %v2720 = vsel %vm2717, %v2719, %v2715
        %v2721 = vmul.f32 1.0, %v2720
        %v2722 = vmul.f32 %v2682, %v2706
        %v2723 = vmul.f32 %v2683, %v2721
        %v2724 = vpack.c.bf16 %v2723, %v2722
        %v2726 = vperm.slane %v1252, 0
        %v2736 = vunpack.c.l.b16 %v1244
        %v2737 = vunpack.c.l.b16 %v1245
        %v2738 = vunpack.c.l.b16 %v1246
        %v2739 = vunpack.c.l.b16 %v1247
        %v2740 = vunpack.c.l.b16 %v1248
        %v2741 = vunpack.c.l.b16 %v1249
        %v2742 = vunpack.c.l.b16 %v1250
        %v2743 = vunpack.c.l.b16 %v1251
        %v2744 = vpack.c.b16 %v2737, %v2736
        %v2745 = vpack.c.b16 %v2739, %v2738
        %v2746 = vpack.c.b16 %v2741, %v2740
        %v2747 = vpack.c.b16 %v2743, %v2742
        %v2753 = vsel %vm1299, %v2724, 0
        %2755 = vmatpush.bf16.msra.mxu0 0
        %2756 = vmatpush.bf16.msra.mxu0 0
        %2757 = vmatpush.bf16.msra.mxu0 0
        %2758 = vmatpush.bf16.msra.mxu0 0
        %2759 = vmatpush.bf16.msra.mxu0 %v2747
        %2760 = vmatpush.bf16.msra.mxu0 %v2746
        %2761 = vmatpush.bf16.msra.mxu0 %v2745
        %2762 = vmatpush.bf16.msra.mxu0 %v2744
        %2763 = vmatmul.bf16.gmra.mxu0 %v2753
        %v2764 = vpop.f32.mrf.mxu0
        %v2765 = vadd.f32 %v2726, %v2764
        %v2766 = vpop.f32.mrf.mxu0
        %v2767 = vadd.f32 %v2726, %v2766
        %2768 = vdwg.mxu0
        %v2769 = vadd.f32 %v2392, %v2765
        %v2770 = vadd.f32 %v2393, %v2767
        %v2771 = vsel %vm1299, %v2769, 0.0
        %2772 = vadd.xlane.f32.xlu0 %v2771
        %v2773 = vpop.xlane.xlu0 %2772
        %v2774 = vsel %vm1299, %v2770, 0.0
        %2775 = vadd.xlane.f32.xlu0 %v2774
        %v2776 = vpop.xlane.xlu0 %2775
        %v2777 = vmul.f32 %v2773, %v1312
        %v2778 = vmul.f32 %v2776, %v1312
        %v2779 = vsub.f32 %v2769, %v2777
        %v2780 = vsub.f32 %v2770, %v2778
        %v2781 = vmul.f32 %v2779, %v2779
        %v2782 = vmul.f32 %v2780, %v2780
        %v2783 = vsel %vm1299, %v2781, 0.0
        %2784 = vadd.xlane.f32.xlu0 %v2783
        %v2785 = vpop.xlane.xlu0 %2784
        %v2786 = vsel %vm1299, %v2782, 0.0
        %2787 = vadd.xlane.f32.xlu0 %v2786
        %v2788 = vpop.xlane.xlu0 %2787
        %v2789 = vmul.f32 %v2785, %v1312
        %v2790 = vmul.f32 %v2788, %v1312
        %v2791 = vadd.f32 %v2789, 1e-05
        %v2792 = vadd.f32 %v2790, 1e-05
        %v2793 = vrsqrt.pop %v2791
        %v2794 = vmul.f32 %v2793, %v2791
        %v2795 = vmul.f32 %v2794, %v2793
        %v2796 = vmul.f32 0.5, %v2795
        %v2797 = vsub.f32 1.5, %v2796
        %v2798 = vmul.f32 %v2793, %v2797
        %vm2799 = vweird.f32 %v2791
        %vm2800 = vweird.f32 %v2793
        %vm2801 = vmor %vm2799, %vm2800
        %v2802 = vsel %vm2801, %v2793, %v2798
        %v2803 = vrsqrt.pop %v2792
        %v2804 = vmul.f32 %v2803, %v2792
        %v2805 = vmul.f32 %v2804, %v2803
        %v2806 = vmul.f32 0.5, %v2805
        %v2807 = vsub.f32 1.5, %v2806
        %v2808 = vmul.f32 %v2803, %v2807
        %vm2809 = vweird.f32 %v2792
        %vm2810 = vweird.f32 %v2803
        %vm2811 = vmor %vm2809, %vm2810
        %v2812 = vsel %vm2811, %v2803, %v2808
        %v2813 = vmul.f32 %v2779, %v2802
        %v2814 = vmul.f32 %v2780, %v2812
        %v2816 = vperm.slane %v1253, 0
        %v2818 = vmul.f32 %v2813, %v2816
        %v2819 = vmul.f32 %v2814, %v2816
        %v2821 = vperm.slane %v1254, 0
        %v2823 = vadd.f32 %v2818, %v2821
        %v2824 = vadd.f32 %v2819, %v2821
        %v2825 = vpack.c.bf16 %v2824, %v2823
        %v2827 = vperm.slane %v1263, 0
        %v2828 = vperm.slane %v1263, 1
        %v2839 = vunpack.c.l.b16 %v1255
        %v2840 = vunpack.c.h.b16 %v1255
        %v2841 = vunpack.c.l.b16 %v1256
        %v2842 = vunpack.c.h.b16 %v1256
        %v2843 = vunpack.c.l.b16 %v1257
        %v2844 = vunpack.c.h.b16 %v1257
        %v2845 = vunpack.c.l.b16 %v1258
        %v2846 = vunpack.c.h.b16 %v1258
        %v2847 = vunpack.c.l.b16 %v1259
        %v2848 = vunpack.c.h.b16 %v1259
        %v2849 = vunpack.c.l.b16 %v1260
        %v2850 = vunpack.c.h.b16 %v1260
        %v2851 = vunpack.c.l.b16 %v1261
        %v2852 = vunpack.c.h.b16 %v1261
        %v2853 = vunpack.c.l.b16 %v1262
        %v2854 = vunpack.c.h.b16 %v1262
        %v2855 = vpack.c.b16 %v2841, %v2839
        %v2856 = vpack.c.b16 %v2842, %v2840
        %v2857 = vpack.c.b16 %v2845, %v2843
        %v2858 = vpack.c.b16 %v2846, %v2844
        %v2859 = vpack.c.b16 %v2849, %v2847
        %v2860 = vpack.c.b16 %v2850, %v2848
        %v2861 = vpack.c.b16 %v2853, %v2851
        %v2862 = vpack.c.b16 %v2854, %v2852
        %v2872 = vsel %vm1299, %v2825, 0
        %2874 = vmatpush.bf16.msra.mxu0 0
        %2875 = vmatpush.bf16.msra.mxu0 0
        %2876 = vmatpush.bf16.msra.mxu0 0
        %2877 = vmatpush.bf16.msra.mxu0 0
        %2878 = vmatpush.bf16.msra.mxu0 %v2861
        %2879 = vmatpush.bf16.msra.mxu0 %v2859
        %2880 = vmatpush.bf16.msra.mxu0 %v2857
        %2881 = vmatpush.bf16.msra.mxu0 %v2855
        %2882 = vmatmul.bf16.gmra.mxu0 %v2872
        %v2883 = vpop.f32.mrf.mxu0
        %v2884 = vadd.f32 %v2827, %v2883
        %v2885 = vpop.f32.mrf.mxu0
        %v2886 = vadd.f32 %v2827, %v2885
        %2887 = vdwg.mxu0
        %2888 = vmatpush.bf16.msra.mxu0 0
        %2889 = vmatpush.bf16.msra.mxu0 0
        %2890 = vmatpush.bf16.msra.mxu0 0
        %2891 = vmatpush.bf16.msra.mxu0 0
        %2892 = vmatpush.bf16.msra.mxu0 %v2862
        %2893 = vmatpush.bf16.msra.mxu0 %v2860
        %2894 = vmatpush.bf16.msra.mxu0 %v2858
        %2895 = vmatpush.bf16.msra.mxu0 %v2856
        %2896 = vmatmul.bf16.gmra.mxu0 %v2872
        %v2897 = vpop.f32.mrf.mxu0
        %v2898 = vadd.f32 %v2828, %v2897
        %v2899 = vpop.f32.mrf.mxu0
        %v2900 = vadd.f32 %v2828, %v2899
        %2901 = vdwg.mxu0
        %v2902 = vxor.u32 %v2884, 2147483648
        %v2903 = vxor.u32 %v2898, 2147483648
        %v2904 = vxor.u32 %v2886, 2147483648
        %v2905 = vxor.u32 %v2900, 2147483648
        %v2906 = vmul.f32 %v2902, 1.442695
        %v2907 = vpow.pop %v2906
        %v2908 = vmul.f32 %v2903, 1.442695
        %v2909 = vpow.pop %v2908
        %v2910 = vmul.f32 %v2904, 1.442695
        %v2911 = vpow.pop %v2910
        %v2912 = vmul.f32 %v2905, 1.442695
        %v2913 = vpow.pop %v2912
        %v2914 = vadd.f32 %v2907, 1.0
        %v2915 = vadd.f32 %v2909, 1.0
        %v2916 = vadd.f32 %v2911, 1.0
        %v2917 = vadd.f32 %v2913, 1.0
        %v2918 = vrcp.pop %v2914
        %v2919 = vmul.f32 %v2914, %v2918
        %v2920 = vsub.f32 1.0, %v2919
        %v2921 = vmul.f32 %v2918, %v2920
        %v2922 = vadd.f32 %v2918, %v2921
        %vm2923 = vweird.f32 %v2914
        %vm2924 = vweird.f32 %v2918
        %vm2925 = vmor %vm2923, %vm2924
        %v2926 = vsel %vm2925, %v2918, %v2922
        %v2927 = vand.u32 2147483647, %v2914
        %vm2928 = vcmp.eq.f32.partialorder %v2927, 8.507059e+37
        %v2929 = vand.u32 %v2914, 2147483648
        %v2930 = vor.u32 1.1754944e-38, %v2929
        %v2931 = vsel %vm2928, %v2930, %v2926
        %v2932 = vmul.f32 1.0, %v2931
        %v2933 = vrcp.pop %v2915
        %v2934 = vmul.f32 %v2915, %v2933
        %v2935 = vsub.f32 1.0, %v2934
        %v2936 = vmul.f32 %v2933, %v2935
        %v2937 = vadd.f32 %v2933, %v2936
        %vm2938 = vweird.f32 %v2915
        %vm2939 = vweird.f32 %v2933
        %vm2940 = vmor %vm2938, %vm2939
        %v2941 = vsel %vm2940, %v2933, %v2937
        %v2942 = vand.u32 2147483647, %v2915
        %vm2943 = vcmp.eq.f32.partialorder %v2942, 8.507059e+37
        %v2944 = vand.u32 %v2915, 2147483648
        %v2945 = vor.u32 1.1754944e-38, %v2944
        %v2946 = vsel %vm2943, %v2945, %v2941
        %v2947 = vmul.f32 1.0, %v2946
        %v2948 = vrcp.pop %v2916
        %v2949 = vmul.f32 %v2916, %v2948
        %v2950 = vsub.f32 1.0, %v2949
        %v2951 = vmul.f32 %v2948, %v2950
        %v2952 = vadd.f32 %v2948, %v2951
        %vm2953 = vweird.f32 %v2916
        %vm2954 = vweird.f32 %v2948
        %vm2955 = vmor %vm2953, %vm2954
        %v2956 = vsel %vm2955, %v2948, %v2952
        %v2957 = vand.u32 2147483647, %v2916
        %vm2958 = vcmp.eq.f32.partialorder %v2957, 8.507059e+37
        %v2959 = vand.u32 %v2916, 2147483648
        %v2960 = vor.u32 1.1754944e-38, %v2959
        %v2961 = vsel %vm2958, %v2960, %v2956
        %v2962 = vmul.f32 1.0, %v2961
        %v2963 = vrcp.pop %v2917
        %v2964 = vmul.f32 %v2917, %v2963
        %v2965 = vsub.f32 1.0, %v2964
        %v2966 = vmul.f32 %v2963, %v2965
        %v2967 = vadd.f32 %v2963, %v2966
        %vm2968 = vweird.f32 %v2917
        %vm2969 = vweird.f32 %v2963
        %vm2970 = vmor %vm2968, %vm2969
        %v2971 = vsel %vm2970, %v2963, %v2967
        %v2972 = vand.u32 2147483647, %v2917
        %vm2973 = vcmp.eq.f32.partialorder %v2972, 8.507059e+37
        %v2974 = vand.u32 %v2917, 2147483648
        %v2975 = vor.u32 1.1754944e-38, %v2974
        %v2976 = vsel %vm2973, %v2975, %v2971
        %v2977 = vmul.f32 1.0, %v2976
        %v2978 = vmul.f32 %v2884, %v2932
        %v2979 = vmul.f32 %v2898, %v2947
        %v2980 = vmul.f32 %v2886, %v2962
        %v2981 = vmul.f32 %v2900, %v2977
        %v2982 = vpack.c.bf16 %v2980, %v2978
        %v2983 = vpack.c.bf16 %v2981, %v2979
        %v2985 = vperm.slane %v1296, 0
        %v3019 = vunpack.c.l.b16 %v1264
        %v3020 = vunpack.c.l.b16 %v1265
        %v3021 = vunpack.c.l.b16 %v1266
        %v3022 = vunpack.c.l.b16 %v1267
        %v3023 = vunpack.c.l.b16 %v1268
        %v3024 = vunpack.c.l.b16 %v1269
        %v3025 = vunpack.c.l.b16 %v1270
        %v3026 = vunpack.c.l.b16 %v1271
        %v3027 = vunpack.c.l.b16 %v1272
        %v3028 = vunpack.c.l.b16 %v1273
        %v3029 = vunpack.c.l.b16 %v1274
        %v3030 = vunpack.c.l.b16 %v1275
        %v3031 = vunpack.c.l.b16 %v1276
        %v3032 = vunpack.c.l.b16 %v1277
        %v3033 = vunpack.c.l.b16 %v1278
        %v3034 = vunpack.c.l.b16 %v1279
        %v3035 = vunpack.c.l.b16 %v1280
        %v3036 = vunpack.c.l.b16 %v1281
        %v3037 = vunpack.c.l.b16 %v1282
        %v3038 = vunpack.c.l.b16 %v1283
        %v3039 = vunpack.c.l.b16 %v1284
        %v3040 = vunpack.c.l.b16 %v1285
        %v3041 = vunpack.c.l.b16 %v1286
        %v3042 = vunpack.c.l.b16 %v1287
        %v3043 = vunpack.c.l.b16 %v1288
        %v3044 = vunpack.c.l.b16 %v1289
        %v3045 = vunpack.c.l.b16 %v1290
        %v3046 = vunpack.c.l.b16 %v1291
        %v3047 = vunpack.c.l.b16 %v1292
        %v3048 = vunpack.c.l.b16 %v1293
        %v3049 = vunpack.c.l.b16 %v1294
        %v3050 = vunpack.c.l.b16 %v1295
        %v3051 = vpack.c.b16 %v3020, %v3019
        %v3052 = vpack.c.b16 %v3022, %v3021
        %v3053 = vpack.c.b16 %v3024, %v3023
        %v3054 = vpack.c.b16 %v3026, %v3025
        %v3055 = vpack.c.b16 %v3028, %v3027
        %v3056 = vpack.c.b16 %v3030, %v3029
        %v3057 = vpack.c.b16 %v3032, %v3031
        %v3058 = vpack.c.b16 %v3034, %v3033
        %v3059 = vpack.c.b16 %v3036, %v3035
        %v3060 = vpack.c.b16 %v3038, %v3037
        %v3061 = vpack.c.b16 %v3040, %v3039
        %v3062 = vpack.c.b16 %v3042, %v3041
        %v3063 = vpack.c.b16 %v3044, %v3043
        %v3064 = vpack.c.b16 %v3046, %v3045
        %v3065 = vpack.c.b16 %v3048, %v3047
        %v3066 = vpack.c.b16 %v3050, %v3049
        %3083 = vmatpush.bf16.msra.mxu0 %v3058
        %3084 = vmatpush.bf16.msra.mxu0 %v3057
        %3085 = vmatpush.bf16.msra.mxu0 %v3056
        %3086 = vmatpush.bf16.msra.mxu0 %v3055
        %3087 = vmatpush.bf16.msra.mxu0 %v3054
        %3088 = vmatpush.bf16.msra.mxu0 %v3053
        %3089 = vmatpush.bf16.msra.mxu0 %v3052
        %3090 = vmatpush.bf16.msra.mxu0 %v3051
        %3091 = vmatmul.bf16.gmra.mxu0 %v2982
        %v3092 = vpop.f32.mrf.mxu0
        %v3093 = vadd.f32 %v2985, %v3092
        %v3094 = vpop.f32.mrf.mxu0
        %v3095 = vadd.f32 %v2985, %v3094
        %3096 = vdwg.mxu0
        %3097 = vmatpush.bf16.msra.mxu0 %v3066
        %3098 = vmatpush.bf16.msra.mxu0 %v3065
        %3099 = vmatpush.bf16.msra.mxu0 %v3064
        %3100 = vmatpush.bf16.msra.mxu0 %v3063
        %3101 = vmatpush.bf16.msra.mxu0 %v3062
        %3102 = vmatpush.bf16.msra.mxu0 %v3061
        %3103 = vmatpush.bf16.msra.mxu0 %v3060
        %3104 = vmatpush.bf16.msra.mxu0 %v3059
        %3105 = vmatmul.bf16.gmra.mxu0 %v2983
        %v3106 = vpop.f32.mrf.mxu0
        %v3107 = vadd.f32 %v3093, %v3106
        %v3108 = vpop.f32.mrf.mxu0
        %v3109 = vadd.f32 %v3095, %v3108
        %3110 = vdwg.mxu0
        %v3111 = vmul.f32 %v3107, 0.5
        %v3112 = vmul.f32 %v3109, 0.5
        %v3113 = vadd.f32 %v2769, %v3111
        %v3114 = vadd.f32 %v2770, %v3112
        %3115 = vst.msk [vmem:[%s1140] sm:$0xff] %vm1299, %v3113
        %3116 = vst.msk [vmem:[%s1140 + $0x8] sm:$0xff] %vm1299, %v3114
        %s3117 = sand.u32 %s792, 1
        %s3118 = scalar_lea.sflag [#allocation4], %s3117
        %s3119 = sand.u32 %s792, 1
        %s3120 = smul.addr %s3119, 16
        %s3121 = scalar_lea.vmem [#allocation17], %s3120
        // Predicated region
        $region189: #{tpu_custom_call.1} parent=151 // pred_check
          %p3122 = pneg %p802
        $region190: #{tpu_custom_call.1} parent=151 // pred_check_branch
          %3124 = sbr.rel (%p3122) target = $region192
        $region191: #{tpu_custom_call.1} parent=151 // pred_region
          %3126 = vsyncadd %s3118, 0
          %s3127 = smul.addr %s86, 2
          %s3128 = smul.addr %s3127, 8
          %s3129 = scalar_lea.hbm %s67, %s3128
          %s3130 = sshll.u32 %s3121, 4
          %s3131 = int_to_ptr.vmem [resolvable:$true] %s3130
          %s3132 = sshll.u32 %s3129, 4
          %s3133 = int_to_ptr.hbm [resolvable:$true] %s3132
          %3138 = dma.vmem_to_hbm [thread:$0]  %s3131, 256, %s3133, %s3118, 128, 128, 8
        $region192: #{tpu_custom_call.1} parent=151 // pred_fallthru
          _
      $region152: #{tpu_custom_call.1} parent=5 // pred_fallthru
        _
      %p3139 = scmp.le.s32.totalorder 2, %s81
      // Predicated region
      $region193: #{tpu_custom_call.1} parent=5 // pred_check
        %p3140 = pneg %p3139
      $region194: #{tpu_custom_call.1} parent=5 // pred_check_branch
        %3142 = sbr.rel (%p3140) target = $region196
      $region195: #{tpu_custom_call.1} parent=5 // pred_region
        %s3143 = ssub.s32 %s81, 2
        // Predicated region
        $region197: #{tpu_custom_call.1} parent=195 // pred_check
          %p3144 = pneg %p808
        $region198: #{tpu_custom_call.1} parent=195 // pred_check_branch
          %3146 = sbr.rel (%p3144) target = $region200
        $region199: #{tpu_custom_call.1} parent=195 // pred_region
          %s3147 = sand.u32 %s793, 1
          %s3148 = scalar_lea.sflag [#allocation4], %s3147
          %s3149 = sand.u32 %s793, 1
          %s3150 = smul.addr %s3149, 16
          %s3151 = scalar_lea.vmem [#allocation17], %s3150
          %3153 = dma.done %s3148, 256
        $region200: #{tpu_custom_call.1} parent=195 // pred_fallthru
          _
      $region196: #{tpu_custom_call.1} parent=5 // pred_fallthru
        _
    $region6: #{tpu_custom_call.1} parent=1 // loop_footer
      %s85 = sadd.s32 1, %s81
    $region7: #{tpu_custom_call.1} parent=1 // loop_footer_branch
      %80 = sbr.rel target = $region3
    $region8: #{tpu_custom_call.1} parent=1 // loop_exit
      _
    %3154 = vsyncpa [#allocation3], 1
    %s3155 = scalar_lea.sflag [#allocation3], 1
    %3156 = vsyncpa %s3155, 1
    %3157 = vsyncpa [#allocation6], 1
    %3158 = vsyncpa [#allocation9], 1
    %3159 = vsyncpa [#allocation12], 1
    %3160 = vsyncpa [#allocation15], 1
    %3161 = vsyncpa [#allocation4], 1
    %s3162 = scalar_lea.sflag [#allocation4], 1
    %3163 = vsyncpa %s3162, 1

</llo_original>
